<compile_context>
chip_gen: v5e
topology: v5e:2x2
jax: 0.10.0
libtpu: 0.0.40
codegen_flags: <defaults>
</compile_context>

<pallas_src>
import functools

import numpy as np

import jax
import jax.numpy as jnp
from jax import lax
from jax.experimental import pallas as pl
from jax.experimental.pallas import tpu as pltpu

LANE = 128
_UNROLL_SEQ_MAX = 128   # fully unroll the time loop up to this many steps


def _round_up(x, m):
    return (x + m - 1) // m * m


# ----------------------------------------------------------------------------
# Fused Pallas kernel: all LSTM layers + FC head
# ----------------------------------------------------------------------------
def _fused_lstm_fc_kernel(x_ref, wih_ref, whh_ref, b_ref, wfc_ref, bfc_ref,
                          out_ref, hseq_sc, pre_sc):
    """Entire LSTMModel forward in one kernel.

    x_ref:    (seq, HP)          padded input (lanes >= input_size are 0)
    wih_ref:  (L*HP, 4*HP)       per-layer transposed, gate-padded W_ih (stacked rows)
    whh_ref:  (L*HP, 4*HP)       per-layer transposed, gate-padded W_hh (stacked rows)
    b_ref:    (L, 4*HP)          combined b_ih + b_hh, gate-padded
    wfc_ref:  (HP, OUT_PAD)      transposed, padded FC weight
    bfc_ref:  (1, OUT_PAD)       padded FC bias
    out_ref:  (seq, OUT_PAD)     lane-dense padded output
    hseq_sc:  (seq, HP)          VMEM scratch: inter-layer hidden sequence
    pre_sc:   (seq, 4*HP)        VMEM scratch: hoisted input projection
    """
    seq_len, HP = x_ref.shape
    num_layers = b_ref.shape[0]

    layer_in = x_ref[...]                                       # (seq, HP)
    for l in range(num_layers):                                 # static unroll over layers
        # ---- hoisted input projection: one M=seq matmul, bias folded in ----
        pre_sc[...] = (
            jnp.dot(layer_in, wih_ref[pl.ds(l * HP, HP), :],
                    preferred_element_type=jnp.float32)
            + b_ref[pl.ds(l, 1), :]
        )                                                       # (seq, 4*HP)

        def lstm_step(h, c, pre_row):
            gates = pre_row + jnp.dot(
                h, whh_ref[pl.ds(l * HP, HP), :],
                preferred_element_type=jnp.float32)             # (1, 4*HP)
            # i|f are adjacent 128-lane gate blocks -> one wide sigmoid; every
            # slice below lands exactly on a vreg boundary (padded layout), so
            # there is no cross-lane movement on the critical path.
            if_sig = jax.nn.sigmoid(gates[:, 0:2 * HP])
            i_g = if_sig[:, 0:HP]
            f_g = if_sig[:, HP:2 * HP]
            g_g = jnp.tanh(gates[:, 2 * HP:3 * HP])
            o_g = jax.nn.sigmoid(gates[:, 3 * HP:4 * HP])
            c_new = f_g * c + i_g * g_g
            h_new = o_g * jnp.tanh(c_new)
            return h_new, c_new

        h0 = jnp.zeros((1, HP), jnp.float32)
        c0 = jnp.zeros((1, HP), jnp.float32)

        if seq_len <= _UNROLL_SEQ_MAX:
            # Short sequence: full static unroll -> maximum LLO scheduler visibility.
            h, c = h0, c0
            for t in range(seq_len):
                h, c = lstm_step(h, c, pre_sc[pl.ds(t, 1), :])
                hseq_sc[pl.ds(t, 1), :] = h                     # off critical path
        else:
            # Long sequence: rolled loop bounds live ranges / code size.
            def body(t, carry):
                h, c = carry
                h, c = lstm_step(h, c, pre_sc[pl.ds(t, 1), :])
                hseq_sc[pl.ds(t, 1), :] = h
                return (h, c)
            lax.fori_loop(0, seq_len, body, (h0, c0))

        layer_in = hseq_sc[...]

    # ---- fused FC head (lane-dense padded output) ----
    out_ref[...] = (
        jnp.dot(layer_in, wfc_ref[...], preferred_element_type=jnp.float32)
        + bfc_ref[...]
    ).astype(out_ref.dtype)


# ----------------------------------------------------------------------------
# Wrapper (jit'ed: pad + pallas_call + slice = one dispatch)
# ----------------------------------------------------------------------------
_VMEM_SPEC = pl.BlockSpec(memory_space=pltpu.MemorySpace.VMEM)


@functools.partial(jax.jit,
                   static_argnames=("input_size", "output_size", "HP", "OUT_PAD"))
def _lstm_model_forward_impl(x, wih, whh, b, wfc, bfc, *,
                             input_size, output_size, HP, OUT_PAD):
    seq_len = x.shape[0]
    x_pad = jnp.zeros((seq_len, HP), jnp.float32).at[:, :input_size].set(x)

    out_pad = pl.pallas_call(
        _fused_lstm_fc_kernel,
        out_shape=jax.ShapeDtypeStruct((seq_len, OUT_PAD), jnp.float32),
        in_specs=[_VMEM_SPEC] * 6,
        out_specs=_VMEM_SPEC,
        scratch_shapes=[
            pltpu.VMEM((seq_len, HP), jnp.float32),       # inter-layer h sequence
            pltpu.VMEM((seq_len, 4 * HP), jnp.float32),   # hoisted input projection
        ],
    )(x_pad, wih, whh, b, wfc, bfc)

    return out_pad[:, :output_size]


def lstm_model_forward(x, packed, output_size):
    """Forward pass of LSTMModel: stacked LSTM (zero init state) + Linear."""
    _, input_size = x.shape
    return _lstm_model_forward_impl(
        x, packed["wih"], packed["whh"], packed["b"],
        packed["wfc"], packed["bfc"],
        input_size=input_size, output_size=output_size,
        HP=packed["HP"], OUT_PAD=packed["OUT_PAD"])


# ----------------------------------------------------------------------------
# Parameter packing: transpose + gate-pad to 128 lanes per gate, stack layers
# ----------------------------------------------------------------------------
def pack_params(params, input_size, hidden_size, output_size):
    H = hidden_size
    HP = max(LANE, _round_up(H, LANE))
    OUT_PAD = max(LANE, _round_up(output_size, LANE))
    L = len(params["lstm"])

    wih = np.zeros((L * HP, 4 * HP), np.float32)
    whh = np.zeros((L * HP, 4 * HP), np.float32)
    b = np.zeros((L, 4 * HP), np.float32)
    for l, lp in enumerate(params["lstm"]):
        w_ih = np.asarray(lp["w_ih"])                    # (4H, in_dim)
        w_hh = np.asarray(lp["w_hh"])                    # (4H, H)
        bias = np.asarray(lp["b_ih"]) + np.asarray(lp["b_hh"])
        in_dim = w_ih.shape[1]
        for g in range(4):
            wih[l * HP:l * HP + in_dim, g * HP:g * HP + H] = \
                w_ih[g * H:(g + 1) * H, :].T
            whh[l * HP:l * HP + H, g * HP:g * HP + H] = \
                w_hh[g * H:(g + 1) * H, :].T
            b[l, g * HP:g * HP + H] = bias[g * H:(g + 1) * H]

    wfc = np.zeros((HP, OUT_PAD), np.float32)
    wfc[:H, :output_size] = np.asarray(params["fc_w"]).T
    bfc = np.zeros((1, OUT_PAD), np.float32)
    bfc[0, :output_size] = np.asarray(params["fc_b"])

    return {
        "wih": jnp.asarray(wih), "whh": jnp.asarray(whh), "b": jnp.asarray(b),
        "wfc": jnp.asarray(wfc), "bfc": jnp.asarray(bfc),
        "HP": HP, "OUT_PAD": OUT_PAD,
    }


# ----------------------------------------------------------------------------
# Pure-JAX reference (uses the raw, unpadded PyTorch-layout weights)
# ----------------------------------------------------------------------------
def lstm_model_reference(x, params, hidden_size):
    H = hidden_size
    h_seq = x
    for lp in params["lstm"]:
        w_ih_t = lp["w_ih"].T
        w_hh_t = lp["w_hh"].T
        bias = (lp["b_ih"] + lp["b_hh"]).reshape(1, 4 * H)
        h = jnp.zeros((1, H), jnp.float32)
        c = jnp.zeros((1, H), jnp.float32)
        outs = []
        for t in range(h_seq.shape[0]):
            g = h_seq[t:t + 1] @ w_ih_t + h @ w_hh_t + bias
            i_g = jax.nn.sigmoid(g[:, 0 * H:1 * H])
            f_g = jax.nn.sigmoid(g[:, 1 * H:2 * H])
            g_g = jnp.tanh(g[:, 2 * H:3 * H])
            o_g = jax.nn.sigmoid(g[:, 3 * H:4 * H])
            c = f_g * c + i_g * g_g
            h = o_g * jnp.tanh(c)
            outs.append(h)
        h_seq = jnp.concatenate(outs, axis=0)
    return h_seq @ params["fc_w"].T + params["fc_b"].reshape(1, -1)


# ----------------------------------------------------------------------------
# Deterministic parameter init (PyTorch-style uniform(-1/sqrt(H), 1/sqrt(H)))
# ----------------------------------------------------------------------------
def init_params(key, input_size, hidden_size, num_layers, output_size):
    H = hidden_size
    bound = 1.0 / jnp.sqrt(jnp.float32(H))
    layers = []
    for layer in range(num_layers):
        in_dim = input_size if layer == 0 else H
        key, k1, k2, k3, k4 = jax.random.split(key, 5)
        layers.append({
            "w_ih": jax.random.uniform(k1, (4 * H, in_dim), jnp.float32, -bound, bound),
            "w_hh": jax.random.uniform(k2, (4 * H, H), jnp.float32, -bound, bound),
            "b_ih": jax.random.uniform(k3, (4 * H,), jnp.float32, -bound, bound),
            "b_hh": jax.random.uniform(k4, (4 * H,), jnp.float32, -bound, bound),
        })
    key, k5, k6 = jax.random.split(key, 3)
    fc_w = jax.random.uniform(k5, (output_size, H), jnp.float32, -bound, bound)
    fc_b = jax.random.uniform(k6, (output_size,), jnp.float32, -bound, bound)
    return {"lstm": layers, "fc_w": fc_w, "fc_b": fc_b}


# ----------------------------------------------------------------------------
# Main
# ----------------------------------------------------------------------------
if __name__ == "__main__":
    INPUT_SIZE = 16
    HIDDEN_SIZE = 32
    NUM_LAYERS = 2
    OUTPUT_SIZE = 4
    SEQ_LEN = 8

    key = jax.random.PRNGKey(0)
    key, xk = jax.random.split(key)
    # Unbatched input (seq_len, input_size), as implied by h0 = (num_layers, H).
    x = jax.random.normal(xk, (SEQ_LEN, INPUT_SIZE), jnp.float32)

    params = init_params(key, INPUT_SIZE, HIDDEN_SIZE, NUM_LAYERS, OUTPUT_SIZE)
    packed = pack_params(params, INPUT_SIZE, HIDDEN_SIZE, OUTPUT_SIZE)

    out = lstm_model_forward(x, packed, OUTPUT_SIZE)
    out = jax.block_until_ready(out)

    ref = lstm_model_reference(x, params, HIDDEN_SIZE)
    assert out.shape == (SEQ_LEN, OUTPUT_SIZE), out.shape
    assert jnp.allclose(out, ref, atol=2e-5, rtol=2e-5), "mismatch vs reference"

    print("KERNEL_OK")
</pallas_src>

<mosaic_0001>
module attributes {stable_mosaic.version = 11 : i64} {
  func.func @_fused_lstm_fc_kernel(%arg0: memref<8x128xf32, #tpu.memory_space<vmem>>, %arg1: memref<256x512xf32, #tpu.memory_space<vmem>>, %arg2: memref<256x512xf32, #tpu.memory_space<vmem>>, %arg3: memref<2x512xf32, #tpu.memory_space<vmem>>, %arg4: memref<128x128xf32, #tpu.memory_space<vmem>>, %arg5: memref<1x128xf32, #tpu.memory_space<vmem>>, %arg6: memref<8x128xf32, #tpu.memory_space<vmem>>, %arg7: memref<8x128xf32, #tpu.memory_space<vmem>>, %arg8: memref<8x512xf32, #tpu.memory_space<vmem>>) attributes {dimension_semantics = [], scalar_prefetch = 0 : i64, scratch_operands = 2 : i64, tpu.core_type = #tpu.core_type<tc>} {
    %c0 = arith.constant 0 : index
    %c0_0 = arith.constant 0 : index
    %0 = vector.load %arg0[%c0, %c0_0] : memref<8x128xf32, #tpu.memory_space<vmem>>, vector<8x128xf32>
    %c0_1 = arith.constant 0 : index
    %c0_2 = arith.constant 0 : index
    %1 = vector.load %arg1[%c0_1, %c0_2] : memref<256x512xf32, #tpu.memory_space<vmem>>, vector<128x512xf32>
    %cst = arith.constant dense<0.000000e+00> : vector<8x512xf32>
    %2 = tpu.matmul %0, %1, %cst {dimension_numbers = #tpu.dot_dimension_numbers<[1], [0], [0], [1], [0, 0, 1, 1], [], []>} : vector<8x128xf32>, vector<128x512xf32>, vector<8x512xf32> -> vector<8x512xf32>
    %c0_3 = arith.constant 0 : index
    %c0_4 = arith.constant 0 : index
    %3 = vector.load %arg3[%c0_3, %c0_4] : memref<2x512xf32, #tpu.memory_space<vmem>>, vector<1x512xf32>
    %4 = vector.broadcast %3 : vector<1x512xf32> to vector<8x512xf32>
    %5 = arith.addf %2, %4 : vector<8x512xf32>
    %c0_5 = arith.constant 0 : index
    %c0_6 = arith.constant 0 : index
    %6 = vector.load %arg8[%c0_5, %c0_6] : memref<8x512xf32, #tpu.memory_space<vmem>>, vector<8x512xf32>
    tpu.vector_store %arg8[%c0_5, %c0_6], %5 {strides = array<i32>} : memref<8x512xf32, #tpu.memory_space<vmem>>, vector<8x512xf32>,
    %cst_7 = arith.constant 0.000000e+00 : f32
    %7 = vector.broadcast %cst_7 : f32 to vector<1x128xf32>
    %cst_8 = arith.constant 0.000000e+00 : f32
    %8 = vector.broadcast %cst_8 : f32 to vector<1x128xf32>
    %c0_9 = arith.constant 0 : index
    %c0_10 = arith.constant 0 : index
    %9 = vector.load %arg8[%c0_9, %c0_10] : memref<8x512xf32, #tpu.memory_space<vmem>>, vector<1x512xf32>
    %c0_11 = arith.constant 0 : index
    %c0_12 = arith.constant 0 : index
    %10 = vector.load %arg2[%c0_11, %c0_12] : memref<256x512xf32, #tpu.memory_space<vmem>>, vector<128x512xf32>
    %cst_13 = arith.constant dense<0.000000e+00> : vector<1x512xf32>
    %11 = tpu.matmul %7, %10, %cst_13 {dimension_numbers = #tpu.dot_dimension_numbers<[1], [0], [0], [1], [0, 0, 1, 1], [], []>} : vector<1x128xf32>, vector<128x512xf32>, vector<1x512xf32> -> vector<1x512xf32>
    %12 = arith.addf %9, %11 : vector<1x512xf32>
    %13 = vector.extract_strided_slice %12 {offsets = [0, 0], sizes = [1, 256], strides = [1, 1]} : vector<1x512xf32> to vector<1x256xf32>
    %14 = arith.negf %13 : vector<1x256xf32>
    %15 = math.exp %14 : vector<1x256xf32>
    %cst_14 = arith.constant 1.000000e+00 : f32
    %16 = vector.broadcast %cst_14 : f32 to vector<1x256xf32>
    %17 = arith.addf %16, %15 : vector<1x256xf32>
    %18 = arith.divf %16, %17 : vector<1x256xf32>
    %19 = vector.extract_strided_slice %18 {offsets = [0, 0], sizes = [1, 128], strides = [1, 1]} : vector<1x256xf32> to vector<1x128xf32>
    %20 = vector.extract_strided_slice %18 {offsets = [0, 128], sizes = [1, 128], strides = [1, 1]} : vector<1x256xf32> to vector<1x128xf32>
    %21 = vector.extract_strided_slice %12 {offsets = [0, 256], sizes = [1, 128], strides = [1, 1]} : vector<1x512xf32> to vector<1x128xf32>
    %22 = math.tanh %21 : vector<1x128xf32>
    %23 = vector.extract_strided_slice %12 {offsets = [0, 384], sizes = [1, 128], strides = [1, 1]} : vector<1x512xf32> to vector<1x128xf32>
    %24 = arith.negf %23 : vector<1x128xf32>
    %25 = math.exp %24 : vector<1x128xf32>
    %cst_15 = arith.constant 1.000000e+00 : f32
    %26 = vector.broadcast %cst_15 : f32 to vector<1x128xf32>
    %27 = arith.addf %26, %25 : vector<1x128xf32>
    %28 = arith.divf %26, %27 : vector<1x128xf32>
    %29 = arith.mulf %20, %8 : vector<1x128xf32>
    %30 = arith.mulf %19, %22 : vector<1x128xf32>
    %31 = arith.addf %29, %30 : vector<1x128xf32>
    %32 = math.tanh %31 : vector<1x128xf32>
    %33 = arith.mulf %28, %32 : vector<1x128xf32>
    %c0_16 = arith.constant 0 : index
    %c0_17 = arith.constant 0 : index
    %34 = vector.load %arg7[%c0_16, %c0_17] : memref<8x128xf32, #tpu.memory_space<vmem>>, vector<1x128xf32>
    tpu.vector_store %arg7[%c0_16, %c0_17], %33 {strides = array<i32>} : memref<8x128xf32, #tpu.memory_space<vmem>>, vector<1x128xf32>,
    %c1 = arith.constant 1 : index
    %c0_18 = arith.constant 0 : index
    %35 = vector.load %arg8[%c1, %c0_18] : memref<8x512xf32, #tpu.memory_space<vmem>>, vector<1x512xf32>
    %c0_19 = arith.constant 0 : index
    %c0_20 = arith.constant 0 : index
    %36 = vector.load %arg2[%c0_19, %c0_20] : memref<256x512xf32, #tpu.memory_space<vmem>>, vector<128x512xf32>
    %cst_21 = arith.constant dense<0.000000e+00> : vector<1x512xf32>
    %37 = tpu.matmul %33, %36, %cst_21 {dimension_numbers = #tpu.dot_dimension_numbers<[1], [0], [0], [1], [0, 0, 1, 1], [], []>} : vector<1x128xf32>, vector<128x512xf32>, vector<1x512xf32> -> vector<1x512xf32>
    %38 = arith.addf %35, %37 : vector<1x512xf32>
    %39 = vector.extract_strided_slice %38 {offsets = [0, 0], sizes = [1, 256], strides = [1, 1]} : vector<1x512xf32> to vector<1x256xf32>
    %40 = arith.negf %39 : vector<1x256xf32>
    %41 = math.exp %40 : vector<1x256xf32>
    %cst_22 = arith.constant 1.000000e+00 : f32
    %42 = vector.broadcast %cst_22 : f32 to vector<1x256xf32>
    %43 = arith.addf %42, %41 : vector<1x256xf32>
    %44 = arith.divf %42, %43 : vector<1x256xf32>
    %45 = vector.extract_strided_slice %44 {offsets = [0, 0], sizes = [1, 128], strides = [1, 1]} : vector<1x256xf32> to vector<1x128xf32>
    %46 = vector.extract_strided_slice %44 {offsets = [0, 128], sizes = [1, 128], strides = [1, 1]} : vector<1x256xf32> to vector<1x128xf32>
    %47 = vector.extract_strided_slice %38 {offsets = [0, 256], sizes = [1, 128], strides = [1, 1]} : vector<1x512xf32> to vector<1x128xf32>
    %48 = math.tanh %47 : vector<1x128xf32>
    %49 = vector.extract_strided_slice %38 {offsets = [0, 384], sizes = [1, 128], strides = [1, 1]} : vector<1x512xf32> to vector<1x128xf32>
    %50 = arith.negf %49 : vector<1x128xf32>
    %51 = math.exp %50 : vector<1x128xf32>
    %cst_23 = arith.constant 1.000000e+00 : f32
    %52 = vector.broadcast %cst_23 : f32 to vector<1x128xf32>
    %53 = arith.addf %52, %51 : vector<1x128xf32>
    %54 = arith.divf %52, %53 : vector<1x128xf32>
    %55 = arith.mulf %46, %31 : vector<1x128xf32>
    %56 = arith.mulf %45, %48 : vector<1x128xf32>
    %57 = arith.addf %55, %56 : vector<1x128xf32>
    %58 = math.tanh %57 : vector<1x128xf32>
    %59 = arith.mulf %54, %58 : vector<1x128xf32>
    %c1_24 = arith.constant 1 : index
    %c0_25 = arith.constant 0 : index
    %60 = vector.load %arg7[%c1_24, %c0_25] : memref<8x128xf32, #tpu.memory_space<vmem>>, vector<1x128xf32>
    tpu.vector_store %arg7[%c1_24, %c0_25], %59 {strides = array<i32>} : memref<8x128xf32, #tpu.memory_space<vmem>>, vector<1x128xf32>,
    %c2 = arith.constant 2 : index
    %c0_26 = arith.constant 0 : index
    %61 = vector.load %arg8[%c2, %c0_26] : memref<8x512xf32, #tpu.memory_space<vmem>>, vector<1x512xf32>
    %c0_27 = arith.constant 0 : index
    %c0_28 = arith.constant 0 : index
    %62 = vector.load %arg2[%c0_27, %c0_28] : memref<256x512xf32, #tpu.memory_space<vmem>>, vector<128x512xf32>
    %cst_29 = arith.constant dense<0.000000e+00> : vector<1x512xf32>
    %63 = tpu.matmul %59, %62, %cst_29 {dimension_numbers = #tpu.dot_dimension_numbers<[1], [0], [0], [1], [0, 0, 1, 1], [], []>} : vector<1x128xf32>, vector<128x512xf32>, vector<1x512xf32> -> vector<1x512xf32>
    %64 = arith.addf %61, %63 : vector<1x512xf32>
    %65 = vector.extract_strided_slice %64 {offsets = [0, 0], sizes = [1, 256], strides = [1, 1]} : vector<1x512xf32> to vector<1x256xf32>
    %66 = arith.negf %65 : vector<1x256xf32>
    %67 = math.exp %66 : vector<1x256xf32>
    %cst_30 = arith.constant 1.000000e+00 : f32
    %68 = vector.broadcast %cst_30 : f32 to vector<1x256xf32>
    %69 = arith.addf %68, %67 : vector<1x256xf32>
    %70 = arith.divf %68, %69 : vector<1x256xf32>
    %71 = vector.extract_strided_slice %70 {offsets = [0, 0], sizes = [1, 128], strides = [1, 1]} : vector<1x256xf32> to vector<1x128xf32>
    %72 = vector.extract_strided_slice %70 {offsets = [0, 128], sizes = [1, 128], strides = [1, 1]} : vector<1x256xf32> to vector<1x128xf32>
    %73 = vector.extract_strided_slice %64 {offsets = [0, 256], sizes = [1, 128], strides = [1, 1]} : vector<1x512xf32> to vector<1x128xf32>
    %74 = math.tanh %73 : vector<1x128xf32>
    %75 = vector.extract_strided_slice %64 {offsets = [0, 384], sizes = [1, 128], strides = [1, 1]} : vector<1x512xf32> to vector<1x128xf32>
    %76 = arith.negf %75 : vector<1x128xf32>
    %77 = math.exp %76 : vector<1x128xf32>
    %cst_31 = arith.constant 1.000000e+00 : f32
    %78 = vector.broadcast %cst_31 : f32 to vector<1x128xf32>
    %79 = arith.addf %78, %77 : vector<1x128xf32>
    %80 = arith.divf %78, %79 : vector<1x128xf32>
    %81 = arith.mulf %72, %57 : vector<1x128xf32>
    %82 = arith.mulf %71, %74 : vector<1x128xf32>
    %83 = arith.addf %81, %82 : vector<1x128xf32>
    %84 = math.tanh %83 : vector<1x128xf32>
    %85 = arith.mulf %80, %84 : vector<1x128xf32>
    %c2_32 = arith.constant 2 : index
    %c0_33 = arith.constant 0 : index
    %86 = vector.load %arg7[%c2_32, %c0_33] : memref<8x128xf32, #tpu.memory_space<vmem>>, vector<1x128xf32>
    tpu.vector_store %arg7[%c2_32, %c0_33], %85 {strides = array<i32>} : memref<8x128xf32, #tpu.memory_space<vmem>>, vector<1x128xf32>,
    %c3 = arith.constant 3 : index
    %c0_34 = arith.constant 0 : index
    %87 = vector.load %arg8[%c3, %c0_34] : memref<8x512xf32, #tpu.memory_space<vmem>>, vector<1x512xf32>
    %c0_35 = arith.constant 0 : index
    %c0_36 = arith.constant 0 : index
    %88 = vector.load %arg2[%c0_35, %c0_36] : memref<256x512xf32, #tpu.memory_space<vmem>>, vector<128x512xf32>
    %cst_37 = arith.constant dense<0.000000e+00> : vector<1x512xf32>
    %89 = tpu.matmul %85, %88, %cst_37 {dimension_numbers = #tpu.dot_dimension_numbers<[1], [0], [0], [1], [0, 0, 1, 1], [], []>} : vector<1x128xf32>, vector<128x512xf32>, vector<1x512xf32> -> vector<1x512xf32>
    %90 = arith.addf %87, %89 : vector<1x512xf32>
    %91 = vector.extract_strided_slice %90 {offsets = [0, 0], sizes = [1, 256], strides = [1, 1]} : vector<1x512xf32> to vector<1x256xf32>
    %92 = arith.negf %91 : vector<1x256xf32>
    %93 = math.exp %92 : vector<1x256xf32>
    %cst_38 = arith.constant 1.000000e+00 : f32
    %94 = vector.broadcast %cst_38 : f32 to vector<1x256xf32>
    %95 = arith.addf %94, %93 : vector<1x256xf32>
    %96 = arith.divf %94, %95 : vector<1x256xf32>
    %97 = vector.extract_strided_slice %96 {offsets = [0, 0], sizes = [1, 128], strides = [1, 1]} : vector<1x256xf32> to vector<1x128xf32>
    %98 = vector.extract_strided_slice %96 {offsets = [0, 128], sizes = [1, 128], strides = [1, 1]} : vector<1x256xf32> to vector<1x128xf32>
    %99 = vector.extract_strided_slice %90 {offsets = [0, 256], sizes = [1, 128], strides = [1, 1]} : vector<1x512xf32> to vector<1x128xf32>
    %100 = math.tanh %99 : vector<1x128xf32>
    %101 = vector.extract_strided_slice %90 {offsets = [0, 384], sizes = [1, 128], strides = [1, 1]} : vector<1x512xf32> to vector<1x128xf32>
    %102 = arith.negf %101 : vector<1x128xf32>
    %103 = math.exp %102 : vector<1x128xf32>
    %cst_39 = arith.constant 1.000000e+00 : f32
    %104 = vector.broadcast %cst_39 : f32 to vector<1x128xf32>
    %105 = arith.addf %104, %103 : vector<1x128xf32>
    %106 = arith.divf %104, %105 : vector<1x128xf32>
    %107 = arith.mulf %98, %83 : vector<1x128xf32>
    %108 = arith.mulf %97, %100 : vector<1x128xf32>
    %109 = arith.addf %107, %108 : vector<1x128xf32>
    %110 = math.tanh %109 : vector<1x128xf32>
    %111 = arith.mulf %106, %110 : vector<1x128xf32>
    %c3_40 = arith.constant 3 : index
    %c0_41 = arith.constant 0 : index
    %112 = vector.load %arg7[%c3_40, %c0_41] : memref<8x128xf32, #tpu.memory_space<vmem>>, vector<1x128xf32>
    tpu.vector_store %arg7[%c3_40, %c0_41], %111 {strides = array<i32>} : memref<8x128xf32, #tpu.memory_space<vmem>>, vector<1x128xf32>,
    %c4 = arith.constant 4 : index
    %c0_42 = arith.constant 0 : index
    %113 = vector.load %arg8[%c4, %c0_42] : memref<8x512xf32, #tpu.memory_space<vmem>>, vector<1x512xf32>
    %c0_43 = arith.constant 0 : index
    %c0_44 = arith.constant 0 : index
    %114 = vector.load %arg2[%c0_43, %c0_44] : memref<256x512xf32, #tpu.memory_space<vmem>>, vector<128x512xf32>
    %cst_45 = arith.constant dense<0.000000e+00> : vector<1x512xf32>
    %115 = tpu.matmul %111, %114, %cst_45 {dimension_numbers = #tpu.dot_dimension_numbers<[1], [0], [0], [1], [0, 0, 1, 1], [], []>} : vector<1x128xf32>, vector<128x512xf32>, vector<1x512xf32> -> vector<1x512xf32>
    %116 = arith.addf %113, %115 : vector<1x512xf32>
    %117 = vector.extract_strided_slice %116 {offsets = [0, 0], sizes = [1, 256], strides = [1, 1]} : vector<1x512xf32> to vector<1x256xf32>
    %118 = arith.negf %117 : vector<1x256xf32>
    %119 = math.exp %118 : vector<1x256xf32>
    %cst_46 = arith.constant 1.000000e+00 : f32
    %120 = vector.broadcast %cst_46 : f32 to vector<1x256xf32>
    %121 = arith.addf %120, %119 : vector<1x256xf32>
    %122 = arith.divf %120, %121 : vector<1x256xf32>
    %123 = vector.extract_strided_slice %122 {offsets = [0, 0], sizes = [1, 128], strides = [1, 1]} : vector<1x256xf32> to vector<1x128xf32>
    %124 = vector.extract_strided_slice %122 {offsets = [0, 128], sizes = [1, 128], strides = [1, 1]} : vector<1x256xf32> to vector<1x128xf32>
    %125 = vector.extract_strided_slice %116 {offsets = [0, 256], sizes = [1, 128], strides = [1, 1]} : vector<1x512xf32> to vector<1x128xf32>
    %126 = math.tanh %125 : vector<1x128xf32>
    %127 = vector.extract_strided_slice %116 {offsets = [0, 384], sizes = [1, 128], strides = [1, 1]} : vector<1x512xf32> to vector<1x128xf32>
    %128 = arith.negf %127 : vector<1x128xf32>
    %129 = math.exp %128 : vector<1x128xf32>
    %cst_47 = arith.constant 1.000000e+00 : f32
    %130 = vector.broadcast %cst_47 : f32 to vector<1x128xf32>
    %131 = arith.addf %130, %129 : vector<1x128xf32>
    %132 = arith.divf %130, %131 : vector<1x128xf32>
    %133 = arith.mulf %124, %109 : vector<1x128xf32>
    %134 = arith.mulf %123, %126 : vector<1x128xf32>
    %135 = arith.addf %133, %134 : vector<1x128xf32>
    %136 = math.tanh %135 : vector<1x128xf32>
    %137 = arith.mulf %132, %136 : vector<1x128xf32>
    %c4_48 = arith.constant 4 : index
    %c0_49 = arith.constant 0 : index
    %138 = vector.load %arg7[%c4_48, %c0_49] : memref<8x128xf32, #tpu.memory_space<vmem>>, vector<1x128xf32>
    tpu.vector_store %arg7[%c4_48, %c0_49], %137 {strides = array<i32>} : memref<8x128xf32, #tpu.memory_space<vmem>>, vector<1x128xf32>,
    %c5 = arith.constant 5 : index
    %c0_50 = arith.constant 0 : index
    %139 = vector.load %arg8[%c5, %c0_50] : memref<8x512xf32, #tpu.memory_space<vmem>>, vector<1x512xf32>
    %c0_51 = arith.constant 0 : index
    %c0_52 = arith.constant 0 : index
    %140 = vector.load %arg2[%c0_51, %c0_52] : memref<256x512xf32, #tpu.memory_space<vmem>>, vector<128x512xf32>
    %cst_53 = arith.constant dense<0.000000e+00> : vector<1x512xf32>
    %141 = tpu.matmul %137, %140, %cst_53 {dimension_numbers = #tpu.dot_dimension_numbers<[1], [0], [0], [1], [0, 0, 1, 1], [], []>} : vector<1x128xf32>, vector<128x512xf32>, vector<1x512xf32> -> vector<1x512xf32>
    %142 = arith.addf %139, %141 : vector<1x512xf32>
    %143 = vector.extract_strided_slice %142 {offsets = [0, 0], sizes = [1, 256], strides = [1, 1]} : vector<1x512xf32> to vector<1x256xf32>
    %144 = arith.negf %143 : vector<1x256xf32>
    %145 = math.exp %144 : vector<1x256xf32>
    %cst_54 = arith.constant 1.000000e+00 : f32
    %146 = vector.broadcast %cst_54 : f32 to vector<1x256xf32>
    %147 = arith.addf %146, %145 : vector<1x256xf32>
    %148 = arith.divf %146, %147 : vector<1x256xf32>
    %149 = vector.extract_strided_slice %148 {offsets = [0, 0], sizes = [1, 128], strides = [1, 1]} : vector<1x256xf32> to vector<1x128xf32>
    %150 = vector.extract_strided_slice %148 {offsets = [0, 128], sizes = [1, 128], strides = [1, 1]} : vector<1x256xf32> to vector<1x128xf32>
    %151 = vector.extract_strided_slice %142 {offsets = [0, 256], sizes = [1, 128], strides = [1, 1]} : vector<1x512xf32> to vector<1x128xf32>
    %152 = math.tanh %151 : vector<1x128xf32>
    %153 = vector.extract_strided_slice %142 {offsets = [0, 384], sizes = [1, 128], strides = [1, 1]} : vector<1x512xf32> to vector<1x128xf32>
    %154 = arith.negf %153 : vector<1x128xf32>
    %155 = math.exp %154 : vector<1x128xf32>
    %cst_55 = arith.constant 1.000000e+00 : f32
    %156 = vector.broadcast %cst_55 : f32 to vector<1x128xf32>
    %157 = arith.addf %156, %155 : vector<1x128xf32>
    %158 = arith.divf %156, %157 : vector<1x128xf32>
    %159 = arith.mulf %150, %135 : vector<1x128xf32>
    %160 = arith.mulf %149, %152 : vector<1x128xf32>
    %161 = arith.addf %159, %160 : vector<1x128xf32>
    %162 = math.tanh %161 : vector<1x128xf32>
    %163 = arith.mulf %158, %162 : vector<1x128xf32>
    %c5_56 = arith.constant 5 : index
    %c0_57 = arith.constant 0 : index
    %164 = vector.load %arg7[%c5_56, %c0_57] : memref<8x128xf32, #tpu.memory_space<vmem>>, vector<1x128xf32>
    tpu.vector_store %arg7[%c5_56, %c0_57], %163 {strides = array<i32>} : memref<8x128xf32, #tpu.memory_space<vmem>>, vector<1x128xf32>,
    %c6 = arith.constant 6 : index
    %c0_58 = arith.constant 0 : index
    %165 = vector.load %arg8[%c6, %c0_58] : memref<8x512xf32, #tpu.memory_space<vmem>>, vector<1x512xf32>
    %c0_59 = arith.constant 0 : index
    %c0_60 = arith.constant 0 : index
    %166 = vector.load %arg2[%c0_59, %c0_60] : memref<256x512xf32, #tpu.memory_space<vmem>>, vector<128x512xf32>
    %cst_61 = arith.constant dense<0.000000e+00> : vector<1x512xf32>
    %167 = tpu.matmul %163, %166, %cst_61 {dimension_numbers = #tpu.dot_dimension_numbers<[1], [0], [0], [1], [0, 0, 1, 1], [], []>} : vector<1x128xf32>, vector<128x512xf32>, vector<1x512xf32> -> vector<1x512xf32>
    %168 = arith.addf %165, %167 : vector<1x512xf32>
    %169 = vector.extract_strided_slice %168 {offsets = [0, 0], sizes = [1, 256], strides = [1, 1]} : vector<1x512xf32> to vector<1x256xf32>
    %170 = arith.negf %169 : vector<1x256xf32>
    %171 = math.exp %170 : vector<1x256xf32>
    %cst_62 = arith.constant 1.000000e+00 : f32
    %172 = vector.broadcast %cst_62 : f32 to vector<1x256xf32>
    %173 = arith.addf %172, %171 : vector<1x256xf32>
    %174 = arith.divf %172, %173 : vector<1x256xf32>
    %175 = vector.extract_strided_slice %174 {offsets = [0, 0], sizes = [1, 128], strides = [1, 1]} : vector<1x256xf32> to vector<1x128xf32>
    %176 = vector.extract_strided_slice %174 {offsets = [0, 128], sizes = [1, 128], strides = [1, 1]} : vector<1x256xf32> to vector<1x128xf32>
    %177 = vector.extract_strided_slice %168 {offsets = [0, 256], sizes = [1, 128], strides = [1, 1]} : vector<1x512xf32> to vector<1x128xf32>
    %178 = math.tanh %177 : vector<1x128xf32>
    %179 = vector.extract_strided_slice %168 {offsets = [0, 384], sizes = [1, 128], strides = [1, 1]} : vector<1x512xf32> to vector<1x128xf32>
    %180 = arith.negf %179 : vector<1x128xf32>
    %181 = math.exp %180 : vector<1x128xf32>
    %cst_63 = arith.constant 1.000000e+00 : f32
    %182 = vector.broadcast %cst_63 : f32 to vector<1x128xf32>
    %183 = arith.addf %182, %181 : vector<1x128xf32>
    %184 = arith.divf %182, %183 : vector<1x128xf32>
    %185 = arith.mulf %176, %161 : vector<1x128xf32>
    %186 = arith.mulf %175, %178 : vector<1x128xf32>
    %187 = arith.addf %185, %186 : vector<1x128xf32>
    %188 = math.tanh %187 : vector<1x128xf32>
    %189 = arith.mulf %184, %188 : vector<1x128xf32>
    %c6_64 = arith.constant 6 : index
    %c0_65 = arith.constant 0 : index
    %190 = vector.load %arg7[%c6_64, %c0_65] : memref<8x128xf32, #tpu.memory_space<vmem>>, vector<1x128xf32>
    tpu.vector_store %arg7[%c6_64, %c0_65], %189 {strides = array<i32>} : memref<8x128xf32, #tpu.memory_space<vmem>>, vector<1x128xf32>,
    %c7 = arith.constant 7 : index
    %c0_66 = arith.constant 0 : index
    %191 = vector.load %arg8[%c7, %c0_66] : memref<8x512xf32, #tpu.memory_space<vmem>>, vector<1x512xf32>
    %c0_67 = arith.constant 0 : index
    %c0_68 = arith.constant 0 : index
    %192 = vector.load %arg2[%c0_67, %c0_68] : memref<256x512xf32, #tpu.memory_space<vmem>>, vector<128x512xf32>
    %cst_69 = arith.constant dense<0.000000e+00> : vector<1x512xf32>
    %193 = tpu.matmul %189, %192, %cst_69 {dimension_numbers = #tpu.dot_dimension_numbers<[1], [0], [0], [1], [0, 0, 1, 1], [], []>} : vector<1x128xf32>, vector<128x512xf32>, vector<1x512xf32> -> vector<1x512xf32>
    %194 = arith.addf %191, %193 : vector<1x512xf32>
    %195 = vector.extract_strided_slice %194 {offsets = [0, 0], sizes = [1, 256], strides = [1, 1]} : vector<1x512xf32> to vector<1x256xf32>
    %196 = arith.negf %195 : vector<1x256xf32>
    %197 = math.exp %196 : vector<1x256xf32>
    %cst_70 = arith.constant 1.000000e+00 : f32
    %198 = vector.broadcast %cst_70 : f32 to vector<1x256xf32>
    %199 = arith.addf %198, %197 : vector<1x256xf32>
    %200 = arith.divf %198, %199 : vector<1x256xf32>
    %201 = vector.extract_strided_slice %200 {offsets = [0, 0], sizes = [1, 128], strides = [1, 1]} : vector<1x256xf32> to vector<1x128xf32>
    %202 = vector.extract_strided_slice %200 {offsets = [0, 128], sizes = [1, 128], strides = [1, 1]} : vector<1x256xf32> to vector<1x128xf32>
    %203 = vector.extract_strided_slice %194 {offsets = [0, 256], sizes = [1, 128], strides = [1, 1]} : vector<1x512xf32> to vector<1x128xf32>
    %204 = math.tanh %203 : vector<1x128xf32>
    %205 = vector.extract_strided_slice %194 {offsets = [0, 384], sizes = [1, 128], strides = [1, 1]} : vector<1x512xf32> to vector<1x128xf32>
    %206 = arith.negf %205 : vector<1x128xf32>
    %207 = math.exp %206 : vector<1x128xf32>
    %cst_71 = arith.constant 1.000000e+00 : f32
    %208 = vector.broadcast %cst_71 : f32 to vector<1x128xf32>
    %209 = arith.addf %208, %207 : vector<1x128xf32>
    %210 = arith.divf %208, %209 : vector<1x128xf32>
    %211 = arith.mulf %202, %187 : vector<1x128xf32>
    %212 = arith.mulf %201, %204 : vector<1x128xf32>
    %213 = arith.addf %211, %212 : vector<1x128xf32>
    %214 = math.tanh %213 : vector<1x128xf32>
    %215 = arith.mulf %210, %214 : vector<1x128xf32>
    %c7_72 = arith.constant 7 : index
    %c0_73 = arith.constant 0 : index
    %216 = vector.load %arg7[%c7_72, %c0_73] : memref<8x128xf32, #tpu.memory_space<vmem>>, vector<1x128xf32>
    tpu.vector_store %arg7[%c7_72, %c0_73], %215 {strides = array<i32>} : memref<8x128xf32, #tpu.memory_space<vmem>>, vector<1x128xf32>,
    %c0_74 = arith.constant 0 : index
    %c0_75 = arith.constant 0 : index
    %217 = vector.load %arg7[%c0_74, %c0_75] : memref<8x128xf32, #tpu.memory_space<vmem>>, vector<8x128xf32>
    %c128 = arith.constant 128 : index
    %c0_76 = arith.constant 0 : index
    %218 = vector.load %arg1[%c128, %c0_76] : memref<256x512xf32, #tpu.memory_space<vmem>>, vector<128x512xf32>
    %cst_77 = arith.constant dense<0.000000e+00> : vector<8x512xf32>
    %219 = tpu.matmul %217, %218, %cst_77 {dimension_numbers = #tpu.dot_dimension_numbers<[1], [0], [0], [1], [0, 0, 1, 1], [], []>} : vector<8x128xf32>, vector<128x512xf32>, vector<8x512xf32> -> vector<8x512xf32>
    %c1_78 = arith.constant 1 : index
    %c0_79 = arith.constant 0 : index
    %220 = vector.load %arg3[%c1_78, %c0_79] : memref<2x512xf32, #tpu.memory_space<vmem>>, vector<1x512xf32>
    %221 = vector.broadcast %220 : vector<1x512xf32> to vector<8x512xf32>
    %222 = arith.addf %219, %221 : vector<8x512xf32>
    %c0_80 = arith.constant 0 : index
    %c0_81 = arith.constant 0 : index
    %223 = vector.load %arg8[%c0_80, %c0_81] : memref<8x512xf32, #tpu.memory_space<vmem>>, vector<8x512xf32>
    tpu.vector_store %arg8[%c0_80, %c0_81], %222 {strides = array<i32>} : memref<8x512xf32, #tpu.memory_space<vmem>>, vector<8x512xf32>,
    %cst_82 = arith.constant 0.000000e+00 : f32
    %224 = vector.broadcast %cst_82 : f32 to vector<1x128xf32>
    %cst_83 = arith.constant 0.000000e+00 : f32
    %225 = vector.broadcast %cst_83 : f32 to vector<1x128xf32>
    %c0_84 = arith.constant 0 : index
    %c0_85 = arith.constant 0 : index
    %226 = vector.load %arg8[%c0_84, %c0_85] : memref<8x512xf32, #tpu.memory_space<vmem>>, vector<1x512xf32>
    %c128_86 = arith.constant 128 : index
    %c0_87 = arith.constant 0 : index
    %227 = vector.load %arg2[%c128_86, %c0_87] : memref<256x512xf32, #tpu.memory_space<vmem>>, vector<128x512xf32>
    %cst_88 = arith.constant dense<0.000000e+00> : vector<1x512xf32>
    %228 = tpu.matmul %224, %227, %cst_88 {dimension_numbers = #tpu.dot_dimension_numbers<[1], [0], [0], [1], [0, 0, 1, 1], [], []>} : vector<1x128xf32>, vector<128x512xf32>, vector<1x512xf32> -> vector<1x512xf32>
    %229 = arith.addf %226, %228 : vector<1x512xf32>
    %230 = vector.extract_strided_slice %229 {offsets = [0, 0], sizes = [1, 256], strides = [1, 1]} : vector<1x512xf32> to vector<1x256xf32>
    %231 = arith.negf %230 : vector<1x256xf32>
    %232 = math.exp %231 : vector<1x256xf32>
    %cst_89 = arith.constant 1.000000e+00 : f32
    %233 = vector.broadcast %cst_89 : f32 to vector<1x256xf32>
    %234 = arith.addf %233, %232 : vector<1x256xf32>
    %235 = arith.divf %233, %234 : vector<1x256xf32>
    %236 = vector.extract_strided_slice %235 {offsets = [0, 0], sizes = [1, 128], strides = [1, 1]} : vector<1x256xf32> to vector<1x128xf32>
    %237 = vector.extract_strided_slice %235 {offsets = [0, 128], sizes = [1, 128], strides = [1, 1]} : vector<1x256xf32> to vector<1x128xf32>
    %238 = vector.extract_strided_slice %229 {offsets = [0, 256], sizes = [1, 128], strides = [1, 1]} : vector<1x512xf32> to vector<1x128xf32>
    %239 = math.tanh %238 : vector<1x128xf32>
    %240 = vector.extract_strided_slice %229 {offsets = [0, 384], sizes = [1, 128], strides = [1, 1]} : vector<1x512xf32> to vector<1x128xf32>
    %241 = arith.negf %240 : vector<1x128xf32>
    %242 = math.exp %241 : vector<1x128xf32>
    %cst_90 = arith.constant 1.000000e+00 : f32
    %243 = vector.broadcast %cst_90 : f32 to vector<1x128xf32>
    %244 = arith.addf %243, %242 : vector<1x128xf32>
    %245 = arith.divf %243, %244 : vector<1x128xf32>
    %246 = arith.mulf %237, %225 : vector<1x128xf32>
    %247 = arith.mulf %236, %239 : vector<1x128xf32>
    %248 = arith.addf %246, %247 : vector<1x128xf32>
    %249 = math.tanh %248 : vector<1x128xf32>
    %250 = arith.mulf %245, %249 : vector<1x128xf32>
    %c0_91 = arith.constant 0 : index
    %c0_92 = arith.constant 0 : index
    %251 = vector.load %arg7[%c0_91, %c0_92] : memref<8x128xf32, #tpu.memory_space<vmem>>, vector<1x128xf32>
    tpu.vector_store %arg7[%c0_91, %c0_92], %250 {strides = array<i32>} : memref<8x128xf32, #tpu.memory_space<vmem>>, vector<1x128xf32>,
    %c1_93 = arith.constant 1 : index
    %c0_94 = arith.constant 0 : index
    %252 = vector.load %arg8[%c1_93, %c0_94] : memref<8x512xf32, #tpu.memory_space<vmem>>, vector<1x512xf32>
    %c128_95 = arith.constant 128 : index
    %c0_96 = arith.constant 0 : index
    %253 = vector.load %arg2[%c128_95, %c0_96] : memref<256x512xf32, #tpu.memory_space<vmem>>, vector<128x512xf32>
    %cst_97 = arith.constant dense<0.000000e+00> : vector<1x512xf32>
    %254 = tpu.matmul %250, %253, %cst_97 {dimension_numbers = #tpu.dot_dimension_numbers<[1], [0], [0], [1], [0, 0, 1, 1], [], []>} : vector<1x128xf32>, vector<128x512xf32>, vector<1x512xf32> -> vector<1x512xf32>
    %255 = arith.addf %252, %254 : vector<1x512xf32>
    %256 = vector.extract_strided_slice %255 {offsets = [0, 0], sizes = [1, 256], strides = [1, 1]} : vector<1x512xf32> to vector<1x256xf32>
    %257 = arith.negf %256 : vector<1x256xf32>
    %258 = math.exp %257 : vector<1x256xf32>
    %cst_98 = arith.constant 1.000000e+00 : f32
    %259 = vector.broadcast %cst_98 : f32 to vector<1x256xf32>
    %260 = arith.addf %259, %258 : vector<1x256xf32>
    %261 = arith.divf %259, %260 : vector<1x256xf32>
    %262 = vector.extract_strided_slice %261 {offsets = [0, 0], sizes = [1, 128], strides = [1, 1]} : vector<1x256xf32> to vector<1x128xf32>
    %263 = vector.extract_strided_slice %261 {offsets = [0, 128], sizes = [1, 128], strides = [1, 1]} : vector<1x256xf32> to vector<1x128xf32>
    %264 = vector.extract_strided_slice %255 {offsets = [0, 256], sizes = [1, 128], strides = [1, 1]} : vector<1x512xf32> to vector<1x128xf32>
    %265 = math.tanh %264 : vector<1x128xf32>
    %266 = vector.extract_strided_slice %255 {offsets = [0, 384], sizes = [1, 128], strides = [1, 1]} : vector<1x512xf32> to vector<1x128xf32>
    %267 = arith.negf %266 : vector<1x128xf32>
    %268 = math.exp %267 : vector<1x128xf32>
    %cst_99 = arith.constant 1.000000e+00 : f32
    %269 = vector.broadcast %cst_99 : f32 to vector<1x128xf32>
    %270 = arith.addf %269, %268 : vector<1x128xf32>
    %271 = arith.divf %269, %270 : vector<1x128xf32>
    %272 = arith.mulf %263, %248 : vector<1x128xf32>
    %273 = arith.mulf %262, %265 : vector<1x128xf32>
    %274 = arith.addf %272, %273 : vector<1x128xf32>
    %275 = math.tanh %274 : vector<1x128xf32>
    %276 = arith.mulf %271, %275 : vector<1x128xf32>
    %c1_100 = arith.constant 1 : index
    %c0_101 = arith.constant 0 : index
    %277 = vector.load %arg7[%c1_100, %c0_101] : memref<8x128xf32, #tpu.memory_space<vmem>>, vector<1x128xf32>
    tpu.vector_store %arg7[%c1_100, %c0_101], %276 {strides = array<i32>} : memref<8x128xf32, #tpu.memory_space<vmem>>, vector<1x128xf32>,
    %c2_102 = arith.constant 2 : index
    %c0_103 = arith.constant 0 : index
    %278 = vector.load %arg8[%c2_102, %c0_103] : memref<8x512xf32, #tpu.memory_space<vmem>>, vector<1x512xf32>
    %c128_104 = arith.constant 128 : index
    %c0_105 = arith.constant 0 : index
    %279 = vector.load %arg2[%c128_104, %c0_105] : memref<256x512xf32, #tpu.memory_space<vmem>>, vector<128x512xf32>
    %cst_106 = arith.constant dense<0.000000e+00> : vector<1x512xf32>
    %280 = tpu.matmul %276, %279, %cst_106 {dimension_numbers = #tpu.dot_dimension_numbers<[1], [0], [0], [1], [0, 0, 1, 1], [], []>} : vector<1x128xf32>, vector<128x512xf32>, vector<1x512xf32> -> vector<1x512xf32>
    %281 = arith.addf %278, %280 : vector<1x512xf32>
    %282 = vector.extract_strided_slice %281 {offsets = [0, 0], sizes = [1, 256], strides = [1, 1]} : vector<1x512xf32> to vector<1x256xf32>
    %283 = arith.negf %282 : vector<1x256xf32>
    %284 = math.exp %283 : vector<1x256xf32>
    %cst_107 = arith.constant 1.000000e+00 : f32
    %285 = vector.broadcast %cst_107 : f32 to vector<1x256xf32>
    %286 = arith.addf %285, %284 : vector<1x256xf32>
    %287 = arith.divf %285, %286 : vector<1x256xf32>
    %288 = vector.extract_strided_slice %287 {offsets = [0, 0], sizes = [1, 128], strides = [1, 1]} : vector<1x256xf32> to vector<1x128xf32>
    %289 = vector.extract_strided_slice %287 {offsets = [0, 128], sizes = [1, 128], strides = [1, 1]} : vector<1x256xf32> to vector<1x128xf32>
    %290 = vector.extract_strided_slice %281 {offsets = [0, 256], sizes = [1, 128], strides = [1, 1]} : vector<1x512xf32> to vector<1x128xf32>
    %291 = math.tanh %290 : vector<1x128xf32>
    %292 = vector.extract_strided_slice %281 {offsets = [0, 384], sizes = [1, 128], strides = [1, 1]} : vector<1x512xf32> to vector<1x128xf32>
    %293 = arith.negf %292 : vector<1x128xf32>
    %294 = math.exp %293 : vector<1x128xf32>
    %cst_108 = arith.constant 1.000000e+00 : f32
    %295 = vector.broadcast %cst_108 : f32 to vector<1x128xf32>
    %296 = arith.addf %295, %294 : vector<1x128xf32>
    %297 = arith.divf %295, %296 : vector<1x128xf32>
    %298 = arith.mulf %289, %274 : vector<1x128xf32>
    %299 = arith.mulf %288, %291 : vector<1x128xf32>
    %300 = arith.addf %298, %299 : vector<1x128xf32>
    %301 = math.tanh %300 : vector<1x128xf32>
    %302 = arith.mulf %297, %301 : vector<1x128xf32>
    %c2_109 = arith.constant 2 : index
    %c0_110 = arith.constant 0 : index
    %303 = vector.load %arg7[%c2_109, %c0_110] : memref<8x128xf32, #tpu.memory_space<vmem>>, vector<1x128xf32>
    tpu.vector_store %arg7[%c2_109, %c0_110], %302 {strides = array<i32>} : memref<8x128xf32, #tpu.memory_space<vmem>>, vector<1x128xf32>,
    %c3_111 = arith.constant 3 : index
    %c0_112 = arith.constant 0 : index
    %304 = vector.load %arg8[%c3_111, %c0_112] : memref<8x512xf32, #tpu.memory_space<vmem>>, vector<1x512xf32>
    %c128_113 = arith.constant 128 : index
    %c0_114 = arith.constant 0 : index
    %305 = vector.load %arg2[%c128_113, %c0_114] : memref<256x512xf32, #tpu.memory_space<vmem>>, vector<128x512xf32>
    %cst_115 = arith.constant dense<0.000000e+00> : vector<1x512xf32>
    %306 = tpu.matmul %302, %305, %cst_115 {dimension_numbers = #tpu.dot_dimension_numbers<[1], [0], [0], [1], [0, 0, 1, 1], [], []>} : vector<1x128xf32>, vector<128x512xf32>, vector<1x512xf32> -> vector<1x512xf32>
    %307 = arith.addf %304, %306 : vector<1x512xf32>
    %308 = vector.extract_strided_slice %307 {offsets = [0, 0], sizes = [1, 256], strides = [1, 1]} : vector<1x512xf32> to vector<1x256xf32>
    %309 = arith.negf %308 : vector<1x256xf32>
    %310 = math.exp %309 : vector<1x256xf32>
    %cst_116 = arith.constant 1.000000e+00 : f32
    %311 = vector.broadcast %cst_116 : f32 to vector<1x256xf32>
    %312 = arith.addf %311, %310 : vector<1x256xf32>
    %313 = arith.divf %311, %312 : vector<1x256xf32>
    %314 = vector.extract_strided_slice %313 {offsets = [0, 0], sizes = [1, 128], strides = [1, 1]} : vector<1x256xf32> to vector<1x128xf32>
    %315 = vector.extract_strided_slice %313 {offsets = [0, 128], sizes = [1, 128], strides = [1, 1]} : vector<1x256xf32> to vector<1x128xf32>
    %316 = vector.extract_strided_slice %307 {offsets = [0, 256], sizes = [1, 128], strides = [1, 1]} : vector<1x512xf32> to vector<1x128xf32>
    %317 = math.tanh %316 : vector<1x128xf32>
    %318 = vector.extract_strided_slice %307 {offsets = [0, 384], sizes = [1, 128], strides = [1, 1]} : vector<1x512xf32> to vector<1x128xf32>
    %319 = arith.negf %318 : vector<1x128xf32>
    %320 = math.exp %319 : vector<1x128xf32>
    %cst_117 = arith.constant 1.000000e+00 : f32
    %321 = vector.broadcast %cst_117 : f32 to vector<1x128xf32>
    %322 = arith.addf %321, %320 : vector<1x128xf32>
    %323 = arith.divf %321, %322 : vector<1x128xf32>
    %324 = arith.mulf %315, %300 : vector<1x128xf32>
    %325 = arith.mulf %314, %317 : vector<1x128xf32>
    %326 = arith.addf %324, %325 : vector<1x128xf32>
    %327 = math.tanh %326 : vector<1x128xf32>
    %328 = arith.mulf %323, %327 : vector<1x128xf32>
    %c3_118 = arith.constant 3 : index
    %c0_119 = arith.constant 0 : index
    %329 = vector.load %arg7[%c3_118, %c0_119] : memref<8x128xf32, #tpu.memory_space<vmem>>, vector<1x128xf32>
    tpu.vector_store %arg7[%c3_118, %c0_119], %328 {strides = array<i32>} : memref<8x128xf32, #tpu.memory_space<vmem>>, vector<1x128xf32>,
    %c4_120 = arith.constant 4 : index
    %c0_121 = arith.constant 0 : index
    %330 = vector.load %arg8[%c4_120, %c0_121] : memref<8x512xf32, #tpu.memory_space<vmem>>, vector<1x512xf32>
    %c128_122 = arith.constant 128 : index
    %c0_123 = arith.constant 0 : index
    %331 = vector.load %arg2[%c128_122, %c0_123] : memref<256x512xf32, #tpu.memory_space<vmem>>, vector<128x512xf32>
    %cst_124 = arith.constant dense<0.000000e+00> : vector<1x512xf32>
    %332 = tpu.matmul %328, %331, %cst_124 {dimension_numbers = #tpu.dot_dimension_numbers<[1], [0], [0], [1], [0, 0, 1, 1], [], []>} : vector<1x128xf32>, vector<128x512xf32>, vector<1x512xf32> -> vector<1x512xf32>
    %333 = arith.addf %330, %332 : vector<1x512xf32>
    %334 = vector.extract_strided_slice %333 {offsets = [0, 0], sizes = [1, 256], strides = [1, 1]} : vector<1x512xf32> to vector<1x256xf32>
    %335 = arith.negf %334 : vector<1x256xf32>
    %336 = math.exp %335 : vector<1x256xf32>
    %cst_125 = arith.constant 1.000000e+00 : f32
    %337 = vector.broadcast %cst_125 : f32 to vector<1x256xf32>
    %338 = arith.addf %337, %336 : vector<1x256xf32>
    %339 = arith.divf %337, %338 : vector<1x256xf32>
    %340 = vector.extract_strided_slice %339 {offsets = [0, 0], sizes = [1, 128], strides = [1, 1]} : vector<1x256xf32> to vector<1x128xf32>
    %341 = vector.extract_strided_slice %339 {offsets = [0, 128], sizes = [1, 128], strides = [1, 1]} : vector<1x256xf32> to vector<1x128xf32>
    %342 = vector.extract_strided_slice %333 {offsets = [0, 256], sizes = [1, 128], strides = [1, 1]} : vector<1x512xf32> to vector<1x128xf32>
    %343 = math.tanh %342 : vector<1x128xf32>
    %344 = vector.extract_strided_slice %333 {offsets = [0, 384], sizes = [1, 128], strides = [1, 1]} : vector<1x512xf32> to vector<1x128xf32>
    %345 = arith.negf %344 : vector<1x128xf32>
    %346 = math.exp %345 : vector<1x128xf32>
    %cst_126 = arith.constant 1.000000e+00 : f32
    %347 = vector.broadcast %cst_126 : f32 to vector<1x128xf32>
    %348 = arith.addf %347, %346 : vector<1x128xf32>
    %349 = arith.divf %347, %348 : vector<1x128xf32>
    %350 = arith.mulf %341, %326 : vector<1x128xf32>
    %351 = arith.mulf %340, %343 : vector<1x128xf32>
    %352 = arith.addf %350, %351 : vector<1x128xf32>
    %353 = math.tanh %352 : vector<1x128xf32>
    %354 = arith.mulf %349, %353 : vector<1x128xf32>
    %c4_127 = arith.constant 4 : index
    %c0_128 = arith.constant 0 : index
    %355 = vector.load %arg7[%c4_127, %c0_128] : memref<8x128xf32, #tpu.memory_space<vmem>>, vector<1x128xf32>
    tpu.vector_store %arg7[%c4_127, %c0_128], %354 {strides = array<i32>} : memref<8x128xf32, #tpu.memory_space<vmem>>, vector<1x128xf32>,
    %c5_129 = arith.constant 5 : index
    %c0_130 = arith.constant 0 : index
    %356 = vector.load %arg8[%c5_129, %c0_130] : memref<8x512xf32, #tpu.memory_space<vmem>>, vector<1x512xf32>
    %c128_131 = arith.constant 128 : index
    %c0_132 = arith.constant 0 : index
    %357 = vector.load %arg2[%c128_131, %c0_132] : memref<256x512xf32, #tpu.memory_space<vmem>>, vector<128x512xf32>
    %cst_133 = arith.constant dense<0.000000e+00> : vector<1x512xf32>
    %358 = tpu.matmul %354, %357, %cst_133 {dimension_numbers = #tpu.dot_dimension_numbers<[1], [0], [0], [1], [0, 0, 1, 1], [], []>} : vector<1x128xf32>, vector<128x512xf32>, vector<1x512xf32> -> vector<1x512xf32>
    %359 = arith.addf %356, %358 : vector<1x512xf32>
    %360 = vector.extract_strided_slice %359 {offsets = [0, 0], sizes = [1, 256], strides = [1, 1]} : vector<1x512xf32> to vector<1x256xf32>
    %361 = arith.negf %360 : vector<1x256xf32>
    %362 = math.exp %361 : vector<1x256xf32>
    %cst_134 = arith.constant 1.000000e+00 : f32
    %363 = vector.broadcast %cst_134 : f32 to vector<1x256xf32>
    %364 = arith.addf %363, %362 : vector<1x256xf32>
    %365 = arith.divf %363, %364 : vector<1x256xf32>
    %366 = vector.extract_strided_slice %365 {offsets = [0, 0], sizes = [1, 128], strides = [1, 1]} : vector<1x256xf32> to vector<1x128xf32>
    %367 = vector.extract_strided_slice %365 {offsets = [0, 128], sizes = [1, 128], strides = [1, 1]} : vector<1x256xf32> to vector<1x128xf32>
    %368 = vector.extract_strided_slice %359 {offsets = [0, 256], sizes = [1, 128], strides = [1, 1]} : vector<1x512xf32> to vector<1x128xf32>
    %369 = math.tanh %368 : vector<1x128xf32>
    %370 = vector.extract_strided_slice %359 {offsets = [0, 384], sizes = [1, 128], strides = [1, 1]} : vector<1x512xf32> to vector<1x128xf32>
    %371 = arith.negf %370 : vector<1x128xf32>
    %372 = math.exp %371 : vector<1x128xf32>
    %cst_135 = arith.constant 1.000000e+00 : f32
    %373 = vector.broadcast %cst_135 : f32 to vector<1x128xf32>
    %374 = arith.addf %373, %372 : vector<1x128xf32>
    %375 = arith.divf %373, %374 : vector<1x128xf32>
    %376 = arith.mulf %367, %352 : vector<1x128xf32>
    %377 = arith.mulf %366, %369 : vector<1x128xf32>
    %378 = arith.addf %376, %377 : vector<1x128xf32>
    %379 = math.tanh %378 : vector<1x128xf32>
    %380 = arith.mulf %375, %379 : vector<1x128xf32>
    %c5_136 = arith.constant 5 : index
    %c0_137 = arith.constant 0 : index
    %381 = vector.load %arg7[%c5_136, %c0_137] : memref<8x128xf32, #tpu.memory_space<vmem>>, vector<1x128xf32>
    tpu.vector_store %arg7[%c5_136, %c0_137], %380 {strides = array<i32>} : memref<8x128xf32, #tpu.memory_space<vmem>>, vector<1x128xf32>,
    %c6_138 = arith.constant 6 : index
    %c0_139 = arith.constant 0 : index
    %382 = vector.load %arg8[%c6_138, %c0_139] : memref<8x512xf32, #tpu.memory_space<vmem>>, vector<1x512xf32>
    %c128_140 = arith.constant 128 : index
    %c0_141 = arith.constant 0 : index
    %383 = vector.load %arg2[%c128_140, %c0_141] : memref<256x512xf32, #tpu.memory_space<vmem>>, vector<128x512xf32>
    %cst_142 = arith.constant dense<0.000000e+00> : vector<1x512xf32>
    %384 = tpu.matmul %380, %383, %cst_142 {dimension_numbers = #tpu.dot_dimension_numbers<[1], [0], [0], [1], [0, 0, 1, 1], [], []>} : vector<1x128xf32>, vector<128x512xf32>, vector<1x512xf32> -> vector<1x512xf32>
    %385 = arith.addf %382, %384 : vector<1x512xf32>
    %386 = vector.extract_strided_slice %385 {offsets = [0, 0], sizes = [1, 256], strides = [1, 1]} : vector<1x512xf32> to vector<1x256xf32>
    %387 = arith.negf %386 : vector<1x256xf32>
    %388 = math.exp %387 : vector<1x256xf32>
    %cst_143 = arith.constant 1.000000e+00 : f32
    %389 = vector.broadcast %cst_143 : f32 to vector<1x256xf32>
    %390 = arith.addf %389, %388 : vector<1x256xf32>
    %391 = arith.divf %389, %390 : vector<1x256xf32>
    %392 = vector.extract_strided_slice %391 {offsets = [0, 0], sizes = [1, 128], strides = [1, 1]} : vector<1x256xf32> to vector<1x128xf32>
    %393 = vector.extract_strided_slice %391 {offsets = [0, 128], sizes = [1, 128], strides = [1, 1]} : vector<1x256xf32> to vector<1x128xf32>
    %394 = vector.extract_strided_slice %385 {offsets = [0, 256], sizes = [1, 128], strides = [1, 1]} : vector<1x512xf32> to vector<1x128xf32>
    %395 = math.tanh %394 : vector<1x128xf32>
    %396 = vector.extract_strided_slice %385 {offsets = [0, 384], sizes = [1, 128], strides = [1, 1]} : vector<1x512xf32> to vector<1x128xf32>
    %397 = arith.negf %396 : vector<1x128xf32>
    %398 = math.exp %397 : vector<1x128xf32>
    %cst_144 = arith.constant 1.000000e+00 : f32
    %399 = vector.broadcast %cst_144 : f32 to vector<1x128xf32>
    %400 = arith.addf %399, %398 : vector<1x128xf32>
    %401 = arith.divf %399, %400 : vector<1x128xf32>
    %402 = arith.mulf %393, %378 : vector<1x128xf32>
    %403 = arith.mulf %392, %395 : vector<1x128xf32>
    %404 = arith.addf %402, %403 : vector<1x128xf32>
    %405 = math.tanh %404 : vector<1x128xf32>
    %406 = arith.mulf %401, %405 : vector<1x128xf32>
    %c6_145 = arith.constant 6 : index
    %c0_146 = arith.constant 0 : index
    %407 = vector.load %arg7[%c6_145, %c0_146] : memref<8x128xf32, #tpu.memory_space<vmem>>, vector<1x128xf32>
    tpu.vector_store %arg7[%c6_145, %c0_146], %406 {strides = array<i32>} : memref<8x128xf32, #tpu.memory_space<vmem>>, vector<1x128xf32>,
    %c7_147 = arith.constant 7 : index
    %c0_148 = arith.constant 0 : index
    %408 = vector.load %arg8[%c7_147, %c0_148] : memref<8x512xf32, #tpu.memory_space<vmem>>, vector<1x512xf32>
    %c128_149 = arith.constant 128 : index
    %c0_150 = arith.constant 0 : index
    %409 = vector.load %arg2[%c128_149, %c0_150] : memref<256x512xf32, #tpu.memory_space<vmem>>, vector<128x512xf32>
    %cst_151 = arith.constant dense<0.000000e+00> : vector<1x512xf32>
    %410 = tpu.matmul %406, %409, %cst_151 {dimension_numbers = #tpu.dot_dimension_numbers<[1], [0], [0], [1], [0, 0, 1, 1], [], []>} : vector<1x128xf32>, vector<128x512xf32>, vector<1x512xf32> -> vector<1x512xf32>
    %411 = arith.addf %408, %410 : vector<1x512xf32>
    %412 = vector.extract_strided_slice %411 {offsets = [0, 0], sizes = [1, 256], strides = [1, 1]} : vector<1x512xf32> to vector<1x256xf32>
    %413 = arith.negf %412 : vector<1x256xf32>
    %414 = math.exp %413 : vector<1x256xf32>
    %cst_152 = arith.constant 1.000000e+00 : f32
    %415 = vector.broadcast %cst_152 : f32 to vector<1x256xf32>
    %416 = arith.addf %415, %414 : vector<1x256xf32>
    %417 = arith.divf %415, %416 : vector<1x256xf32>
    %418 = vector.extract_strided_slice %417 {offsets = [0, 0], sizes = [1, 128], strides = [1, 1]} : vector<1x256xf32> to vector<1x128xf32>
    %419 = vector.extract_strided_slice %417 {offsets = [0, 128], sizes = [1, 128], strides = [1, 1]} : vector<1x256xf32> to vector<1x128xf32>
    %420 = vector.extract_strided_slice %411 {offsets = [0, 256], sizes = [1, 128], strides = [1, 1]} : vector<1x512xf32> to vector<1x128xf32>
    %421 = math.tanh %420 : vector<1x128xf32>
    %422 = vector.extract_strided_slice %411 {offsets = [0, 384], sizes = [1, 128], strides = [1, 1]} : vector<1x512xf32> to vector<1x128xf32>
    %423 = arith.negf %422 : vector<1x128xf32>
    %424 = math.exp %423 : vector<1x128xf32>
    %cst_153 = arith.constant 1.000000e+00 : f32
    %425 = vector.broadcast %cst_153 : f32 to vector<1x128xf32>
    %426 = arith.addf %425, %424 : vector<1x128xf32>
    %427 = arith.divf %425, %426 : vector<1x128xf32>
    %428 = arith.mulf %419, %404 : vector<1x128xf32>
    %429 = arith.mulf %418, %421 : vector<1x128xf32>
    %430 = arith.addf %428, %429 : vector<1x128xf32>
    %431 = math.tanh %430 : vector<1x128xf32>
    %432 = arith.mulf %427, %431 : vector<1x128xf32>
    %c7_154 = arith.constant 7 : index
    %c0_155 = arith.constant 0 : index
    %433 = vector.load %arg7[%c7_154, %c0_155] : memref<8x128xf32, #tpu.memory_space<vmem>>, vector<1x128xf32>
    tpu.vector_store %arg7[%c7_154, %c0_155], %432 {strides = array<i32>} : memref<8x128xf32, #tpu.memory_space<vmem>>, vector<1x128xf32>,
    %c0_156 = arith.constant 0 : index
    %c0_157 = arith.constant 0 : index
    %434 = vector.load %arg7[%c0_156, %c0_157] : memref<8x128xf32, #tpu.memory_space<vmem>>, vector<8x128xf32>
    %c0_158 = arith.constant 0 : index
    %c0_159 = arith.constant 0 : index
    %435 = vector.load %arg4[%c0_158, %c0_159] : memref<128x128xf32, #tpu.memory_space<vmem>>, vector<128x128xf32>
    %cst_160 = arith.constant dense<0.000000e+00> : vector<8x128xf32>
    %436 = tpu.matmul %434, %435, %cst_160 {dimension_numbers = #tpu.dot_dimension_numbers<[1], [0], [0], [1], [0, 0, 1, 1], [], []>} : vector<8x128xf32>, vector<128x128xf32>, vector<8x128xf32> -> vector<8x128xf32>
    %c0_161 = arith.constant 0 : index
    %c0_162 = arith.constant 0 : index
    %437 = vector.load %arg5[%c0_161, %c0_162] : memref<1x128xf32, #tpu.memory_space<vmem>>, vector<1x128xf32>
    %438 = vector.broadcast %437 : vector<1x128xf32> to vector<8x128xf32>
    %439 = arith.addf %436, %438 : vector<8x128xf32>
    %c0_163 = arith.constant 0 : index
    %c0_164 = arith.constant 0 : index
    %440 = vector.load %arg6[%c0_163, %c0_164] : memref<8x128xf32, #tpu.memory_space<vmem>>, vector<8x128xf32>
    tpu.vector_store %arg6[%c0_163, %c0_164], %439 {strides = array<i32>} : memref<8x128xf32, #tpu.memory_space<vmem>>, vector<8x128xf32>,
    return
  }
}

</mosaic_0001>

<llo_original>
// kernel: _lstm_model_forward_impl.1
$region0: #{_lstm_model_forward_impl.1}
  #allocation0 [shape = 'u32[]', space=smem, size = 0x4, offset = 0x4, fixed_abs, tag = 'smem constant byte address 0x4 - core index']
  #allocation1 [shape = 'u32[72,128]{1,0:T(1,128)}', space=vmem, size = 0x9000, scoped, tag = 'internal scratch']
  #allocation2 [shape = 'f32[8,128]{1,0:T(8,128)}', space=vmem, size = 0x1000, scoped, tag = 'scratch operand']
  #allocation3 [shape = 'f32[8,512]{1,0:T(8,128)}', space=vmem, size = 0x4000, scoped, tag = 'scratch operand']
  %s0 = inlined_call_operand.vmem [shape: f32[8,128], index: 0, kind: input, shape index: {}]
  %s1 = inlined_call_operand.hbm [shape: f32[256,512], index: 1, kind: input, shape index: {}]
  %s2 = inlined_call_operand.hbm [shape: f32[256,512], index: 2, kind: input, shape index: {}]
  %s3 = inlined_call_operand.vmem [shape: f32[2,512], index: 3, kind: input, shape index: {}]
  %s4 = inlined_call_operand.hbm [shape: f32[128,128], index: 4, kind: input, shape index: {}]
  %s5 = inlined_call_operand.vmem [shape: f32[1,128], index: 5, kind: input, shape index: {}]
  %s6 = inlined_call_operand.vmem [shape: f32[8,128], index: 6, kind: output, shape index: {}]
  %s7 = sld [smem:[#allocation0]]
  $region46: #{_lstm_model_forward_impl.1} parent=0
    _
  %s9 = ssub.s32 1, %s7
  %s10 = scalar_select 0, %s9, %s7
  $region1: #{_lstm_model_forward_impl.1} parent=0
    #allocation4 [shape = 'u8[524288]{0}', space=vmem, size = 0x80000, scoped, tag = 'input window, operand 1, single buffered']
    #allocation5 [shape = 's32[1]{0}', space=sflag, size = 0x4, scoped, tag = 'scoped memory for _lstm_model_forward_impl.1']
    #allocation6 [shape = 'u8[524288]{0}', space=vmem, size = 0x80000, scoped, tag = 'input window, operand 2, single buffered']
    #allocation7 [shape = 's32[1]{0}', space=sflag, size = 0x4, scoped, tag = 'scoped memory for _lstm_model_forward_impl.1']
    #allocation8 [shape = 'u8[65536]{0}', space=vmem, size = 0x10000, scoped, tag = 'input window, operand 4, single buffered']
    %11 = vsyncpa [#allocation5], 0
    %12 = vsyncpa [#allocation7], 0
    // Predicated region
    $region2: #{_lstm_model_forward_impl.1} parent=1 // pred_check
      _
    $region3: #{_lstm_model_forward_impl.1} parent=1 // pred_check_branch
      %14 = sbr.rel (0) target = $region5
    $region4: #{_lstm_model_forward_impl.1} parent=1 // pred_region
      _
    $region5: #{_lstm_model_forward_impl.1} parent=1 // pred_fallthru
      _
    // Predicated region
    $region6: #{_lstm_model_forward_impl.1} parent=1 // pred_check
      _
    $region7: #{_lstm_model_forward_impl.1} parent=1 // pred_check_branch
      %16 = sbr.rel (0) target = $region9
    $region8: #{_lstm_model_forward_impl.1} parent=1 // pred_region
      %18 = vsyncadd [#allocation5], 0
      %s19 = sshll.u32 %s1, 4
      %s20 = int_to_ptr.hbm [resolvable:$true] %s19
      %s21 = sshll.u32 [#allocation4], 4
      %s22 = int_to_ptr.vmem [resolvable:$true] %s21
      %27 = dma.hbm_to_vmem [thread:$0]  %s20, 16384, %s22, [#allocation5], 512, 512, 32
    $region9: #{_lstm_model_forward_impl.1} parent=1 // pred_fallthru
      _
    // Predicated region
    $region10: #{_lstm_model_forward_impl.1} parent=1 // pred_check
      _
    $region11: #{_lstm_model_forward_impl.1} parent=1 // pred_check_branch
      %29 = sbr.rel (0) target = $region13
    $region12: #{_lstm_model_forward_impl.1} parent=1 // pred_region
      %31 = vsyncadd [#allocation7], 0
      %s32 = sshll.u32 %s2, 4
      %s33 = int_to_ptr.hbm [resolvable:$true] %s32
      %s34 = sshll.u32 [#allocation6], 4
      %s35 = int_to_ptr.vmem [resolvable:$true] %s34
      %40 = dma.hbm_to_vmem [thread:$0]  %s33, 16384, %s35, [#allocation7], 512, 512, 32
    $region13: #{_lstm_model_forward_impl.1} parent=1 // pred_fallthru
      _
    // Predicated region
    $region14: #{_lstm_model_forward_impl.1} parent=1 // pred_check
      _
    $region15: #{_lstm_model_forward_impl.1} parent=1 // pred_check_branch
      %42 = sbr.rel (0) target = $region17
    $region16: #{_lstm_model_forward_impl.1} parent=1 // pred_region
      _
    $region17: #{_lstm_model_forward_impl.1} parent=1 // pred_fallthru
      _
    // Predicated region
    $region18: #{_lstm_model_forward_impl.1} parent=1 // pred_check
      _
    $region19: #{_lstm_model_forward_impl.1} parent=1 // pred_check_branch
      %44 = sbr.rel (0) target = $region21
    $region20: #{_lstm_model_forward_impl.1} parent=1 // pred_region
      %46 = vsyncadd [#allocation7], 0
      %s47 = sshll.u32 %s4, 4
      %s48 = int_to_ptr.hbm [resolvable:$true] %s47
      %s49 = sshll.u32 [#allocation8], 4
      %s50 = int_to_ptr.vmem [resolvable:$true] %s49
      %55 = dma.hbm_to_vmem [thread:$0]  %s48, 2048, %s50, [#allocation7], 128, 128, 8
    $region21: #{_lstm_model_forward_impl.1} parent=1 // pred_fallthru
      _
    // Predicated region
    $region22: #{_lstm_model_forward_impl.1} parent=1 // pred_check
      _
    $region23: #{_lstm_model_forward_impl.1} parent=1 // pred_check_branch
      %57 = sbr.rel (0) target = $region25
    $region24: #{_lstm_model_forward_impl.1} parent=1 // pred_region
      _
    $region25: #{_lstm_model_forward_impl.1} parent=1 // pred_fallthru
      _
    // Predicated region
    $region26: #{_lstm_model_forward_impl.1} parent=1 // pred_check
      _
    $region27: #{_lstm_model_forward_impl.1} parent=1 // pred_check_branch
      %59 = sbr.rel (0) target = $region29
    $region28: #{_lstm_model_forward_impl.1} parent=1 // pred_region
      %61 = dma.done [#allocation5], 16384
    $region29: #{_lstm_model_forward_impl.1} parent=1 // pred_fallthru
      _
    // Predicated region
    $region30: #{_lstm_model_forward_impl.1} parent=1 // pred_check
      _
    $region31: #{_lstm_model_forward_impl.1} parent=1 // pred_check_branch
      %63 = sbr.rel (0) target = $region33
    $region32: #{_lstm_model_forward_impl.1} parent=1 // pred_region
      %65 = dma.done [#allocation7], 16384
    $region33: #{_lstm_model_forward_impl.1} parent=1 // pred_fallthru
      _
    // Predicated region
    $region34: #{_lstm_model_forward_impl.1} parent=1 // pred_check
      _
    $region35: #{_lstm_model_forward_impl.1} parent=1 // pred_check_branch
      %67 = sbr.rel (0) target = $region37
    $region36: #{_lstm_model_forward_impl.1} parent=1 // pred_region
      %69 = dma.done [#allocation7], 2048
    $region37: #{_lstm_model_forward_impl.1} parent=1 // pred_fallthru
      _
    %v70 = vld [vmem:[%s0] sm:$0xff]
    %v71 = vld [vmem:[#allocation4] sm:$0xff]
    %v72 = vld [vmem:[#allocation4 + $0x8] sm:$0xff]
    %v73 = vld [vmem:[#allocation4 + $0x10] sm:$0xff]
    %v74 = vld [vmem:[#allocation4 + $0x18] sm:$0xff]
    %v75 = vld [vmem:[#allocation4 + $0x20] sm:$0xff]
    %v76 = vld [vmem:[#allocation4 + $0x28] sm:$0xff]
    %v77 = vld [vmem:[#allocation4 + $0x30] sm:$0xff]
    %v78 = vld [vmem:[#allocation4 + $0x38] sm:$0xff]
    %v79 = vld [vmem:[#allocation4 + $0x40] sm:$0xff]
    %v80 = vld [vmem:[#allocation4 + $0x48] sm:$0xff]
    %v81 = vld [vmem:[#allocation4 + $0x50] sm:$0xff]
    %v82 = vld [vmem:[#allocation4 + $0x58] sm:$0xff]
    %v83 = vld [vmem:[#allocation4 + $0x60] sm:$0xff]
    %v84 = vld [vmem:[#allocation4 + $0x68] sm:$0xff]
    %v85 = vld [vmem:[#allocation4 + $0x70] sm:$0xff]
    %v86 = vld [vmem:[#allocation4 + $0x78] sm:$0xff]
    %v87 = vld [vmem:[#allocation4 + $0x80] sm:$0xff]
    %v88 = vld [vmem:[#allocation4 + $0x88] sm:$0xff]
    %v89 = vld [vmem:[#allocation4 + $0x90] sm:$0xff]
    %v90 = vld [vmem:[#allocation4 + $0x98] sm:$0xff]
    %v91 = vld [vmem:[#allocation4 + $0xa0] sm:$0xff]
    %v92 = vld [vmem:[#allocation4 + $0xa8] sm:$0xff]
    %v93 = vld [vmem:[#allocation4 + $0xb0] sm:$0xff]
    %v94 = vld [vmem:[#allocation4 + $0xb8] sm:$0xff]
    %v95 = vld [vmem:[#allocation4 + $0xc0] sm:$0xff]
    %v96 = vld [vmem:[#allocation4 + $0xc8] sm:$0xff]
    %v97 = vld [vmem:[#allocation4 + $0xd0] sm:$0xff]
    %v98 = vld [vmem:[#allocation4 + $0xd8] sm:$0xff]
    %v99 = vld [vmem:[#allocation4 + $0xe0] sm:$0xff]
    %v100 = vld [vmem:[#allocation4 + $0xe8] sm:$0xff]
    %v101 = vld [vmem:[#allocation4 + $0xf0] sm:$0xff]
    %v102 = vld [vmem:[#allocation4 + $0xf8] sm:$0xff]
    %v103 = vld [vmem:[#allocation4 + $0x100] sm:$0xff]
    %v104 = vld [vmem:[#allocation4 + $0x108] sm:$0xff]
    %v105 = vld [vmem:[#allocation4 + $0x110] sm:$0xff]
    %v106 = vld [vmem:[#allocation4 + $0x118] sm:$0xff]
    %v107 = vld [vmem:[#allocation4 + $0x120] sm:$0xff]
    %v108 = vld [vmem:[#allocation4 + $0x128] sm:$0xff]
    %v109 = vld [vmem:[#allocation4 + $0x130] sm:$0xff]
    %v110 = vld [vmem:[#allocation4 + $0x138] sm:$0xff]
    %v111 = vld [vmem:[#allocation4 + $0x140] sm:$0xff]
    %v112 = vld [vmem:[#allocation4 + $0x148] sm:$0xff]
    %v113 = vld [vmem:[#allocation4 + $0x150] sm:$0xff]
    %v114 = vld [vmem:[#allocation4 + $0x158] sm:$0xff]
    %v115 = vld [vmem:[#allocation4 + $0x160] sm:$0xff]
    %v116 = vld [vmem:[#allocation4 + $0x168] sm:$0xff]
    %v117 = vld [vmem:[#allocation4 + $0x170] sm:$0xff]
    %v118 = vld [vmem:[#allocation4 + $0x178] sm:$0xff]
    %v119 = vld [vmem:[#allocation4 + $0x180] sm:$0xff]
    %v120 = vld [vmem:[#allocation4 + $0x188] sm:$0xff]
    %v121 = vld [vmem:[#allocation4 + $0x190] sm:$0xff]
    %v122 = vld [vmem:[#allocation4 + $0x198] sm:$0xff]
    %v123 = vld [vmem:[#allocation4 + $0x1a0] sm:$0xff]
    %v124 = vld [vmem:[#allocation4 + $0x1a8] sm:$0xff]
    %v125 = vld [vmem:[#allocation4 + $0x1b0] sm:$0xff]
    %v126 = vld [vmem:[#allocation4 + $0x1b8] sm:$0xff]
    %v127 = vld [vmem:[#allocation4 + $0x1c0] sm:$0xff]
    %v128 = vld [vmem:[#allocation4 + $0x1c8] sm:$0xff]
    %v129 = vld [vmem:[#allocation4 + $0x1d0] sm:$0xff]
    %v130 = vld [vmem:[#allocation4 + $0x1d8] sm:$0xff]
    %v131 = vld [vmem:[#allocation4 + $0x1e0] sm:$0xff]
    %v132 = vld [vmem:[#allocation4 + $0x1e8] sm:$0xff]
    %v133 = vld [vmem:[#allocation4 + $0x1f0] sm:$0xff]
    %v134 = vld [vmem:[#allocation4 + $0x1f8] sm:$0xff]
    %v135 = vld [vmem:[%s3] ss:$2 sm:$0xf]
    %v137 = vperm.slane %v135, 0
    %v138 = vperm.slane %v135, 1
    %v139 = vperm.slane %v135, 2
    %v140 = vperm.slane %v135, 3
    %145 = vmatpush.msra.mxu0 %v131
    %146 = vmatpush.msra.mxu0 %v127
    %147 = vmatpush.msra.mxu0 %v123
    %148 = vmatpush.msra.mxu0 %v119
    %149 = vmatpush.msra.mxu0 %v115
    %150 = vmatpush.msra.mxu0 %v111
    %151 = vmatpush.msra.mxu0 %v107
    %152 = vmatpush.msra.mxu0 %v103
    %153 = vmatpush.msra.mxu0 %v99
    %154 = vmatpush.msra.mxu0 %v95
    %155 = vmatpush.msra.mxu0 %v91
    %156 = vmatpush.msra.mxu0 %v87
    %157 = vmatpush.msra.mxu0 %v83
    %158 = vmatpush.msra.mxu0 %v79
    %159 = vmatpush.msra.mxu0 %v75
    %160 = vmatpush.msra.mxu0 %v71
    %161 = vmatmul.f32.gmra.mxu0 %v70
    %v162 = vpop.f32.mrf.mxu0
    %v163 = vadd.f32 %v137, %v162
    %164 = vdwg.mxu0
    %165 = vmatpush.msra.mxu0 %v132
    %166 = vmatpush.msra.mxu0 %v128
    %167 = vmatpush.msra.mxu0 %v124
    %168 = vmatpush.msra.mxu0 %v120
    %169 = vmatpush.msra.mxu0 %v116
    %170 = vmatpush.msra.mxu0 %v112
    %171 = vmatpush.msra.mxu0 %v108
    %172 = vmatpush.msra.mxu0 %v104
    %173 = vmatpush.msra.mxu0 %v100
    %174 = vmatpush.msra.mxu0 %v96
    %175 = vmatpush.msra.mxu0 %v92
    %176 = vmatpush.msra.mxu0 %v88
    %177 = vmatpush.msra.mxu0 %v84
    %178 = vmatpush.msra.mxu0 %v80
    %179 = vmatpush.msra.mxu0 %v76
    %180 = vmatpush.msra.mxu0 %v72
    %181 = vmatmul.f32.gmra.mxu0 %v70
    %v182 = vpop.f32.mrf.mxu0
    %v183 = vadd.f32 %v138, %v182
    %184 = vdwg.mxu0
    %185 = vmatpush.msra.mxu0 %v133
    %186 = vmatpush.msra.mxu0 %v129
    %187 = vmatpush.msra.mxu0 %v125
    %188 = vmatpush.msra.mxu0 %v121
    %189 = vmatpush.msra.mxu0 %v117
    %190 = vmatpush.msra.mxu0 %v113
    %191 = vmatpush.msra.mxu0 %v109
    %192 = vmatpush.msra.mxu0 %v105
    %193 = vmatpush.msra.mxu0 %v101
    %194 = vmatpush.msra.mxu0 %v97
    %195 = vmatpush.msra.mxu0 %v93
    %196 = vmatpush.msra.mxu0 %v89
    %197 = vmatpush.msra.mxu0 %v85
    %198 = vmatpush.msra.mxu0 %v81
    %199 = vmatpush.msra.mxu0 %v77
    %200 = vmatpush.msra.mxu0 %v73
    %201 = vmatmul.f32.gmra.mxu0 %v70
    %v202 = vpop.f32.mrf.mxu0
    %v203 = vadd.f32 %v139, %v202
    %204 = vdwg.mxu0
    %205 = vmatpush.msra.mxu0 %v134
    %206 = vmatpush.msra.mxu0 %v130
    %207 = vmatpush.msra.mxu0 %v126
    %208 = vmatpush.msra.mxu0 %v122
    %209 = vmatpush.msra.mxu0 %v118
    %210 = vmatpush.msra.mxu0 %v114
    %211 = vmatpush.msra.mxu0 %v110
    %212 = vmatpush.msra.mxu0 %v106
    %213 = vmatpush.msra.mxu0 %v102
    %214 = vmatpush.msra.mxu0 %v98
    %215 = vmatpush.msra.mxu0 %v94
    %216 = vmatpush.msra.mxu0 %v90
    %217 = vmatpush.msra.mxu0 %v86
    %218 = vmatpush.msra.mxu0 %v82
    %219 = vmatpush.msra.mxu0 %v78
    %220 = vmatpush.msra.mxu0 %v74
    %221 = vmatmul.f32.gmra.mxu0 %v70
    %v222 = vpop.f32.mrf.mxu0
    %v223 = vadd.f32 %v140, %v222
    %224 = vdwg.mxu0
    %225 = vst [vmem:[#allocation3] sm:$0xff] %v163
    %226 = vst [vmem:[#allocation3 + $0x8] sm:$0xff] %v183
    %227 = vst [vmem:[#allocation3 + $0x10] sm:$0xff] %v203
    %228 = vst [vmem:[#allocation3 + $0x18] sm:$0xff] %v223
    %v229 = vld [vmem:[#allocation3] ss:$8 sm:$0xf]
    %v230 = vld [vmem:[#allocation6] sm:$0xff]
    %v231 = vld [vmem:[#allocation6 + $0x8] sm:$0xff]
    %v232 = vld [vmem:[#allocation6 + $0x10] sm:$0xff]
    %v233 = vld [vmem:[#allocation6 + $0x18] sm:$0xff]
    %v234 = vld [vmem:[#allocation6 + $0x20] sm:$0xff]
    %v235 = vld [vmem:[#allocation6 + $0x28] sm:$0xff]
    %v236 = vld [vmem:[#allocation6 + $0x30] sm:$0xff]
    %v237 = vld [vmem:[#allocation6 + $0x38] sm:$0xff]
    %v238 = vld [vmem:[#allocation6 + $0x40] sm:$0xff]
    %v239 = vld [vmem:[#allocation6 + $0x48] sm:$0xff]
    %v240 = vld [vmem:[#allocation6 + $0x50] sm:$0xff]
    %v241 = vld [vmem:[#allocation6 + $0x58] sm:$0xff]
    %v242 = vld [vmem:[#allocation6 + $0x60] sm:$0xff]
    %v243 = vld [vmem:[#allocation6 + $0x68] sm:$0xff]
    %v244 = vld [vmem:[#allocation6 + $0x70] sm:$0xff]
    %v245 = vld [vmem:[#allocation6 + $0x78] sm:$0xff]
    %v246 = vld [vmem:[#allocation6 + $0x80] sm:$0xff]
    %v247 = vld [vmem:[#allocation6 + $0x88] sm:$0xff]
    %v248 = vld [vmem:[#allocation6 + $0x90] sm:$0xff]
    %v249 = vld [vmem:[#allocation6 + $0x98] sm:$0xff]
    %v250 = vld [vmem:[#allocation6 + $0xa0] sm:$0xff]
    %v251 = vld [vmem:[#allocation6 + $0xa8] sm:$0xff]
    %v252 = vld [vmem:[#allocation6 + $0xb0] sm:$0xff]
    %v253 = vld [vmem:[#allocation6 + $0xb8] sm:$0xff]
    %v254 = vld [vmem:[#allocation6 + $0xc0] sm:$0xff]
    %v255 = vld [vmem:[#allocation6 + $0xc8] sm:$0xff]
    %v256 = vld [vmem:[#allocation6 + $0xd0] sm:$0xff]
    %v257 = vld [vmem:[#allocation6 + $0xd8] sm:$0xff]
    %v258 = vld [vmem:[#allocation6 + $0xe0] sm:$0xff]
    %v259 = vld [vmem:[#allocation6 + $0xe8] sm:$0xff]
    %v260 = vld [vmem:[#allocation6 + $0xf0] sm:$0xff]
    %v261 = vld [vmem:[#allocation6 + $0xf8] sm:$0xff]
    %v262 = vld [vmem:[#allocation6 + $0x100] sm:$0xff]
    %v263 = vld [vmem:[#allocation6 + $0x108] sm:$0xff]
    %v264 = vld [vmem:[#allocation6 + $0x110] sm:$0xff]
    %v265 = vld [vmem:[#allocation6 + $0x118] sm:$0xff]
    %v266 = vld [vmem:[#allocation6 + $0x120] sm:$0xff]
    %v267 = vld [vmem:[#allocation6 + $0x128] sm:$0xff]
    %v268 = vld [vmem:[#allocation6 + $0x130] sm:$0xff]
    %v269 = vld [vmem:[#allocation6 + $0x138] sm:$0xff]
    %v270 = vld [vmem:[#allocation6 + $0x140] sm:$0xff]
    %v271 = vld [vmem:[#allocation6 + $0x148] sm:$0xff]
    %v272 = vld [vmem:[#allocation6 + $0x150] sm:$0xff]
    %v273 = vld [vmem:[#allocation6 + $0x158] sm:$0xff]
    %v274 = vld [vmem:[#allocation6 + $0x160] sm:$0xff]
    %v275 = vld [vmem:[#allocation6 + $0x168] sm:$0xff]
    %v276 = vld [vmem:[#allocation6 + $0x170] sm:$0xff]
    %v277 = vld [vmem:[#allocation6 + $0x178] sm:$0xff]
    %v278 = vld [vmem:[#allocation6 + $0x180] sm:$0xff]
    %v279 = vld [vmem:[#allocation6 + $0x188] sm:$0xff]
    %v280 = vld [vmem:[#allocation6 + $0x190] sm:$0xff]
    %v281 = vld [vmem:[#allocation6 + $0x198] sm:$0xff]
    %v282 = vld [vmem:[#allocation6 + $0x1a0] sm:$0xff]
    %v283 = vld [vmem:[#allocation6 + $0x1a8] sm:$0xff]
    %v284 = vld [vmem:[#allocation6 + $0x1b0] sm:$0xff]
    %v285 = vld [vmem:[#allocation6 + $0x1b8] sm:$0xff]
    %v286 = vld [vmem:[#allocation6 + $0x1c0] sm:$0xff]
    %v287 = vld [vmem:[#allocation6 + $0x1c8] sm:$0xff]
    %v288 = vld [vmem:[#allocation6 + $0x1d0] sm:$0xff]
    %v289 = vld [vmem:[#allocation6 + $0x1d8] sm:$0xff]
    %v290 = vld [vmem:[#allocation6 + $0x1e0] sm:$0xff]
    %v291 = vld [vmem:[#allocation6 + $0x1e8] sm:$0xff]
    %v292 = vld [vmem:[#allocation6 + $0x1f0] sm:$0xff]
    %v293 = vld [vmem:[#allocation6 + $0x1f8] sm:$0xff]
    %294 = vmatpush.msra.mxu0 %v290
    %295 = vmatpush.msra.mxu0 %v286
    %296 = vmatpush.msra.mxu0 %v282
    %297 = vmatpush.msra.mxu0 %v278
    %298 = vmatpush.msra.mxu0 %v274
    %299 = vmatpush.msra.mxu0 %v270
    %300 = vmatpush.msra.mxu0 %v266
    %301 = vmatpush.msra.mxu0 %v262
    %302 = vmatpush.msra.mxu0 %v258
    %303 = vmatpush.msra.mxu0 %v254
    %304 = vmatpush.msra.mxu0 %v250
    %305 = vmatpush.msra.mxu0 %v246
    %306 = vmatpush.msra.mxu0 %v242
    %307 = vmatpush.msra.mxu0 %v238
    %308 = vmatpush.msra.mxu0 %v234
    %309 = vmatpush.msra.mxu0 %v230
    %310 = vmatmul.f32.gmra.mxu0 0.0
    %v311 = vpop.f32.mrf.mxu0
    %v312 = vadd.f32 0.0, %v311
    %313 = vdwg.mxu0
    %314 = vmatpush.msra.mxu0 %v291
    %315 = vmatpush.msra.mxu0 %v287
    %316 = vmatpush.msra.mxu0 %v283
    %317 = vmatpush.msra.mxu0 %v279
    %318 = vmatpush.msra.mxu0 %v275
    %319 = vmatpush.msra.mxu0 %v271
    %320 = vmatpush.msra.mxu0 %v267
    %321 = vmatpush.msra.mxu0 %v263
    %322 = vmatpush.msra.mxu0 %v259
    %323 = vmatpush.msra.mxu0 %v255
    %324 = vmatpush.msra.mxu0 %v251
    %325 = vmatpush.msra.mxu0 %v247
    %326 = vmatpush.msra.mxu0 %v243
    %327 = vmatpush.msra.mxu0 %v239
    %328 = vmatpush.msra.mxu0 %v235
    %329 = vmatpush.msra.mxu0 %v231
    %330 = vmatmul.f32.gmra.mxu0 0.0
    %v331 = vpop.f32.mrf.mxu0
    %v332 = vadd.f32 0.0, %v331
    %333 = vdwg.mxu0
    %334 = vmatpush.msra.mxu0 %v292
    %335 = vmatpush.msra.mxu0 %v288
    %336 = vmatpush.msra.mxu0 %v284
    %337 = vmatpush.msra.mxu0 %v280
    %338 = vmatpush.msra.mxu0 %v276
    %339 = vmatpush.msra.mxu0 %v272
    %340 = vmatpush.msra.mxu0 %v268
    %341 = vmatpush.msra.mxu0 %v264
    %342 = vmatpush.msra.mxu0 %v260
    %343 = vmatpush.msra.mxu0 %v256
    %344 = vmatpush.msra.mxu0 %v252
    %345 = vmatpush.msra.mxu0 %v248
    %346 = vmatpush.msra.mxu0 %v244
    %347 = vmatpush.msra.mxu0 %v240
    %348 = vmatpush.msra.mxu0 %v236
    %349 = vmatpush.msra.mxu0 %v232
    %350 = vmatmul.f32.gmra.mxu0 0.0
    %v351 = vpop.f32.mrf.mxu0
    %v352 = vadd.f32 0.0, %v351
    %353 = vdwg.mxu0
    %354 = vmatpush.msra.mxu0 %v293
    %355 = vmatpush.msra.mxu0 %v289
    %356 = vmatpush.msra.mxu0 %v285
    %357 = vmatpush.msra.mxu0 %v281
    %358 = vmatpush.msra.mxu0 %v277
    %359 = vmatpush.msra.mxu0 %v273
    %360 = vmatpush.msra.mxu0 %v269
    %361 = vmatpush.msra.mxu0 %v265
    %362 = vmatpush.msra.mxu0 %v261
    %363 = vmatpush.msra.mxu0 %v257
    %364 = vmatpush.msra.mxu0 %v253
    %365 = vmatpush.msra.mxu0 %v249
    %366 = vmatpush.msra.mxu0 %v245
    %367 = vmatpush.msra.mxu0 %v241
    %368 = vmatpush.msra.mxu0 %v237
    %369 = vmatpush.msra.mxu0 %v233
    %370 = vmatmul.f32.gmra.mxu0 0.0
    %v371 = vpop.f32.mrf.mxu0
    %v372 = vadd.f32 0.0, %v371
    %373 = vdwg.mxu0
    %v378 = vrot.slane %v332, 7
    %v379 = vrot.slane %v352, 6
    %v380 = vrot.slane %v372, 5
    %vm381 = vcmask 1040384
    %v382 = vsel %vm381, %v312, %v378
    %vm383 = vcmask 1042434
    %v384 = vsel %vm383, %v379, %v380
    %vm385 = vcmask 1041408
    %v386 = vsel %vm385, %v382, %v384
    %v388 = vadd.f32 %v229, %v386
    %v389 = vxor.u32 %v388, 2147483648
    %v390 = vmul.f32 %v389, 1.442695
    %v391 = vpow.pop %v390
    %v392 = vadd.f32 %v391, 1.0
    %v393 = vrcp.pop %v392
    %v394 = vmul.f32 %v392, %v393
    %v395 = vsub.f32 1.0, %v394
    %v396 = vmul.f32 %v393, %v395
    %v397 = vadd.f32 %v393, %v396
    %vm398 = vweird.f32 %v392
    %vm399 = vweird.f32 %v393
    %vm400 = vmor %vm398, %vm399
    %v401 = vsel %vm400, %v393, %v397
    %v402 = vand.u32 2147483647, %v392
    %vm403 = vcmp.eq.f32.partialorder %v402, 8.507059e+37
    %v404 = vand.u32 %v392, 2147483648
    %v405 = vor.u32 1.1754944e-38, %v404
    %v406 = vsel %vm403, %v405, %v401
    %v407 = vmul.f32 1.0, %v406
    %v409 = vrot.slane %v388, 2
    %v411 = vtanh.pop %v409
    %v412 = vrot.slane %v388, 3
    %v414 = vxor.u32 %v412, 2147483648
    %v415 = vmul.f32 %v414, 1.442695
    %v416 = vpow.pop %v415
    %v417 = vadd.f32 %v416, 1.0
    %v418 = vrcp.pop %v417
    %v419 = vmul.f32 %v417, %v418
    %v420 = vsub.f32 1.0, %v419
    %v421 = vmul.f32 %v418, %v420
    %v422 = vadd.f32 %v418, %v421
    %vm423 = vweird.f32 %v417
    %vm424 = vweird.f32 %v418
    %vm425 = vmor %vm423, %vm424
    %v426 = vsel %vm425, %v418, %v422
    %v427 = vand.u32 2147483647, %v417
    %vm428 = vcmp.eq.f32.partialorder %v427, 8.507059e+37
    %v429 = vand.u32 %v417, 2147483648
    %v430 = vor.u32 1.1754944e-38, %v429
    %v431 = vsel %vm428, %v430, %v426
    %v432 = vmul.f32 1.0, %v431
    %v434 = vrot.slane %v407, 1
    %v436 = vmul.f32 %v434, 0.0
    %v437 = vmul.f32 %v407, %v411
    %v438 = vadd.f32 %v436, %v437
    %v439 = vtanh.pop %v438
    %v440 = vmul.f32 %v432, %v439
    %441 = vst [vmem:[#allocation2] sm:$0x1] %v440
    %s442 = scalar_lea.vmem [#allocation3], 1
    %v443 = vld [vmem:[%s442] ss:$8 sm:$0xf]
    %v444 = vld [vmem:[#allocation6] sm:$0xff]
    %v445 = vld [vmem:[#allocation6 + $0x8] sm:$0xff]
    %v446 = vld [vmem:[#allocation6 + $0x10] sm:$0xff]
    %v447 = vld [vmem:[#allocation6 + $0x18] sm:$0xff]
    %v448 = vld [vmem:[#allocation6 + $0x20] sm:$0xff]
    %v449 = vld [vmem:[#allocation6 + $0x28] sm:$0xff]
    %v450 = vld [vmem:[#allocation6 + $0x30] sm:$0xff]
    %v451 = vld [vmem:[#allocation6 + $0x38] sm:$0xff]
    %v452 = vld [vmem:[#allocation6 + $0x40] sm:$0xff]
    %v453 = vld [vmem:[#allocation6 + $0x48] sm:$0xff]
    %v454 = vld [vmem:[#allocation6 + $0x50] sm:$0xff]
    %v455 = vld [vmem:[#allocation6 + $0x58] sm:$0xff]
    %v456 = vld [vmem:[#allocation6 + $0x60] sm:$0xff]
    %v457 = vld [vmem:[#allocation6 + $0x68] sm:$0xff]
    %v458 = vld [vmem:[#allocation6 + $0x70] sm:$0xff]
    %v459 = vld [vmem:[#allocation6 + $0x78] sm:$0xff]
    %v460 = vld [vmem:[#allocation6 + $0x80] sm:$0xff]
    %v461 = vld [vmem:[#allocation6 + $0x88] sm:$0xff]
    %v462 = vld [vmem:[#allocation6 + $0x90] sm:$0xff]
    %v463 = vld [vmem:[#allocation6 + $0x98] sm:$0xff]
    %v464 = vld [vmem:[#allocation6 + $0xa0] sm:$0xff]
    %v465 = vld [vmem:[#allocation6 + $0xa8] sm:$0xff]
    %v466 = vld [vmem:[#allocation6 + $0xb0] sm:$0xff]
    %v467 = vld [vmem:[#allocation6 + $0xb8] sm:$0xff]
    %v468 = vld [vmem:[#allocation6 + $0xc0] sm:$0xff]
    %v469 = vld [vmem:[#allocation6 + $0xc8] sm:$0xff]
    %v470 = vld [vmem:[#allocation6 + $0xd0] sm:$0xff]
    %v471 = vld [vmem:[#allocation6 + $0xd8] sm:$0xff]
    %v472 = vld [vmem:[#allocation6 + $0xe0] sm:$0xff]
    %v473 = vld [vmem:[#allocation6 + $0xe8] sm:$0xff]
    %v474 = vld [vmem:[#allocation6 + $0xf0] sm:$0xff]
    %v475 = vld [vmem:[#allocation6 + $0xf8] sm:$0xff]
    %v476 = vld [vmem:[#allocation6 + $0x100] sm:$0xff]
    %v477 = vld [vmem:[#allocation6 + $0x108] sm:$0xff]
    %v478 = vld [vmem:[#allocation6 + $0x110] sm:$0xff]
    %v479 = vld [vmem:[#allocation6 + $0x118] sm:$0xff]
    %v480 = vld [vmem:[#allocation6 + $0x120] sm:$0xff]
    %v481 = vld [vmem:[#allocation6 + $0x128] sm:$0xff]
    %v482 = vld [vmem:[#allocation6 + $0x130] sm:$0xff]
    %v483 = vld [vmem:[#allocation6 + $0x138] sm:$0xff]
    %v484 = vld [vmem:[#allocation6 + $0x140] sm:$0xff]
    %v485 = vld [vmem:[#allocation6 + $0x148] sm:$0xff]
    %v486 = vld [vmem:[#allocation6 + $0x150] sm:$0xff]
    %v487 = vld [vmem:[#allocation6 + $0x158] sm:$0xff]
    %v488 = vld [vmem:[#allocation6 + $0x160] sm:$0xff]
    %v489 = vld [vmem:[#allocation6 + $0x168] sm:$0xff]
    %v490 = vld [vmem:[#allocation6 + $0x170] sm:$0xff]
    %v491 = vld [vmem:[#allocation6 + $0x178] sm:$0xff]
    %v492 = vld [vmem:[#allocation6 + $0x180] sm:$0xff]
    %v493 = vld [vmem:[#allocation6 + $0x188] sm:$0xff]
    %v494 = vld [vmem:[#allocation6 + $0x190] sm:$0xff]
    %v495 = vld [vmem:[#allocation6 + $0x198] sm:$0xff]
    %v496 = vld [vmem:[#allocation6 + $0x1a0] sm:$0xff]
    %v497 = vld [vmem:[#allocation6 + $0x1a8] sm:$0xff]
    %v498 = vld [vmem:[#allocation6 + $0x1b0] sm:$0xff]
    %v499 = vld [vmem:[#allocation6 + $0x1b8] sm:$0xff]
    %v500 = vld [vmem:[#allocation6 + $0x1c0] sm:$0xff]
    %v501 = vld [vmem:[#allocation6 + $0x1c8] sm:$0xff]
    %v502 = vld [vmem:[#allocation6 + $0x1d0] sm:$0xff]
    %v503 = vld [vmem:[#allocation6 + $0x1d8] sm:$0xff]
    %v504 = vld [vmem:[#allocation6 + $0x1e0] sm:$0xff]
    %v505 = vld [vmem:[#allocation6 + $0x1e8] sm:$0xff]
    %v506 = vld [vmem:[#allocation6 + $0x1f0] sm:$0xff]
    %v507 = vld [vmem:[#allocation6 + $0x1f8] sm:$0xff]
    %508 = vmatpush.msra.mxu0 %v504
    %509 = vmatpush.msra.mxu0 %v500
    %510 = vmatpush.msra.mxu0 %v496
    %511 = vmatpush.msra.mxu0 %v492
    %512 = vmatpush.msra.mxu0 %v488
    %513 = vmatpush.msra.mxu0 %v484
    %514 = vmatpush.msra.mxu0 %v480
    %515 = vmatpush.msra.mxu0 %v476
    %516 = vmatpush.msra.mxu0 %v472
    %517 = vmatpush.msra.mxu0 %v468
    %518 = vmatpush.msra.mxu0 %v464
    %519 = vmatpush.msra.mxu0 %v460
    %520 = vmatpush.msra.mxu0 %v456
    %521 = vmatpush.msra.mxu0 %v452
    %522 = vmatpush.msra.mxu0 %v448
    %523 = vmatpush.msra.mxu0 %v444
    %524 = vmatmul.f32.gmra.mxu0 %v440
    %v525 = vpop.f32.mrf.mxu0
    %v526 = vadd.f32 0.0, %v525
    %527 = vdwg.mxu0
    %528 = vmatpush.msra.mxu0 %v505
    %529 = vmatpush.msra.mxu0 %v501
    %530 = vmatpush.msra.mxu0 %v497
    %531 = vmatpush.msra.mxu0 %v493
    %532 = vmatpush.msra.mxu0 %v489
    %533 = vmatpush.msra.mxu0 %v485
    %534 = vmatpush.msra.mxu0 %v481
    %535 = vmatpush.msra.mxu0 %v477
    %536 = vmatpush.msra.mxu0 %v473
    %537 = vmatpush.msra.mxu0 %v469
    %538 = vmatpush.msra.mxu0 %v465
    %539 = vmatpush.msra.mxu0 %v461
    %540 = vmatpush.msra.mxu0 %v457
    %541 = vmatpush.msra.mxu0 %v453
    %542 = vmatpush.msra.mxu0 %v449
    %543 = vmatpush.msra.mxu0 %v445
    %544 = vmatmul.f32.gmra.mxu0 %v440
    %v545 = vpop.f32.mrf.mxu0
    %v546 = vadd.f32 0.0, %v545
    %547 = vdwg.mxu0
    %548 = vmatpush.msra.mxu0 %v506
    %549 = vmatpush.msra.mxu0 %v502
    %550 = vmatpush.msra.mxu0 %v498
    %551 = vmatpush.msra.mxu0 %v494
    %552 = vmatpush.msra.mxu0 %v490
    %553 = vmatpush.msra.mxu0 %v486
    %554 = vmatpush.msra.mxu0 %v482
    %555 = vmatpush.msra.mxu0 %v478
    %556 = vmatpush.msra.mxu0 %v474
    %557 = vmatpush.msra.mxu0 %v470
    %558 = vmatpush.msra.mxu0 %v466
    %559 = vmatpush.msra.mxu0 %v462
    %560 = vmatpush.msra.mxu0 %v458
    %561 = vmatpush.msra.mxu0 %v454
    %562 = vmatpush.msra.mxu0 %v450
    %563 = vmatpush.msra.mxu0 %v446
    %564 = vmatmul.f32.gmra.mxu0 %v440
    %v565 = vpop.f32.mrf.mxu0
    %v566 = vadd.f32 0.0, %v565
    %567 = vdwg.mxu0
    %568 = vmatpush.msra.mxu0 %v507
    %569 = vmatpush.msra.mxu0 %v503
    %570 = vmatpush.msra.mxu0 %v499
    %571 = vmatpush.msra.mxu0 %v495
    %572 = vmatpush.msra.mxu0 %v491
    %573 = vmatpush.msra.mxu0 %v487
    %574 = vmatpush.msra.mxu0 %v483
    %575 = vmatpush.msra.mxu0 %v479
    %576 = vmatpush.msra.mxu0 %v475
    %577 = vmatpush.msra.mxu0 %v471
    %578 = vmatpush.msra.mxu0 %v467
    %579 = vmatpush.msra.mxu0 %v463
    %580 = vmatpush.msra.mxu0 %v459
    %581 = vmatpush.msra.mxu0 %v455
    %582 = vmatpush.msra.mxu0 %v451
    %583 = vmatpush.msra.mxu0 %v447
    %584 = vmatmul.f32.gmra.mxu0 %v440
    %v585 = vpop.f32.mrf.mxu0
    %v586 = vadd.f32 0.0, %v585
    %587 = vdwg.mxu0
    %v592 = vrot.slane %v546, 7
    %v593 = vrot.slane %v566, 6
    %v594 = vrot.slane %v586, 5
    %v595 = vsel %vm381, %v526, %v592
    %v596 = vsel %vm383, %v593, %v594
    %v597 = vsel %vm385, %v595, %v596
    %v599 = vadd.f32 %v443, %v597
    %v600 = vxor.u32 %v599, 2147483648
    %v601 = vmul.f32 %v600, 1.442695
    %v602 = vpow.pop %v601
    %v603 = vadd.f32 %v602, 1.0
    %v604 = vrcp.pop %v603
    %v605 = vmul.f32 %v603, %v604
    %v606 = vsub.f32 1.0, %v605
    %v607 = vmul.f32 %v604, %v606
    %v608 = vadd.f32 %v604, %v607
    %vm609 = vweird.f32 %v603
    %vm610 = vweird.f32 %v604
    %vm611 = vmor %vm609, %vm610
    %v612 = vsel %vm611, %v604, %v608
    %v613 = vand.u32 2147483647, %v603
    %vm614 = vcmp.eq.f32.partialorder %v613, 8.507059e+37
    %v615 = vand.u32 %v603, 2147483648
    %v616 = vor.u32 1.1754944e-38, %v615
    %v617 = vsel %vm614, %v616, %v612
    %v618 = vmul.f32 1.0, %v617
    %v620 = vrot.slane %v599, 2
    %v622 = vtanh.pop %v620
    %v623 = vrot.slane %v599, 3
    %v625 = vxor.u32 %v623, 2147483648
    %v626 = vmul.f32 %v625, 1.442695
    %v627 = vpow.pop %v626
    %v628 = vadd.f32 %v627, 1.0
    %v629 = vrcp.pop %v628
    %v630 = vmul.f32 %v628, %v629
    %v631 = vsub.f32 1.0, %v630
    %v632 = vmul.f32 %v629, %v631
    %v633 = vadd.f32 %v629, %v632
    %vm634 = vweird.f32 %v628
    %vm635 = vweird.f32 %v629
    %vm636 = vmor %vm634, %vm635
    %v637 = vsel %vm636, %v629, %v633
    %v638 = vand.u32 2147483647, %v628
    %vm639 = vcmp.eq.f32.partialorder %v638, 8.507059e+37
    %v640 = vand.u32 %v628, 2147483648
    %v641 = vor.u32 1.1754944e-38, %v640
    %v642 = vsel %vm639, %v641, %v637
    %v643 = vmul.f32 1.0, %v642
    %v645 = vrot.slane %v618, 1
    %v647 = vmul.f32 %v645, %v438
    %v648 = vmul.f32 %v618, %v622
    %v649 = vadd.f32 %v647, %v648
    %v650 = vtanh.pop %v649
    %v651 = vmul.f32 %v643, %v650
    %652 = vst [vmem:[#allocation2 + $0x1] sm:$0x1] %v651
    %s653 = scalar_lea.vmem [#allocation3], 2
    %v654 = vld [vmem:[%s653] ss:$8 sm:$0xf]
    %v655 = vld [vmem:[#allocation6] sm:$0xff]
    %v656 = vld [vmem:[#allocation6 + $0x8] sm:$0xff]
    %v657 = vld [vmem:[#allocation6 + $0x10] sm:$0xff]
    %v658 = vld [vmem:[#allocation6 + $0x18] sm:$0xff]
    %v659 = vld [vmem:[#allocation6 + $0x20] sm:$0xff]
    %v660 = vld [vmem:[#allocation6 + $0x28] sm:$0xff]
    %v661 = vld [vmem:[#allocation6 + $0x30] sm:$0xff]
    %v662 = vld [vmem:[#allocation6 + $0x38] sm:$0xff]
    %v663 = vld [vmem:[#allocation6 + $0x40] sm:$0xff]
    %v664 = vld [vmem:[#allocation6 + $0x48] sm:$0xff]
    %v665 = vld [vmem:[#allocation6 + $0x50] sm:$0xff]
    %v666 = vld [vmem:[#allocation6 + $0x58] sm:$0xff]
    %v667 = vld [vmem:[#allocation6 + $0x60] sm:$0xff]
    %v668 = vld [vmem:[#allocation6 + $0x68] sm:$0xff]
    %v669 = vld [vmem:[#allocation6 + $0x70] sm:$0xff]
    %v670 = vld [vmem:[#allocation6 + $0x78] sm:$0xff]
    %v671 = vld [vmem:[#allocation6 + $0x80] sm:$0xff]
    %v672 = vld [vmem:[#allocation6 + $0x88] sm:$0xff]
    %v673 = vld [vmem:[#allocation6 + $0x90] sm:$0xff]
    %v674 = vld [vmem:[#allocation6 + $0x98] sm:$0xff]
    %v675 = vld [vmem:[#allocation6 + $0xa0] sm:$0xff]
    %v676 = vld [vmem:[#allocation6 + $0xa8] sm:$0xff]
    %v677 = vld [vmem:[#allocation6 + $0xb0] sm:$0xff]
    %v678 = vld [vmem:[#allocation6 + $0xb8] sm:$0xff]
    %v679 = vld [vmem:[#allocation6 + $0xc0] sm:$0xff]
    %v680 = vld [vmem:[#allocation6 + $0xc8] sm:$0xff]
    %v681 = vld [vmem:[#allocation6 + $0xd0] sm:$0xff]
    %v682 = vld [vmem:[#allocation6 + $0xd8] sm:$0xff]
    %v683 = vld [vmem:[#allocation6 + $0xe0] sm:$0xff]
    %v684 = vld [vmem:[#allocation6 + $0xe8] sm:$0xff]
    %v685 = vld [vmem:[#allocation6 + $0xf0] sm:$0xff]
    %v686 = vld [vmem:[#allocation6 + $0xf8] sm:$0xff]
    %v687 = vld [vmem:[#allocation6 + $0x100] sm:$0xff]
    %v688 = vld [vmem:[#allocation6 + $0x108] sm:$0xff]
    %v689 = vld [vmem:[#allocation6 + $0x110] sm:$0xff]
    %v690 = vld [vmem:[#allocation6 + $0x118] sm:$0xff]
    %v691 = vld [vmem:[#allocation6 + $0x120] sm:$0xff]
    %v692 = vld [vmem:[#allocation6 + $0x128] sm:$0xff]
    %v693 = vld [vmem:[#allocation6 + $0x130] sm:$0xff]
    %v694 = vld [vmem:[#allocation6 + $0x138] sm:$0xff]
    %v695 = vld [vmem:[#allocation6 + $0x140] sm:$0xff]
    %v696 = vld [vmem:[#allocation6 + $0x148] sm:$0xff]
    %v697 = vld [vmem:[#allocation6 + $0x150] sm:$0xff]
    %v698 = vld [vmem:[#allocation6 + $0x158] sm:$0xff]
    %v699 = vld [vmem:[#allocation6 + $0x160] sm:$0xff]
    %v700 = vld [vmem:[#allocation6 + $0x168] sm:$0xff]
    %v701 = vld [vmem:[#allocation6 + $0x170] sm:$0xff]
    %v702 = vld [vmem:[#allocation6 + $0x178] sm:$0xff]
    %v703 = vld [vmem:[#allocation6 + $0x180] sm:$0xff]
    %v704 = vld [vmem:[#allocation6 + $0x188] sm:$0xff]
    %v705 = vld [vmem:[#allocation6 + $0x190] sm:$0xff]
    %v706 = vld [vmem:[#allocation6 + $0x198] sm:$0xff]
    %v707 = vld [vmem:[#allocation6 + $0x1a0] sm:$0xff]
    %v708 = vld [vmem:[#allocation6 + $0x1a8] sm:$0xff]
    %v709 = vld [vmem:[#allocation6 + $0x1b0] sm:$0xff]
    %v710 = vld [vmem:[#allocation6 + $0x1b8] sm:$0xff]
    %v711 = vld [vmem:[#allocation6 + $0x1c0] sm:$0xff]
    %v712 = vld [vmem:[#allocation6 + $0x1c8] sm:$0xff]
    %v713 = vld [vmem:[#allocation6 + $0x1d0] sm:$0xff]
    %v714 = vld [vmem:[#allocation6 + $0x1d8] sm:$0xff]
    %v715 = vld [vmem:[#allocation6 + $0x1e0] sm:$0xff]
    %v716 = vld [vmem:[#allocation6 + $0x1e8] sm:$0xff]
    %v717 = vld [vmem:[#allocation6 + $0x1f0] sm:$0xff]
    %v718 = vld [vmem:[#allocation6 + $0x1f8] sm:$0xff]
    %719 = vmatpush.msra.mxu0 %v715
    %720 = vmatpush.msra.mxu0 %v711
    %721 = vmatpush.msra.mxu0 %v707
    %722 = vmatpush.msra.mxu0 %v703
    %723 = vmatpush.msra.mxu0 %v699
    %724 = vmatpush.msra.mxu0 %v695
    %725 = vmatpush.msra.mxu0 %v691
    %726 = vmatpush.msra.mxu0 %v687
    %727 = vmatpush.msra.mxu0 %v683
    %728 = vmatpush.msra.mxu0 %v679
    %729 = vmatpush.msra.mxu0 %v675
    %730 = vmatpush.msra.mxu0 %v671
    %731 = vmatpush.msra.mxu0 %v667
    %732 = vmatpush.msra.mxu0 %v663
    %733 = vmatpush.msra.mxu0 %v659
    %734 = vmatpush.msra.mxu0 %v655
    %735 = vmatmul.f32.gmra.mxu0 %v651
    %v736 = vpop.f32.mrf.mxu0
    %v737 = vadd.f32 0.0, %v736
    %738 = vdwg.mxu0
    %739 = vmatpush.msra.mxu0 %v716
    %740 = vmatpush.msra.mxu0 %v712
    %741 = vmatpush.msra.mxu0 %v708
    %742 = vmatpush.msra.mxu0 %v704
    %743 = vmatpush.msra.mxu0 %v700
    %744 = vmatpush.msra.mxu0 %v696
    %745 = vmatpush.msra.mxu0 %v692
    %746 = vmatpush.msra.mxu0 %v688
    %747 = vmatpush.msra.mxu0 %v684
    %748 = vmatpush.msra.mxu0 %v680
    %749 = vmatpush.msra.mxu0 %v676
    %750 = vmatpush.msra.mxu0 %v672
    %751 = vmatpush.msra.mxu0 %v668
    %752 = vmatpush.msra.mxu0 %v664
    %753 = vmatpush.msra.mxu0 %v660
    %754 = vmatpush.msra.mxu0 %v656
    %755 = vmatmul.f32.gmra.mxu0 %v651
    %v756 = vpop.f32.mrf.mxu0
    %v757 = vadd.f32 0.0, %v756
    %758 = vdwg.mxu0
    %759 = vmatpush.msra.mxu0 %v717
    %760 = vmatpush.msra.mxu0 %v713
    %761 = vmatpush.msra.mxu0 %v709
    %762 = vmatpush.msra.mxu0 %v705
    %763 = vmatpush.msra.mxu0 %v701
    %764 = vmatpush.msra.mxu0 %v697
    %765 = vmatpush.msra.mxu0 %v693
    %766 = vmatpush.msra.mxu0 %v689
    %767 = vmatpush.msra.mxu0 %v685
    %768 = vmatpush.msra.mxu0 %v681
    %769 = vmatpush.msra.mxu0 %v677
    %770 = vmatpush.msra.mxu0 %v673
    %771 = vmatpush.msra.mxu0 %v669
    %772 = vmatpush.msra.mxu0 %v665
    %773 = vmatpush.msra.mxu0 %v661
    %774 = vmatpush.msra.mxu0 %v657
    %775 = vmatmul.f32.gmra.mxu0 %v651
    %v776 = vpop.f32.mrf.mxu0
    %v777 = vadd.f32 0.0, %v776
    %778 = vdwg.mxu0
    %779 = vmatpush.msra.mxu0 %v718
    %780 = vmatpush.msra.mxu0 %v714
    %781 = vmatpush.msra.mxu0 %v710
    %782 = vmatpush.msra.mxu0 %v706
    %783 = vmatpush.msra.mxu0 %v702
    %784 = vmatpush.msra.mxu0 %v698
    %785 = vmatpush.msra.mxu0 %v694
    %786 = vmatpush.msra.mxu0 %v690
    %787 = vmatpush.msra.mxu0 %v686
    %788 = vmatpush.msra.mxu0 %v682
    %789 = vmatpush.msra.mxu0 %v678
    %790 = vmatpush.msra.mxu0 %v674
    %791 = vmatpush.msra.mxu0 %v670
    %792 = vmatpush.msra.mxu0 %v666
    %793 = vmatpush.msra.mxu0 %v662
    %794 = vmatpush.msra.mxu0 %v658
    %795 = vmatmul.f32.gmra.mxu0 %v651
    %v796 = vpop.f32.mrf.mxu0
    %v797 = vadd.f32 0.0, %v796
    %798 = vdwg.mxu0
    %v803 = vrot.slane %v757, 7
    %v804 = vrot.slane %v777, 6
    %v805 = vrot.slane %v797, 5
    %v806 = vsel %vm381, %v737, %v803
    %v807 = vsel %vm383, %v804, %v805
    %v808 = vsel %vm385, %v806, %v807
    %v810 = vadd.f32 %v654, %v808
    %v811 = vxor.u32 %v810, 2147483648
    %v812 = vmul.f32 %v811, 1.442695
    %v813 = vpow.pop %v812
    %v814 = vadd.f32 %v813, 1.0
    %v815 = vrcp.pop %v814
    %v816 = vmul.f32 %v814, %v815
    %v817 = vsub.f32 1.0, %v816
    %v818 = vmul.f32 %v815, %v817
    %v819 = vadd.f32 %v815, %v818
    %vm820 = vweird.f32 %v814
    %vm821 = vweird.f32 %v815
    %vm822 = vmor %vm820, %vm821
    %v823 = vsel %vm822, %v815, %v819
    %v824 = vand.u32 2147483647, %v814
    %vm825 = vcmp.eq.f32.partialorder %v824, 8.507059e+37
    %v826 = vand.u32 %v814, 2147483648
    %v827 = vor.u32 1.1754944e-38, %v826
    %v828 = vsel %vm825, %v827, %v823
    %v829 = vmul.f32 1.0, %v828
    %v831 = vrot.slane %v810, 2
    %v833 = vtanh.pop %v831
    %v834 = vrot.slane %v810, 3
    %v836 = vxor.u32 %v834, 2147483648
    %v837 = vmul.f32 %v836, 1.442695
    %v838 = vpow.pop %v837
    %v839 = vadd.f32 %v838, 1.0
    %v840 = vrcp.pop %v839
    %v841 = vmul.f32 %v839, %v840
    %v842 = vsub.f32 1.0, %v841
    %v843 = vmul.f32 %v840, %v842
    %v844 = vadd.f32 %v840, %v843
    %vm845 = vweird.f32 %v839
    %vm846 = vweird.f32 %v840
    %vm847 = vmor %vm845, %vm846
    %v848 = vsel %vm847, %v840, %v844
    %v849 = vand.u32 2147483647, %v839
    %vm850 = vcmp.eq.f32.partialorder %v849, 8.507059e+37
    %v851 = vand.u32 %v839, 2147483648
    %v852 = vor.u32 1.1754944e-38, %v851
    %v853 = vsel %vm850, %v852, %v848
    %v854 = vmul.f32 1.0, %v853
    %v856 = vrot.slane %v829, 1
    %v858 = vmul.f32 %v856, %v649
    %v859 = vmul.f32 %v829, %v833
    %v860 = vadd.f32 %v858, %v859
    %v861 = vtanh.pop %v860
    %v862 = vmul.f32 %v854, %v861
    %863 = vst [vmem:[#allocation2 + $0x2] sm:$0x1] %v862
    %s864 = scalar_lea.vmem [#allocation3], 3
    %v865 = vld [vmem:[%s864] ss:$8 sm:$0xf]
    %v866 = vld [vmem:[#allocation6] sm:$0xff]
    %v867 = vld [vmem:[#allocation6 + $0x8] sm:$0xff]
    %v868 = vld [vmem:[#allocation6 + $0x10] sm:$0xff]
    %v869 = vld [vmem:[#allocation6 + $0x18] sm:$0xff]
    %v870 = vld [vmem:[#allocation6 + $0x20] sm:$0xff]
    %v871 = vld [vmem:[#allocation6 + $0x28] sm:$0xff]
    %v872 = vld [vmem:[#allocation6 + $0x30] sm:$0xff]
    %v873 = vld [vmem:[#allocation6 + $0x38] sm:$0xff]
    %v874 = vld [vmem:[#allocation6 + $0x40] sm:$0xff]
    %v875 = vld [vmem:[#allocation6 + $0x48] sm:$0xff]
    %v876 = vld [vmem:[#allocation6 + $0x50] sm:$0xff]
    %v877 = vld [vmem:[#allocation6 + $0x58] sm:$0xff]
    %v878 = vld [vmem:[#allocation6 + $0x60] sm:$0xff]
    %v879 = vld [vmem:[#allocation6 + $0x68] sm:$0xff]
    %v880 = vld [vmem:[#allocation6 + $0x70] sm:$0xff]
    %v881 = vld [vmem:[#allocation6 + $0x78] sm:$0xff]
    %v882 = vld [vmem:[#allocation6 + $0x80] sm:$0xff]
    %v883 = vld [vmem:[#allocation6 + $0x88] sm:$0xff]
    %v884 = vld [vmem:[#allocation6 + $0x90] sm:$0xff]
    %v885 = vld [vmem:[#allocation6 + $0x98] sm:$0xff]
    %v886 = vld [vmem:[#allocation6 + $0xa0] sm:$0xff]
    %v887 = vld [vmem:[#allocation6 + $0xa8] sm:$0xff]
    %v888 = vld [vmem:[#allocation6 + $0xb0] sm:$0xff]
    %v889 = vld [vmem:[#allocation6 + $0xb8] sm:$0xff]
    %v890 = vld [vmem:[#allocation6 + $0xc0] sm:$0xff]
    %v891 = vld [vmem:[#allocation6 + $0xc8] sm:$0xff]
    %v892 = vld [vmem:[#allocation6 + $0xd0] sm:$0xff]
    %v893 = vld [vmem:[#allocation6 + $0xd8] sm:$0xff]
    %v894 = vld [vmem:[#allocation6 + $0xe0] sm:$0xff]
    %v895 = vld [vmem:[#allocation6 + $0xe8] sm:$0xff]
    %v896 = vld [vmem:[#allocation6 + $0xf0] sm:$0xff]
    %v897 = vld [vmem:[#allocation6 + $0xf8] sm:$0xff]
    %v898 = vld [vmem:[#allocation6 + $0x100] sm:$0xff]
    %v899 = vld [vmem:[#allocation6 + $0x108] sm:$0xff]
    %v900 = vld [vmem:[#allocation6 + $0x110] sm:$0xff]
    %v901 = vld [vmem:[#allocation6 + $0x118] sm:$0xff]
    %v902 = vld [vmem:[#allocation6 + $0x120] sm:$0xff]
    %v903 = vld [vmem:[#allocation6 + $0x128] sm:$0xff]
    %v904 = vld [vmem:[#allocation6 + $0x130] sm:$0xff]
    %v905 = vld [vmem:[#allocation6 + $0x138] sm:$0xff]
    %v906 = vld [vmem:[#allocation6 + $0x140] sm:$0xff]
    %v907 = vld [vmem:[#allocation6 + $0x148] sm:$0xff]
    %v908 = vld [vmem:[#allocation6 + $0x150] sm:$0xff]
    %v909 = vld [vmem:[#allocation6 + $0x158] sm:$0xff]
    %v910 = vld [vmem:[#allocation6 + $0x160] sm:$0xff]
    %v911 = vld [vmem:[#allocation6 + $0x168] sm:$0xff]
    %v912 = vld [vmem:[#allocation6 + $0x170] sm:$0xff]
    %v913 = vld [vmem:[#allocation6 + $0x178] sm:$0xff]
    %v914 = vld [vmem:[#allocation6 + $0x180] sm:$0xff]
    %v915 = vld [vmem:[#allocation6 + $0x188] sm:$0xff]
    %v916 = vld [vmem:[#allocation6 + $0x190] sm:$0xff]
    %v917 = vld [vmem:[#allocation6 + $0x198] sm:$0xff]
    %v918 = vld [vmem:[#allocation6 + $0x1a0] sm:$0xff]
    %v919 = vld [vmem:[#allocation6 + $0x1a8] sm:$0xff]
    %v920 = vld [vmem:[#allocation6 + $0x1b0] sm:$0xff]
    %v921 = vld [vmem:[#allocation6 + $0x1b8] sm:$0xff]
    %v922 = vld [vmem:[#allocation6 + $0x1c0] sm:$0xff]
    %v923 = vld [vmem:[#allocation6 + $0x1c8] sm:$0xff]
    %v924 = vld [vmem:[#allocation6 + $0x1d0] sm:$0xff]
    %v925 = vld [vmem:[#allocation6 + $0x1d8] sm:$0xff]
    %v926 = vld [vmem:[#allocation6 + $0x1e0] sm:$0xff]
    %v927 = vld [vmem:[#allocation6 + $0x1e8] sm:$0xff]
    %v928 = vld [vmem:[#allocation6 + $0x1f0] sm:$0xff]
    %v929 = vld [vmem:[#allocation6 + $0x1f8] sm:$0xff]
    %930 = vmatpush.msra.mxu0 %v926
    %931 = vmatpush.msra.mxu0 %v922
    %932 = vmatpush.msra.mxu0 %v918
    %933 = vmatpush.msra.mxu0 %v914
    %934 = vmatpush.msra.mxu0 %v910
    %935 = vmatpush.msra.mxu0 %v906
    %936 = vmatpush.msra.mxu0 %v902
    %937 = vmatpush.msra.mxu0 %v898
    %938 = vmatpush.msra.mxu0 %v894
    %939 = vmatpush.msra.mxu0 %v890
    %940 = vmatpush.msra.mxu0 %v886
    %941 = vmatpush.msra.mxu0 %v882
    %942 = vmatpush.msra.mxu0 %v878
    %943 = vmatpush.msra.mxu0 %v874
    %944 = vmatpush.msra.mxu0 %v870
    %945 = vmatpush.msra.mxu0 %v866
    %946 = vmatmul.f32.gmra.mxu0 %v862
    %v947 = vpop.f32.mrf.mxu0
    %v948 = vadd.f32 0.0, %v947
    %949 = vdwg.mxu0
    %950 = vmatpush.msra.mxu0 %v927
    %951 = vmatpush.msra.mxu0 %v923
    %952 = vmatpush.msra.mxu0 %v919
    %953 = vmatpush.msra.mxu0 %v915
    %954 = vmatpush.msra.mxu0 %v911
    %955 = vmatpush.msra.mxu0 %v907
    %956 = vmatpush.msra.mxu0 %v903
    %957 = vmatpush.msra.mxu0 %v899
    %958 = vmatpush.msra.mxu0 %v895
    %959 = vmatpush.msra.mxu0 %v891
    %960 = vmatpush.msra.mxu0 %v887
    %961 = vmatpush.msra.mxu0 %v883
    %962 = vmatpush.msra.mxu0 %v879
    %963 = vmatpush.msra.mxu0 %v875
    %964 = vmatpush.msra.mxu0 %v871
    %965 = vmatpush.msra.mxu0 %v867
    %966 = vmatmul.f32.gmra.mxu0 %v862
    %v967 = vpop.f32.mrf.mxu0
    %v968 = vadd.f32 0.0, %v967
    %969 = vdwg.mxu0
    %970 = vmatpush.msra.mxu0 %v928
    %971 = vmatpush.msra.mxu0 %v924
    %972 = vmatpush.msra.mxu0 %v920
    %973 = vmatpush.msra.mxu0 %v916
    %974 = vmatpush.msra.mxu0 %v912
    %975 = vmatpush.msra.mxu0 %v908
    %976 = vmatpush.msra.mxu0 %v904
    %977 = vmatpush.msra.mxu0 %v900
    %978 = vmatpush.msra.mxu0 %v896
    %979 = vmatpush.msra.mxu0 %v892
    %980 = vmatpush.msra.mxu0 %v888
    %981 = vmatpush.msra.mxu0 %v884
    %982 = vmatpush.msra.mxu0 %v880
    %983 = vmatpush.msra.mxu0 %v876
    %984 = vmatpush.msra.mxu0 %v872
    %985 = vmatpush.msra.mxu0 %v868
    %986 = vmatmul.f32.gmra.mxu0 %v862
    %v987 = vpop.f32.mrf.mxu0
    %v988 = vadd.f32 0.0, %v987
    %989 = vdwg.mxu0
    %990 = vmatpush.msra.mxu0 %v929
    %991 = vmatpush.msra.mxu0 %v925
    %992 = vmatpush.msra.mxu0 %v921
    %993 = vmatpush.msra.mxu0 %v917
    %994 = vmatpush.msra.mxu0 %v913
    %995 = vmatpush.msra.mxu0 %v909
    %996 = vmatpush.msra.mxu0 %v905
    %997 = vmatpush.msra.mxu0 %v901
    %998 = vmatpush.msra.mxu0 %v897
    %999 = vmatpush.msra.mxu0 %v893
    %1000 = vmatpush.msra.mxu0 %v889
    %1001 = vmatpush.msra.mxu0 %v885
    %1002 = vmatpush.msra.mxu0 %v881
    %1003 = vmatpush.msra.mxu0 %v877
    %1004 = vmatpush.msra.mxu0 %v873
    %1005 = vmatpush.msra.mxu0 %v869
    %1006 = vmatmul.f32.gmra.mxu0 %v862
    %v1007 = vpop.f32.mrf.mxu0
    %v1008 = vadd.f32 0.0, %v1007
    %1009 = vdwg.mxu0
    %v1014 = vrot.slane %v968, 7
    %v1015 = vrot.slane %v988, 6
    %v1016 = vrot.slane %v1008, 5
    %v1017 = vsel %vm381, %v948, %v1014
    %v1018 = vsel %vm383, %v1015, %v1016
    %v1019 = vsel %vm385, %v1017, %v1018
    %v1021 = vadd.f32 %v865, %v1019
    %v1022 = vxor.u32 %v1021, 2147483648
    %v1023 = vmul.f32 %v1022, 1.442695
    %v1024 = vpow.pop %v1023
    %v1025 = vadd.f32 %v1024, 1.0
    %v1026 = vrcp.pop %v1025
    %v1027 = vmul.f32 %v1025, %v1026
    %v1028 = vsub.f32 1.0, %v1027
    %v1029 = vmul.f32 %v1026, %v1028
    %v1030 = vadd.f32 %v1026, %v1029
    %vm1031 = vweird.f32 %v1025
    %vm1032 = vweird.f32 %v1026
    %vm1033 = vmor %vm1031, %vm1032
    %v1034 = vsel %vm1033, %v1026, %v1030
    %v1035 = vand.u32 2147483647, %v1025
    %vm1036 = vcmp.eq.f32.partialorder %v1035, 8.507059e+37
    %v1037 = vand.u32 %v1025, 2147483648
    %v1038 = vor.u32 1.1754944e-38, %v1037
    %v1039 = vsel %vm1036, %v1038, %v1034
    %v1040 = vmul.f32 1.0, %v1039
    %v1042 = vrot.slane %v1021, 2
    %v1044 = vtanh.pop %v1042
    %v1045 = vrot.slane %v1021, 3
    %v1047 = vxor.u32 %v1045, 2147483648
    %v1048 = vmul.f32 %v1047, 1.442695
    %v1049 = vpow.pop %v1048
    %v1050 = vadd.f32 %v1049, 1.0
    %v1051 = vrcp.pop %v1050
    %v1052 = vmul.f32 %v1050, %v1051
    %v1053 = vsub.f32 1.0, %v1052
    %v1054 = vmul.f32 %v1051, %v1053
    %v1055 = vadd.f32 %v1051, %v1054
    %vm1056 = vweird.f32 %v1050
    %vm1057 = vweird.f32 %v1051
    %vm1058 = vmor %vm1056, %vm1057
    %v1059 = vsel %vm1058, %v1051, %v1055
    %v1060 = vand.u32 2147483647, %v1050
    %vm1061 = vcmp.eq.f32.partialorder %v1060, 8.507059e+37
    %v1062 = vand.u32 %v1050, 2147483648
    %v1063 = vor.u32 1.1754944e-38, %v1062
    %v1064 = vsel %vm1061, %v1063, %v1059
    %v1065 = vmul.f32 1.0, %v1064
    %v1067 = vrot.slane %v1040, 1
    %v1069 = vmul.f32 %v1067, %v860
    %v1070 = vmul.f32 %v1040, %v1044
    %v1071 = vadd.f32 %v1069, %v1070
    %v1072 = vtanh.pop %v1071
    %v1073 = vmul.f32 %v1065, %v1072
    %1074 = vst [vmem:[#allocation2 + $0x3] sm:$0x1] %v1073
    %s1075 = scalar_lea.vmem [#allocation3], 4
    %v1076 = vld [vmem:[%s1075] ss:$8 sm:$0xf]
    %v1077 = vld [vmem:[#allocation6] sm:$0xff]
    %v1078 = vld [vmem:[#allocation6 + $0x8] sm:$0xff]
    %v1079 = vld [vmem:[#allocation6 + $0x10] sm:$0xff]
    %v1080 = vld [vmem:[#allocation6 + $0x18] sm:$0xff]
    %v1081 = vld [vmem:[#allocation6 + $0x20] sm:$0xff]
    %v1082 = vld [vmem:[#allocation6 + $0x28] sm:$0xff]
    %v1083 = vld [vmem:[#allocation6 + $0x30] sm:$0xff]
    %v1084 = vld [vmem:[#allocation6 + $0x38] sm:$0xff]
    %v1085 = vld [vmem:[#allocation6 + $0x40] sm:$0xff]
    %v1086 = vld [vmem:[#allocation6 + $0x48] sm:$0xff]
    %v1087 = vld [vmem:[#allocation6 + $0x50] sm:$0xff]
    %v1088 = vld [vmem:[#allocation6 + $0x58] sm:$0xff]
    %v1089 = vld [vmem:[#allocation6 + $0x60] sm:$0xff]
    %v1090 = vld [vmem:[#allocation6 + $0x68] sm:$0xff]
    %v1091 = vld [vmem:[#allocation6 + $0x70] sm:$0xff]
    %v1092 = vld [vmem:[#allocation6 + $0x78] sm:$0xff]
    %v1093 = vld [vmem:[#allocation6 + $0x80] sm:$0xff]
    %v1094 = vld [vmem:[#allocation6 + $0x88] sm:$0xff]
    %v1095 = vld [vmem:[#allocation6 + $0x90] sm:$0xff]
    %v1096 = vld [vmem:[#allocation6 + $0x98] sm:$0xff]
    %v1097 = vld [vmem:[#allocation6 + $0xa0] sm:$0xff]
    %v1098 = vld [vmem:[#allocation6 + $0xa8] sm:$0xff]
    %v1099 = vld [vmem:[#allocation6 + $0xb0] sm:$0xff]
    %v1100 = vld [vmem:[#allocation6 + $0xb8] sm:$0xff]
    %v1101 = vld [vmem:[#allocation6 + $0xc0] sm:$0xff]
    %v1102 = vld [vmem:[#allocation6 + $0xc8] sm:$0xff]
    %v1103 = vld [vmem:[#allocation6 + $0xd0] sm:$0xff]
    %v1104 = vld [vmem:[#allocation6 + $0xd8] sm:$0xff]
    %v1105 = vld [vmem:[#allocation6 + $0xe0] sm:$0xff]
    %v1106 = vld [vmem:[#allocation6 + $0xe8] sm:$0xff]
    %v1107 = vld [vmem:[#allocation6 + $0xf0] sm:$0xff]
    %v1108 = vld [vmem:[#allocation6 + $0xf8] sm:$0xff]
    %v1109 = vld [vmem:[#allocation6 + $0x100] sm:$0xff]
    %v1110 = vld [vmem:[#allocation6 + $0x108] sm:$0xff]
    %v1111 = vld [vmem:[#allocation6 + $0x110] sm:$0xff]
    %v1112 = vld [vmem:[#allocation6 + $0x118] sm:$0xff]
    %v1113 = vld [vmem:[#allocation6 + $0x120] sm:$0xff]
    %v1114 = vld [vmem:[#allocation6 + $0x128] sm:$0xff]
    %v1115 = vld [vmem:[#allocation6 + $0x130] sm:$0xff]
    %v1116 = vld [vmem:[#allocation6 + $0x138] sm:$0xff]
    %v1117 = vld [vmem:[#allocation6 + $0x140] sm:$0xff]
    %v1118 = vld [vmem:[#allocation6 + $0x148] sm:$0xff]
    %v1119 = vld [vmem:[#allocation6 + $0x150] sm:$0xff]
    %v1120 = vld [vmem:[#allocation6 + $0x158] sm:$0xff]
    %v1121 = vld [vmem:[#allocation6 + $0x160] sm:$0xff]
    %v1122 = vld [vmem:[#allocation6 + $0x168] sm:$0xff]
    %v1123 = vld [vmem:[#allocation6 + $0x170] sm:$0xff]
    %v1124 = vld [vmem:[#allocation6 + $0x178] sm:$0xff]
    %v1125 = vld [vmem:[#allocation6 + $0x180] sm:$0xff]
    %v1126 = vld [vmem:[#allocation6 + $0x188] sm:$0xff]
    %v1127 = vld [vmem:[#allocation6 + $0x190] sm:$0xff]
    %v1128 = vld [vmem:[#allocation6 + $0x198] sm:$0xff]
    %v1129 = vld [vmem:[#allocation6 + $0x1a0] sm:$0xff]
    %v1130 = vld [vmem:[#allocation6 + $0x1a8] sm:$0xff]
    %v1131 = vld [vmem:[#allocation6 + $0x1b0] sm:$0xff]
    %v1132 = vld [vmem:[#allocation6 + $0x1b8] sm:$0xff]
    %v1133 = vld [vmem:[#allocation6 + $0x1c0] sm:$0xff]
    %v1134 = vld [vmem:[#allocation6 + $0x1c8] sm:$0xff]
    %v1135 = vld [vmem:[#allocation6 + $0x1d0] sm:$0xff]
    %v1136 = vld [vmem:[#allocation6 + $0x1d8] sm:$0xff]
    %v1137 = vld [vmem:[#allocation6 + $0x1e0] sm:$0xff]
    %v1138 = vld [vmem:[#allocation6 + $0x1e8] sm:$0xff]
    %v1139 = vld [vmem:[#allocation6 + $0x1f0] sm:$0xff]
    %v1140 = vld [vmem:[#allocation6 + $0x1f8] sm:$0xff]
    %1141 = vmatpush.msra.mxu0 %v1137
    %1142 = vmatpush.msra.mxu0 %v1133
    %1143 = vmatpush.msra.mxu0 %v1129
    %1144 = vmatpush.msra.mxu0 %v1125
    %1145 = vmatpush.msra.mxu0 %v1121
    %1146 = vmatpush.msra.mxu0 %v1117
    %1147 = vmatpush.msra.mxu0 %v1113
    %1148 = vmatpush.msra.mxu0 %v1109
    %1149 = vmatpush.msra.mxu0 %v1105
    %1150 = vmatpush.msra.mxu0 %v1101
    %1151 = vmatpush.msra.mxu0 %v1097
    %1152 = vmatpush.msra.mxu0 %v1093
    %1153 = vmatpush.msra.mxu0 %v1089
    %1154 = vmatpush.msra.mxu0 %v1085
    %1155 = vmatpush.msra.mxu0 %v1081
    %1156 = vmatpush.msra.mxu0 %v1077
    %1157 = vmatmul.f32.gmra.mxu0 %v1073
    %v1158 = vpop.f32.mrf.mxu0
    %v1159 = vadd.f32 0.0, %v1158
    %1160 = vdwg.mxu0
    %1161 = vmatpush.msra.mxu0 %v1138
    %1162 = vmatpush.msra.mxu0 %v1134
    %1163 = vmatpush.msra.mxu0 %v1130
    %1164 = vmatpush.msra.mxu0 %v1126
    %1165 = vmatpush.msra.mxu0 %v1122
    %1166 = vmatpush.msra.mxu0 %v1118
    %1167 = vmatpush.msra.mxu0 %v1114
    %1168 = vmatpush.msra.mxu0 %v1110
    %1169 = vmatpush.msra.mxu0 %v1106
    %1170 = vmatpush.msra.mxu0 %v1102
    %1171 = vmatpush.msra.mxu0 %v1098
    %1172 = vmatpush.msra.mxu0 %v1094
    %1173 = vmatpush.msra.mxu0 %v1090
    %1174 = vmatpush.msra.mxu0 %v1086
    %1175 = vmatpush.msra.mxu0 %v1082
    %1176 = vmatpush.msra.mxu0 %v1078
    %1177 = vmatmul.f32.gmra.mxu0 %v1073
    %v1178 = vpop.f32.mrf.mxu0
    %v1179 = vadd.f32 0.0, %v1178
    %1180 = vdwg.mxu0
    %1181 = vmatpush.msra.mxu0 %v1139
    %1182 = vmatpush.msra.mxu0 %v1135
    %1183 = vmatpush.msra.mxu0 %v1131
    %1184 = vmatpush.msra.mxu0 %v1127
    %1185 = vmatpush.msra.mxu0 %v1123
    %1186 = vmatpush.msra.mxu0 %v1119
    %1187 = vmatpush.msra.mxu0 %v1115
    %1188 = vmatpush.msra.mxu0 %v1111
    %1189 = vmatpush.msra.mxu0 %v1107
    %1190 = vmatpush.msra.mxu0 %v1103
    %1191 = vmatpush.msra.mxu0 %v1099
    %1192 = vmatpush.msra.mxu0 %v1095
    %1193 = vmatpush.msra.mxu0 %v1091
    %1194 = vmatpush.msra.mxu0 %v1087
    %1195 = vmatpush.msra.mxu0 %v1083
    %1196 = vmatpush.msra.mxu0 %v1079
    %1197 = vmatmul.f32.gmra.mxu0 %v1073
    %v1198 = vpop.f32.mrf.mxu0
    %v1199 = vadd.f32 0.0, %v1198
    %1200 = vdwg.mxu0
    %1201 = vmatpush.msra.mxu0 %v1140
    %1202 = vmatpush.msra.mxu0 %v1136
    %1203 = vmatpush.msra.mxu0 %v1132
    %1204 = vmatpush.msra.mxu0 %v1128
    %1205 = vmatpush.msra.mxu0 %v1124
    %1206 = vmatpush.msra.mxu0 %v1120
    %1207 = vmatpush.msra.mxu0 %v1116
    %1208 = vmatpush.msra.mxu0 %v1112
    %1209 = vmatpush.msra.mxu0 %v1108
    %1210 = vmatpush.msra.mxu0 %v1104
    %1211 = vmatpush.msra.mxu0 %v1100
    %1212 = vmatpush.msra.mxu0 %v1096
    %1213 = vmatpush.msra.mxu0 %v1092
    %1214 = vmatpush.msra.mxu0 %v1088
    %1215 = vmatpush.msra.mxu0 %v1084
    %1216 = vmatpush.msra.mxu0 %v1080
    %1217 = vmatmul.f32.gmra.mxu0 %v1073
    %v1218 = vpop.f32.mrf.mxu0
    %v1219 = vadd.f32 0.0, %v1218
    %1220 = vdwg.mxu0
    %v1225 = vrot.slane %v1179, 7
    %v1226 = vrot.slane %v1199, 6
    %v1227 = vrot.slane %v1219, 5
    %v1228 = vsel %vm381, %v1159, %v1225
    %v1229 = vsel %vm383, %v1226, %v1227
    %v1230 = vsel %vm385, %v1228, %v1229
    %v1232 = vadd.f32 %v1076, %v1230
    %v1233 = vxor.u32 %v1232, 2147483648
    %v1234 = vmul.f32 %v1233, 1.442695
    %v1235 = vpow.pop %v1234
    %v1236 = vadd.f32 %v1235, 1.0
    %v1237 = vrcp.pop %v1236
    %v1238 = vmul.f32 %v1236, %v1237
    %v1239 = vsub.f32 1.0, %v1238
    %v1240 = vmul.f32 %v1237, %v1239
    %v1241 = vadd.f32 %v1237, %v1240
    %vm1242 = vweird.f32 %v1236
    %vm1243 = vweird.f32 %v1237
    %vm1244 = vmor %vm1242, %vm1243
    %v1245 = vsel %vm1244, %v1237, %v1241
    %v1246 = vand.u32 2147483647, %v1236
    %vm1247 = vcmp.eq.f32.partialorder %v1246, 8.507059e+37
    %v1248 = vand.u32 %v1236, 2147483648
    %v1249 = vor.u32 1.1754944e-38, %v1248
    %v1250 = vsel %vm1247, %v1249, %v1245
    %v1251 = vmul.f32 1.0, %v1250
    %v1253 = vrot.slane %v1232, 2
    %v1255 = vtanh.pop %v1253
    %v1256 = vrot.slane %v1232, 3
    %v1258 = vxor.u32 %v1256, 2147483648
    %v1259 = vmul.f32 %v1258, 1.442695
    %v1260 = vpow.pop %v1259
    %v1261 = vadd.f32 %v1260, 1.0
    %v1262 = vrcp.pop %v1261
    %v1263 = vmul.f32 %v1261, %v1262
    %v1264 = vsub.f32 1.0, %v1263
    %v1265 = vmul.f32 %v1262, %v1264
    %v1266 = vadd.f32 %v1262, %v1265
    %vm1267 = vweird.f32 %v1261
    %vm1268 = vweird.f32 %v1262
    %vm1269 = vmor %vm1267, %vm1268
    %v1270 = vsel %vm1269, %v1262, %v1266
    %v1271 = vand.u32 2147483647, %v1261
    %vm1272 = vcmp.eq.f32.partialorder %v1271, 8.507059e+37
    %v1273 = vand.u32 %v1261, 2147483648
    %v1274 = vor.u32 1.1754944e-38, %v1273
    %v1275 = vsel %vm1272, %v1274, %v1270
    %v1276 = vmul.f32 1.0, %v1275
    %v1278 = vrot.slane %v1251, 1
    %v1280 = vmul.f32 %v1278, %v1071
    %v1281 = vmul.f32 %v1251, %v1255
    %v1282 = vadd.f32 %v1280, %v1281
    %v1283 = vtanh.pop %v1282
    %v1284 = vmul.f32 %v1276, %v1283
    %1285 = vst [vmem:[#allocation2 + $0x4] sm:$0x1] %v1284
    %s1286 = scalar_lea.vmem [#allocation3], 5
    %v1287 = vld [vmem:[%s1286] ss:$8 sm:$0xf]
    %v1288 = vld [vmem:[#allocation6] sm:$0xff]
    %v1289 = vld [vmem:[#allocation6 + $0x8] sm:$0xff]
    %v1290 = vld [vmem:[#allocation6 + $0x10] sm:$0xff]
    %v1291 = vld [vmem:[#allocation6 + $0x18] sm:$0xff]
    %v1292 = vld [vmem:[#allocation6 + $0x20] sm:$0xff]
    %v1293 = vld [vmem:[#allocation6 + $0x28] sm:$0xff]
    %v1294 = vld [vmem:[#allocation6 + $0x30] sm:$0xff]
    %v1295 = vld [vmem:[#allocation6 + $0x38] sm:$0xff]
    %v1296 = vld [vmem:[#allocation6 + $0x40] sm:$0xff]
    %v1297 = vld [vmem:[#allocation6 + $0x48] sm:$0xff]
    %v1298 = vld [vmem:[#allocation6 + $0x50] sm:$0xff]
    %v1299 = vld [vmem:[#allocation6 + $0x58] sm:$0xff]
    %v1300 = vld [vmem:[#allocation6 + $0x60] sm:$0xff]
    %v1301 = vld [vmem:[#allocation6 + $0x68] sm:$0xff]
    %v1302 = vld [vmem:[#allocation6 + $0x70] sm:$0xff]
    %v1303 = vld [vmem:[#allocation6 + $0x78] sm:$0xff]
    %v1304 = vld [vmem:[#allocation6 + $0x80] sm:$0xff]
    %v1305 = vld [vmem:[#allocation6 + $0x88] sm:$0xff]
    %v1306 = vld [vmem:[#allocation6 + $0x90] sm:$0xff]
    %v1307 = vld [vmem:[#allocation6 + $0x98] sm:$0xff]
    %v1308 = vld [vmem:[#allocation6 + $0xa0] sm:$0xff]
    %v1309 = vld [vmem:[#allocation6 + $0xa8] sm:$0xff]
    %v1310 = vld [vmem:[#allocation6 + $0xb0] sm:$0xff]
    %v1311 = vld [vmem:[#allocation6 + $0xb8] sm:$0xff]
    %v1312 = vld [vmem:[#allocation6 + $0xc0] sm:$0xff]
    %v1313 = vld [vmem:[#allocation6 + $0xc8] sm:$0xff]
    %v1314 = vld [vmem:[#allocation6 + $0xd0] sm:$0xff]
    %v1315 = vld [vmem:[#allocation6 + $0xd8] sm:$0xff]
    %v1316 = vld [vmem:[#allocation6 + $0xe0] sm:$0xff]
    %v1317 = vld [vmem:[#allocation6 + $0xe8] sm:$0xff]
    %v1318 = vld [vmem:[#allocation6 + $0xf0] sm:$0xff]
    %v1319 = vld [vmem:[#allocation6 + $0xf8] sm:$0xff]
    %v1320 = vld [vmem:[#allocation6 + $0x100] sm:$0xff]
    %v1321 = vld [vmem:[#allocation6 + $0x108] sm:$0xff]
    %v1322 = vld [vmem:[#allocation6 + $0x110] sm:$0xff]
    %v1323 = vld [vmem:[#allocation6 + $0x118] sm:$0xff]
    %v1324 = vld [vmem:[#allocation6 + $0x120] sm:$0xff]
    %v1325 = vld [vmem:[#allocation6 + $0x128] sm:$0xff]
    %v1326 = vld [vmem:[#allocation6 + $0x130] sm:$0xff]
    %v1327 = vld [vmem:[#allocation6 + $0x138] sm:$0xff]
    %v1328 = vld [vmem:[#allocation6 + $0x140] sm:$0xff]
    %v1329 = vld [vmem:[#allocation6 + $0x148] sm:$0xff]
    %v1330 = vld [vmem:[#allocation6 + $0x150] sm:$0xff]
    %v1331 = vld [vmem:[#allocation6 + $0x158] sm:$0xff]
    %v1332 = vld [vmem:[#allocation6 + $0x160] sm:$0xff]
    %v1333 = vld [vmem:[#allocation6 + $0x168] sm:$0xff]
    %v1334 = vld [vmem:[#allocation6 + $0x170] sm:$0xff]
    %v1335 = vld [vmem:[#allocation6 + $0x178] sm:$0xff]
    %v1336 = vld [vmem:[#allocation6 + $0x180] sm:$0xff]
    %v1337 = vld [vmem:[#allocation6 + $0x188] sm:$0xff]
    %v1338 = vld [vmem:[#allocation6 + $0x190] sm:$0xff]
    %v1339 = vld [vmem:[#allocation6 + $0x198] sm:$0xff]
    %v1340 = vld [vmem:[#allocation6 + $0x1a0] sm:$0xff]
    %v1341 = vld [vmem:[#allocation6 + $0x1a8] sm:$0xff]
    %v1342 = vld [vmem:[#allocation6 + $0x1b0] sm:$0xff]
    %v1343 = vld [vmem:[#allocation6 + $0x1b8] sm:$0xff]
    %v1344 = vld [vmem:[#allocation6 + $0x1c0] sm:$0xff]
    %v1345 = vld [vmem:[#allocation6 + $0x1c8] sm:$0xff]
    %v1346 = vld [vmem:[#allocation6 + $0x1d0] sm:$0xff]
    %v1347 = vld [vmem:[#allocation6 + $0x1d8] sm:$0xff]
    %v1348 = vld [vmem:[#allocation6 + $0x1e0] sm:$0xff]
    %v1349 = vld [vmem:[#allocation6 + $0x1e8] sm:$0xff]
    %v1350 = vld [vmem:[#allocation6 + $0x1f0] sm:$0xff]
    %v1351 = vld [vmem:[#allocation6 + $0x1f8] sm:$0xff]
    %1352 = vmatpush.msra.mxu0 %v1348
    %1353 = vmatpush.msra.mxu0 %v1344
    %1354 = vmatpush.msra.mxu0 %v1340
    %1355 = vmatpush.msra.mxu0 %v1336
    %1356 = vmatpush.msra.mxu0 %v1332
    %1357 = vmatpush.msra.mxu0 %v1328
    %1358 = vmatpush.msra.mxu0 %v1324
    %1359 = vmatpush.msra.mxu0 %v1320
    %1360 = vmatpush.msra.mxu0 %v1316
    %1361 = vmatpush.msra.mxu0 %v1312
    %1362 = vmatpush.msra.mxu0 %v1308
    %1363 = vmatpush.msra.mxu0 %v1304
    %1364 = vmatpush.msra.mxu0 %v1300
    %1365 = vmatpush.msra.mxu0 %v1296
    %1366 = vmatpush.msra.mxu0 %v1292
    %1367 = vmatpush.msra.mxu0 %v1288
    %1368 = vmatmul.f32.gmra.mxu0 %v1284
    %v1369 = vpop.f32.mrf.mxu0
    %v1370 = vadd.f32 0.0, %v1369
    %1371 = vdwg.mxu0
    %1372 = vmatpush.msra.mxu0 %v1349
    %1373 = vmatpush.msra.mxu0 %v1345
    %1374 = vmatpush.msra.mxu0 %v1341
    %1375 = vmatpush.msra.mxu0 %v1337
    %1376 = vmatpush.msra.mxu0 %v1333
    %1377 = vmatpush.msra.mxu0 %v1329
    %1378 = vmatpush.msra.mxu0 %v1325
    %1379 = vmatpush.msra.mxu0 %v1321
    %1380 = vmatpush.msra.mxu0 %v1317
    %1381 = vmatpush.msra.mxu0 %v1313
    %1382 = vmatpush.msra.mxu0 %v1309
    %1383 = vmatpush.msra.mxu0 %v1305
    %1384 = vmatpush.msra.mxu0 %v1301
    %1385 = vmatpush.msra.mxu0 %v1297
    %1386 = vmatpush.msra.mxu0 %v1293
    %1387 = vmatpush.msra.mxu0 %v1289
    %1388 = vmatmul.f32.gmra.mxu0 %v1284
    %v1389 = vpop.f32.mrf.mxu0
    %v1390 = vadd.f32 0.0, %v1389
    %1391 = vdwg.mxu0
    %1392 = vmatpush.msra.mxu0 %v1350
    %1393 = vmatpush.msra.mxu0 %v1346
    %1394 = vmatpush.msra.mxu0 %v1342
    %1395 = vmatpush.msra.mxu0 %v1338
    %1396 = vmatpush.msra.mxu0 %v1334
    %1397 = vmatpush.msra.mxu0 %v1330
    %1398 = vmatpush.msra.mxu0 %v1326
    %1399 = vmatpush.msra.mxu0 %v1322
    %1400 = vmatpush.msra.mxu0 %v1318
    %1401 = vmatpush.msra.mxu0 %v1314
    %1402 = vmatpush.msra.mxu0 %v1310
    %1403 = vmatpush.msra.mxu0 %v1306
    %1404 = vmatpush.msra.mxu0 %v1302
    %1405 = vmatpush.msra.mxu0 %v1298
    %1406 = vmatpush.msra.mxu0 %v1294
    %1407 = vmatpush.msra.mxu0 %v1290
    %1408 = vmatmul.f32.gmra.mxu0 %v1284
    %v1409 = vpop.f32.mrf.mxu0
    %v1410 = vadd.f32 0.0, %v1409
    %1411 = vdwg.mxu0
    %1412 = vmatpush.msra.mxu0 %v1351
    %1413 = vmatpush.msra.mxu0 %v1347
    %1414 = vmatpush.msra.mxu0 %v1343
    %1415 = vmatpush.msra.mxu0 %v1339
    %1416 = vmatpush.msra.mxu0 %v1335
    %1417 = vmatpush.msra.mxu0 %v1331
    %1418 = vmatpush.msra.mxu0 %v1327
    %1419 = vmatpush.msra.mxu0 %v1323
    %1420 = vmatpush.msra.mxu0 %v1319
    %1421 = vmatpush.msra.mxu0 %v1315
    %1422 = vmatpush.msra.mxu0 %v1311
    %1423 = vmatpush.msra.mxu0 %v1307
    %1424 = vmatpush.msra.mxu0 %v1303
    %1425 = vmatpush.msra.mxu0 %v1299
    %1426 = vmatpush.msra.mxu0 %v1295
    %1427 = vmatpush.msra.mxu0 %v1291
    %1428 = vmatmul.f32.gmra.mxu0 %v1284
    %v1429 = vpop.f32.mrf.mxu0
    %v1430 = vadd.f32 0.0, %v1429
    %1431 = vdwg.mxu0
    %v1436 = vrot.slane %v1390, 7
    %v1437 = vrot.slane %v1410, 6
    %v1438 = vrot.slane %v1430, 5
    %v1439 = vsel %vm381, %v1370, %v1436
    %v1440 = vsel %vm383, %v1437, %v1438
    %v1441 = vsel %vm385, %v1439, %v1440
    %v1443 = vadd.f32 %v1287, %v1441
    %v1444 = vxor.u32 %v1443, 2147483648
    %v1445 = vmul.f32 %v1444, 1.442695
    %v1446 = vpow.pop %v1445
    %v1447 = vadd.f32 %v1446, 1.0
    %v1448 = vrcp.pop %v1447
    %v1449 = vmul.f32 %v1447, %v1448
    %v1450 = vsub.f32 1.0, %v1449
    %v1451 = vmul.f32 %v1448, %v1450
    %v1452 = vadd.f32 %v1448, %v1451
    %vm1453 = vweird.f32 %v1447
    %vm1454 = vweird.f32 %v1448
    %vm1455 = vmor %vm1453, %vm1454
    %v1456 = vsel %vm1455, %v1448, %v1452
    %v1457 = vand.u32 2147483647, %v1447
    %vm1458 = vcmp.eq.f32.partialorder %v1457, 8.507059e+37
    %v1459 = vand.u32 %v1447, 2147483648
    %v1460 = vor.u32 1.1754944e-38, %v1459
    %v1461 = vsel %vm1458, %v1460, %v1456
    %v1462 = vmul.f32 1.0, %v1461
    %v1464 = vrot.slane %v1443, 2
    %v1466 = vtanh.pop %v1464
    %v1467 = vrot.slane %v1443, 3
    %v1469 = vxor.u32 %v1467, 2147483648
    %v1470 = vmul.f32 %v1469, 1.442695
    %v1471 = vpow.pop %v1470
    %v1472 = vadd.f32 %v1471, 1.0
    %v1473 = vrcp.pop %v1472
    %v1474 = vmul.f32 %v1472, %v1473
    %v1475 = vsub.f32 1.0, %v1474
    %v1476 = vmul.f32 %v1473, %v1475
    %v1477 = vadd.f32 %v1473, %v1476
    %vm1478 = vweird.f32 %v1472
    %vm1479 = vweird.f32 %v1473
    %vm1480 = vmor %vm1478, %vm1479
    %v1481 = vsel %vm1480, %v1473, %v1477
    %v1482 = vand.u32 2147483647, %v1472
    %vm1483 = vcmp.eq.f32.partialorder %v1482, 8.507059e+37
    %v1484 = vand.u32 %v1472, 2147483648
    %v1485 = vor.u32 1.1754944e-38, %v1484
    %v1486 = vsel %vm1483, %v1485, %v1481
    %v1487 = vmul.f32 1.0, %v1486
    %v1489 = vrot.slane %v1462, 1
    %v1491 = vmul.f32 %v1489, %v1282
    %v1492 = vmul.f32 %v1462, %v1466
    %v1493 = vadd.f32 %v1491, %v1492
    %v1494 = vtanh.pop %v1493
    %v1495 = vmul.f32 %v1487, %v1494
    %1496 = vst [vmem:[#allocation2 + $0x5] sm:$0x1] %v1495
    %s1497 = scalar_lea.vmem [#allocation3], 6
    %v1498 = vld [vmem:[%s1497] ss:$8 sm:$0xf]
    %v1499 = vld [vmem:[#allocation6] sm:$0xff]
    %v1500 = vld [vmem:[#allocation6 + $0x8] sm:$0xff]
    %v1501 = vld [vmem:[#allocation6 + $0x10] sm:$0xff]
    %v1502 = vld [vmem:[#allocation6 + $0x18] sm:$0xff]
    %v1503 = vld [vmem:[#allocation6 + $0x20] sm:$0xff]
    %v1504 = vld [vmem:[#allocation6 + $0x28] sm:$0xff]
    %v1505 = vld [vmem:[#allocation6 + $0x30] sm:$0xff]
    %v1506 = vld [vmem:[#allocation6 + $0x38] sm:$0xff]
    %v1507 = vld [vmem:[#allocation6 + $0x40] sm:$0xff]
    %v1508 = vld [vmem:[#allocation6 + $0x48] sm:$0xff]
    %v1509 = vld [vmem:[#allocation6 + $0x50] sm:$0xff]
    %v1510 = vld [vmem:[#allocation6 + $0x58] sm:$0xff]
    %v1511 = vld [vmem:[#allocation6 + $0x60] sm:$0xff]
    %v1512 = vld [vmem:[#allocation6 + $0x68] sm:$0xff]
    %v1513 = vld [vmem:[#allocation6 + $0x70] sm:$0xff]
    %v1514 = vld [vmem:[#allocation6 + $0x78] sm:$0xff]
    %v1515 = vld [vmem:[#allocation6 + $0x80] sm:$0xff]
    %v1516 = vld [vmem:[#allocation6 + $0x88] sm:$0xff]
    %v1517 = vld [vmem:[#allocation6 + $0x90] sm:$0xff]
    %v1518 = vld [vmem:[#allocation6 + $0x98] sm:$0xff]
    %v1519 = vld [vmem:[#allocation6 + $0xa0] sm:$0xff]
    %v1520 = vld [vmem:[#allocation6 + $0xa8] sm:$0xff]
    %v1521 = vld [vmem:[#allocation6 + $0xb0] sm:$0xff]
    %v1522 = vld [vmem:[#allocation6 + $0xb8] sm:$0xff]
    %v1523 = vld [vmem:[#allocation6 + $0xc0] sm:$0xff]
    %v1524 = vld [vmem:[#allocation6 + $0xc8] sm:$0xff]
    %v1525 = vld [vmem:[#allocation6 + $0xd0] sm:$0xff]
    %v1526 = vld [vmem:[#allocation6 + $0xd8] sm:$0xff]
    %v1527 = vld [vmem:[#allocation6 + $0xe0] sm:$0xff]
    %v1528 = vld [vmem:[#allocation6 + $0xe8] sm:$0xff]
    %v1529 = vld [vmem:[#allocation6 + $0xf0] sm:$0xff]
    %v1530 = vld [vmem:[#allocation6 + $0xf8] sm:$0xff]
    %v1531 = vld [vmem:[#allocation6 + $0x100] sm:$0xff]
    %v1532 = vld [vmem:[#allocation6 + $0x108] sm:$0xff]
    %v1533 = vld [vmem:[#allocation6 + $0x110] sm:$0xff]
    %v1534 = vld [vmem:[#allocation6 + $0x118] sm:$0xff]
    %v1535 = vld [vmem:[#allocation6 + $0x120] sm:$0xff]
    %v1536 = vld [vmem:[#allocation6 + $0x128] sm:$0xff]
    %v1537 = vld [vmem:[#allocation6 + $0x130] sm:$0xff]
    %v1538 = vld [vmem:[#allocation6 + $0x138] sm:$0xff]
    %v1539 = vld [vmem:[#allocation6 + $0x140] sm:$0xff]
    %v1540 = vld [vmem:[#allocation6 + $0x148] sm:$0xff]
    %v1541 = vld [vmem:[#allocation6 + $0x150] sm:$0xff]
    %v1542 = vld [vmem:[#allocation6 + $0x158] sm:$0xff]
    %v1543 = vld [vmem:[#allocation6 + $0x160] sm:$0xff]
    %v1544 = vld [vmem:[#allocation6 + $0x168] sm:$0xff]
    %v1545 = vld [vmem:[#allocation6 + $0x170] sm:$0xff]
    %v1546 = vld [vmem:[#allocation6 + $0x178] sm:$0xff]
    %v1547 = vld [vmem:[#allocation6 + $0x180] sm:$0xff]
    %v1548 = vld [vmem:[#allocation6 + $0x188] sm:$0xff]
    %v1549 = vld [vmem:[#allocation6 + $0x190] sm:$0xff]
    %v1550 = vld [vmem:[#allocation6 + $0x198] sm:$0xff]
    %v1551 = vld [vmem:[#allocation6 + $0x1a0] sm:$0xff]
    %v1552 = vld [vmem:[#allocation6 + $0x1a8] sm:$0xff]
    %v1553 = vld [vmem:[#allocation6 + $0x1b0] sm:$0xff]
    %v1554 = vld [vmem:[#allocation6 + $0x1b8] sm:$0xff]
    %v1555 = vld [vmem:[#allocation6 + $0x1c0] sm:$0xff]
    %v1556 = vld [vmem:[#allocation6 + $0x1c8] sm:$0xff]
    %v1557 = vld [vmem:[#allocation6 + $0x1d0] sm:$0xff]
    %v1558 = vld [vmem:[#allocation6 + $0x1d8] sm:$0xff]
    %v1559 = vld [vmem:[#allocation6 + $0x1e0] sm:$0xff]
    %v1560 = vld [vmem:[#allocation6 + $0x1e8] sm:$0xff]
    %v1561 = vld [vmem:[#allocation6 + $0x1f0] sm:$0xff]
    %v1562 = vld [vmem:[#allocation6 + $0x1f8] sm:$0xff]
    %1563 = vmatpush.msra.mxu0 %v1559
    %1564 = vmatpush.msra.mxu0 %v1555
    %1565 = vmatpush.msra.mxu0 %v1551
    %1566 = vmatpush.msra.mxu0 %v1547
    %1567 = vmatpush.msra.mxu0 %v1543
    %1568 = vmatpush.msra.mxu0 %v1539
    %1569 = vmatpush.msra.mxu0 %v1535
    %1570 = vmatpush.msra.mxu0 %v1531
    %1571 = vmatpush.msra.mxu0 %v1527
    %1572 = vmatpush.msra.mxu0 %v1523
    %1573 = vmatpush.msra.mxu0 %v1519
    %1574 = vmatpush.msra.mxu0 %v1515
    %1575 = vmatpush.msra.mxu0 %v1511
    %1576 = vmatpush.msra.mxu0 %v1507
    %1577 = vmatpush.msra.mxu0 %v1503
    %1578 = vmatpush.msra.mxu0 %v1499
    %1579 = vmatmul.f32.gmra.mxu0 %v1495
    %v1580 = vpop.f32.mrf.mxu0
    %v1581 = vadd.f32 0.0, %v1580
    %1582 = vdwg.mxu0
    %1583 = vmatpush.msra.mxu0 %v1560
    %1584 = vmatpush.msra.mxu0 %v1556
    %1585 = vmatpush.msra.mxu0 %v1552
    %1586 = vmatpush.msra.mxu0 %v1548
    %1587 = vmatpush.msra.mxu0 %v1544
    %1588 = vmatpush.msra.mxu0 %v1540
    %1589 = vmatpush.msra.mxu0 %v1536
    %1590 = vmatpush.msra.mxu0 %v1532
    %1591 = vmatpush.msra.mxu0 %v1528
    %1592 = vmatpush.msra.mxu0 %v1524
    %1593 = vmatpush.msra.mxu0 %v1520
    %1594 = vmatpush.msra.mxu0 %v1516
    %1595 = vmatpush.msra.mxu0 %v1512
    %1596 = vmatpush.msra.mxu0 %v1508
    %1597 = vmatpush.msra.mxu0 %v1504
    %1598 = vmatpush.msra.mxu0 %v1500
    %1599 = vmatmul.f32.gmra.mxu0 %v1495
    %v1600 = vpop.f32.mrf.mxu0
    %v1601 = vadd.f32 0.0, %v1600
    %1602 = vdwg.mxu0
    %1603 = vmatpush.msra.mxu0 %v1561
    %1604 = vmatpush.msra.mxu0 %v1557
    %1605 = vmatpush.msra.mxu0 %v1553
    %1606 = vmatpush.msra.mxu0 %v1549
    %1607 = vmatpush.msra.mxu0 %v1545
    %1608 = vmatpush.msra.mxu0 %v1541
    %1609 = vmatpush.msra.mxu0 %v1537
    %1610 = vmatpush.msra.mxu0 %v1533
    %1611 = vmatpush.msra.mxu0 %v1529
    %1612 = vmatpush.msra.mxu0 %v1525
    %1613 = vmatpush.msra.mxu0 %v1521
    %1614 = vmatpush.msra.mxu0 %v1517
    %1615 = vmatpush.msra.mxu0 %v1513
    %1616 = vmatpush.msra.mxu0 %v1509
    %1617 = vmatpush.msra.mxu0 %v1505
    %1618 = vmatpush.msra.mxu0 %v1501
    %1619 = vmatmul.f32.gmra.mxu0 %v1495
    %v1620 = vpop.f32.mrf.mxu0
    %v1621 = vadd.f32 0.0, %v1620
    %1622 = vdwg.mxu0
    %1623 = vmatpush.msra.mxu0 %v1562
    %1624 = vmatpush.msra.mxu0 %v1558
    %1625 = vmatpush.msra.mxu0 %v1554
    %1626 = vmatpush.msra.mxu0 %v1550
    %1627 = vmatpush.msra.mxu0 %v1546
    %1628 = vmatpush.msra.mxu0 %v1542
    %1629 = vmatpush.msra.mxu0 %v1538
    %1630 = vmatpush.msra.mxu0 %v1534
    %1631 = vmatpush.msra.mxu0 %v1530
    %1632 = vmatpush.msra.mxu0 %v1526
    %1633 = vmatpush.msra.mxu0 %v1522
    %1634 = vmatpush.msra.mxu0 %v1518
    %1635 = vmatpush.msra.mxu0 %v1514
    %1636 = vmatpush.msra.mxu0 %v1510
    %1637 = vmatpush.msra.mxu0 %v1506
    %1638 = vmatpush.msra.mxu0 %v1502
    %1639 = vmatmul.f32.gmra.mxu0 %v1495
    %v1640 = vpop.f32.mrf.mxu0
    %v1641 = vadd.f32 0.0, %v1640
    %1642 = vdwg.mxu0
    %v1647 = vrot.slane %v1601, 7
    %v1648 = vrot.slane %v1621, 6
    %v1649 = vrot.slane %v1641, 5
    %v1650 = vsel %vm381, %v1581, %v1647
    %v1651 = vsel %vm383, %v1648, %v1649
    %v1652 = vsel %vm385, %v1650, %v1651
    %v1654 = vadd.f32 %v1498, %v1652
    %v1655 = vxor.u32 %v1654, 2147483648
    %v1656 = vmul.f32 %v1655, 1.442695
    %v1657 = vpow.pop %v1656
    %v1658 = vadd.f32 %v1657, 1.0
    %v1659 = vrcp.pop %v1658
    %v1660 = vmul.f32 %v1658, %v1659
    %v1661 = vsub.f32 1.0, %v1660
    %v1662 = vmul.f32 %v1659, %v1661
    %v1663 = vadd.f32 %v1659, %v1662
    %vm1664 = vweird.f32 %v1658
    %vm1665 = vweird.f32 %v1659
    %vm1666 = vmor %vm1664, %vm1665
    %v1667 = vsel %vm1666, %v1659, %v1663
    %v1668 = vand.u32 2147483647, %v1658
    %vm1669 = vcmp.eq.f32.partialorder %v1668, 8.507059e+37
    %v1670 = vand.u32 %v1658, 2147483648
    %v1671 = vor.u32 1.1754944e-38, %v1670
    %v1672 = vsel %vm1669, %v1671, %v1667
    %v1673 = vmul.f32 1.0, %v1672
    %v1675 = vrot.slane %v1654, 2
    %v1677 = vtanh.pop %v1675
    %v1678 = vrot.slane %v1654, 3
    %v1680 = vxor.u32 %v1678, 2147483648
    %v1681 = vmul.f32 %v1680, 1.442695
    %v1682 = vpow.pop %v1681
    %v1683 = vadd.f32 %v1682, 1.0
    %v1684 = vrcp.pop %v1683
    %v1685 = vmul.f32 %v1683, %v1684
    %v1686 = vsub.f32 1.0, %v1685
    %v1687 = vmul.f32 %v1684, %v1686
    %v1688 = vadd.f32 %v1684, %v1687
    %vm1689 = vweird.f32 %v1683
    %vm1690 = vweird.f32 %v1684
    %vm1691 = vmor %vm1689, %vm1690
    %v1692 = vsel %vm1691, %v1684, %v1688
    %v1693 = vand.u32 2147483647, %v1683
    %vm1694 = vcmp.eq.f32.partialorder %v1693, 8.507059e+37
    %v1695 = vand.u32 %v1683, 2147483648
    %v1696 = vor.u32 1.1754944e-38, %v1695
    %v1697 = vsel %vm1694, %v1696, %v1692
    %v1698 = vmul.f32 1.0, %v1697
    %v1700 = vrot.slane %v1673, 1
    %v1702 = vmul.f32 %v1700, %v1493
    %v1703 = vmul.f32 %v1673, %v1677
    %v1704 = vadd.f32 %v1702, %v1703
    %v1705 = vtanh.pop %v1704
    %v1706 = vmul.f32 %v1698, %v1705
    %1707 = vst [vmem:[#allocation2 + $0x6] sm:$0x1] %v1706
    %s1708 = scalar_lea.vmem [#allocation3], 7
    %v1709 = vld [vmem:[%s1708] ss:$8 sm:$0xf]
    %v1710 = vld [vmem:[#allocation6] sm:$0xff]
    %v1711 = vld [vmem:[#allocation6 + $0x8] sm:$0xff]
    %v1712 = vld [vmem:[#allocation6 + $0x10] sm:$0xff]
    %v1713 = vld [vmem:[#allocation6 + $0x18] sm:$0xff]
    %v1714 = vld [vmem:[#allocation6 + $0x20] sm:$0xff]
    %v1715 = vld [vmem:[#allocation6 + $0x28] sm:$0xff]
    %v1716 = vld [vmem:[#allocation6 + $0x30] sm:$0xff]
    %v1717 = vld [vmem:[#allocation6 + $0x38] sm:$0xff]
    %v1718 = vld [vmem:[#allocation6 + $0x40] sm:$0xff]
    %v1719 = vld [vmem:[#allocation6 + $0x48] sm:$0xff]
    %v1720 = vld [vmem:[#allocation6 + $0x50] sm:$0xff]
    %v1721 = vld [vmem:[#allocation6 + $0x58] sm:$0xff]
    %v1722 = vld [vmem:[#allocation6 + $0x60] sm:$0xff]
    %v1723 = vld [vmem:[#allocation6 + $0x68] sm:$0xff]
    %v1724 = vld [vmem:[#allocation6 + $0x70] sm:$0xff]
    %v1725 = vld [vmem:[#allocation6 + $0x78] sm:$0xff]
    %v1726 = vld [vmem:[#allocation6 + $0x80] sm:$0xff]
    %v1727 = vld [vmem:[#allocation6 + $0x88] sm:$0xff]
    %v1728 = vld [vmem:[#allocation6 + $0x90] sm:$0xff]
    %v1729 = vld [vmem:[#allocation6 + $0x98] sm:$0xff]
    %v1730 = vld [vmem:[#allocation6 + $0xa0] sm:$0xff]
    %v1731 = vld [vmem:[#allocation6 + $0xa8] sm:$0xff]
    %v1732 = vld [vmem:[#allocation6 + $0xb0] sm:$0xff]
    %v1733 = vld [vmem:[#allocation6 + $0xb8] sm:$0xff]
    %v1734 = vld [vmem:[#allocation6 + $0xc0] sm:$0xff]
    %v1735 = vld [vmem:[#allocation6 + $0xc8] sm:$0xff]
    %v1736 = vld [vmem:[#allocation6 + $0xd0] sm:$0xff]
    %v1737 = vld [vmem:[#allocation6 + $0xd8] sm:$0xff]
    %v1738 = vld [vmem:[#allocation6 + $0xe0] sm:$0xff]
    %v1739 = vld [vmem:[#allocation6 + $0xe8] sm:$0xff]
    %v1740 = vld [vmem:[#allocation6 + $0xf0] sm:$0xff]
    %v1741 = vld [vmem:[#allocation6 + $0xf8] sm:$0xff]
    %v1742 = vld [vmem:[#allocation6 + $0x100] sm:$0xff]
    %v1743 = vld [vmem:[#allocation6 + $0x108] sm:$0xff]
    %v1744 = vld [vmem:[#allocation6 + $0x110] sm:$0xff]
    %v1745 = vld [vmem:[#allocation6 + $0x118] sm:$0xff]
    %v1746 = vld [vmem:[#allocation6 + $0x120] sm:$0xff]
    %v1747 = vld [vmem:[#allocation6 + $0x128] sm:$0xff]
    %v1748 = vld [vmem:[#allocation6 + $0x130] sm:$0xff]
    %v1749 = vld [vmem:[#allocation6 + $0x138] sm:$0xff]
    %v1750 = vld [vmem:[#allocation6 + $0x140] sm:$0xff]
    %v1751 = vld [vmem:[#allocation6 + $0x148] sm:$0xff]
    %v1752 = vld [vmem:[#allocation6 + $0x150] sm:$0xff]
    %v1753 = vld [vmem:[#allocation6 + $0x158] sm:$0xff]
    %v1754 = vld [vmem:[#allocation6 + $0x160] sm:$0xff]
    %v1755 = vld [vmem:[#allocation6 + $0x168] sm:$0xff]
    %v1756 = vld [vmem:[#allocation6 + $0x170] sm:$0xff]
    %v1757 = vld [vmem:[#allocation6 + $0x178] sm:$0xff]
    %v1758 = vld [vmem:[#allocation6 + $0x180] sm:$0xff]
    %v1759 = vld [vmem:[#allocation6 + $0x188] sm:$0xff]
    %v1760 = vld [vmem:[#allocation6 + $0x190] sm:$0xff]
    %v1761 = vld [vmem:[#allocation6 + $0x198] sm:$0xff]
    %v1762 = vld [vmem:[#allocation6 + $0x1a0] sm:$0xff]
    %v1763 = vld [vmem:[#allocation6 + $0x1a8] sm:$0xff]
    %v1764 = vld [vmem:[#allocation6 + $0x1b0] sm:$0xff]
    %v1765 = vld [vmem:[#allocation6 + $0x1b8] sm:$0xff]
    %v1766 = vld [vmem:[#allocation6 + $0x1c0] sm:$0xff]
    %v1767 = vld [vmem:[#allocation6 + $0x1c8] sm:$0xff]
    %v1768 = vld [vmem:[#allocation6 + $0x1d0] sm:$0xff]
    %v1769 = vld [vmem:[#allocation6 + $0x1d8] sm:$0xff]
    %v1770 = vld [vmem:[#allocation6 + $0x1e0] sm:$0xff]
    %v1771 = vld [vmem:[#allocation6 + $0x1e8] sm:$0xff]
    %v1772 = vld [vmem:[#allocation6 + $0x1f0] sm:$0xff]
    %v1773 = vld [vmem:[#allocation6 + $0x1f8] sm:$0xff]
    %1774 = vmatpush.msra.mxu0 %v1770
    %1775 = vmatpush.msra.mxu0 %v1766
    %1776 = vmatpush.msra.mxu0 %v1762
    %1777 = vmatpush.msra.mxu0 %v1758
    %1778 = vmatpush.msra.mxu0 %v1754
    %1779 = vmatpush.msra.mxu0 %v1750
    %1780 = vmatpush.msra.mxu0 %v1746
    %1781 = vmatpush.msra.mxu0 %v1742
    %1782 = vmatpush.msra.mxu0 %v1738
    %1783 = vmatpush.msra.mxu0 %v1734
    %1784 = vmatpush.msra.mxu0 %v1730
    %1785 = vmatpush.msra.mxu0 %v1726
    %1786 = vmatpush.msra.mxu0 %v1722
    %1787 = vmatpush.msra.mxu0 %v1718
    %1788 = vmatpush.msra.mxu0 %v1714
    %1789 = vmatpush.msra.mxu0 %v1710
    %1790 = vmatmul.f32.gmra.mxu0 %v1706
    %v1791 = vpop.f32.mrf.mxu0
    %v1792 = vadd.f32 0.0, %v1791
    %1793 = vdwg.mxu0
    %1794 = vmatpush.msra.mxu0 %v1771
    %1795 = vmatpush.msra.mxu0 %v1767
    %1796 = vmatpush.msra.mxu0 %v1763
    %1797 = vmatpush.msra.mxu0 %v1759
    %1798 = vmatpush.msra.mxu0 %v1755
    %1799 = vmatpush.msra.mxu0 %v1751
    %1800 = vmatpush.msra.mxu0 %v1747
    %1801 = vmatpush.msra.mxu0 %v1743
    %1802 = vmatpush.msra.mxu0 %v1739
    %1803 = vmatpush.msra.mxu0 %v1735
    %1804 = vmatpush.msra.mxu0 %v1731
    %1805 = vmatpush.msra.mxu0 %v1727
    %1806 = vmatpush.msra.mxu0 %v1723
    %1807 = vmatpush.msra.mxu0 %v1719
    %1808 = vmatpush.msra.mxu0 %v1715
    %1809 = vmatpush.msra.mxu0 %v1711
    %1810 = vmatmul.f32.gmra.mxu0 %v1706
    %v1811 = vpop.f32.mrf.mxu0
    %v1812 = vadd.f32 0.0, %v1811
    %1813 = vdwg.mxu0
    %1814 = vmatpush.msra.mxu0 %v1772
    %1815 = vmatpush.msra.mxu0 %v1768
    %1816 = vmatpush.msra.mxu0 %v1764
    %1817 = vmatpush.msra.mxu0 %v1760
    %1818 = vmatpush.msra.mxu0 %v1756
    %1819 = vmatpush.msra.mxu0 %v1752
    %1820 = vmatpush.msra.mxu0 %v1748
    %1821 = vmatpush.msra.mxu0 %v1744
    %1822 = vmatpush.msra.mxu0 %v1740
    %1823 = vmatpush.msra.mxu0 %v1736
    %1824 = vmatpush.msra.mxu0 %v1732
    %1825 = vmatpush.msra.mxu0 %v1728
    %1826 = vmatpush.msra.mxu0 %v1724
    %1827 = vmatpush.msra.mxu0 %v1720
    %1828 = vmatpush.msra.mxu0 %v1716
    %1829 = vmatpush.msra.mxu0 %v1712
    %1830 = vmatmul.f32.gmra.mxu0 %v1706
    %v1831 = vpop.f32.mrf.mxu0
    %v1832 = vadd.f32 0.0, %v1831
    %1833 = vdwg.mxu0
    %1834 = vmatpush.msra.mxu0 %v1773
    %1835 = vmatpush.msra.mxu0 %v1769
    %1836 = vmatpush.msra.mxu0 %v1765
    %1837 = vmatpush.msra.mxu0 %v1761
    %1838 = vmatpush.msra.mxu0 %v1757
    %1839 = vmatpush.msra.mxu0 %v1753
    %1840 = vmatpush.msra.mxu0 %v1749
    %1841 = vmatpush.msra.mxu0 %v1745
    %1842 = vmatpush.msra.mxu0 %v1741
    %1843 = vmatpush.msra.mxu0 %v1737
    %1844 = vmatpush.msra.mxu0 %v1733
    %1845 = vmatpush.msra.mxu0 %v1729
    %1846 = vmatpush.msra.mxu0 %v1725
    %1847 = vmatpush.msra.mxu0 %v1721
    %1848 = vmatpush.msra.mxu0 %v1717
    %1849 = vmatpush.msra.mxu0 %v1713
    %1850 = vmatmul.f32.gmra.mxu0 %v1706
    %v1851 = vpop.f32.mrf.mxu0
    %v1852 = vadd.f32 0.0, %v1851
    %1853 = vdwg.mxu0
    %v1858 = vrot.slane %v1812, 7
    %v1859 = vrot.slane %v1832, 6
    %v1860 = vrot.slane %v1852, 5
    %v1861 = vsel %vm381, %v1792, %v1858
    %v1862 = vsel %vm383, %v1859, %v1860
    %v1863 = vsel %vm385, %v1861, %v1862
    %v1865 = vadd.f32 %v1709, %v1863
    %v1866 = vxor.u32 %v1865, 2147483648
    %v1867 = vmul.f32 %v1866, 1.442695
    %v1868 = vpow.pop %v1867
    %v1869 = vadd.f32 %v1868, 1.0
    %v1870 = vrcp.pop %v1869
    %v1871 = vmul.f32 %v1869, %v1870
    %v1872 = vsub.f32 1.0, %v1871
    %v1873 = vmul.f32 %v1870, %v1872
    %v1874 = vadd.f32 %v1870, %v1873
    %vm1875 = vweird.f32 %v1869
    %vm1876 = vweird.f32 %v1870
    %vm1877 = vmor %vm1875, %vm1876
    %v1878 = vsel %vm1877, %v1870, %v1874
    %v1879 = vand.u32 2147483647, %v1869
    %vm1880 = vcmp.eq.f32.partialorder %v1879, 8.507059e+37
    %v1881 = vand.u32 %v1869, 2147483648
    %v1882 = vor.u32 1.1754944e-38, %v1881
    %v1883 = vsel %vm1880, %v1882, %v1878
    %v1884 = vmul.f32 1.0, %v1883
    %v1886 = vrot.slane %v1865, 2
    %v1888 = vtanh.pop %v1886
    %v1889 = vrot.slane %v1865, 3
    %v1891 = vxor.u32 %v1889, 2147483648
    %v1892 = vmul.f32 %v1891, 1.442695
    %v1893 = vpow.pop %v1892
    %v1894 = vadd.f32 %v1893, 1.0
    %v1895 = vrcp.pop %v1894
    %v1896 = vmul.f32 %v1894, %v1895
    %v1897 = vsub.f32 1.0, %v1896
    %v1898 = vmul.f32 %v1895, %v1897
    %v1899 = vadd.f32 %v1895, %v1898
    %vm1900 = vweird.f32 %v1894
    %vm1901 = vweird.f32 %v1895
    %vm1902 = vmor %vm1900, %vm1901
    %v1903 = vsel %vm1902, %v1895, %v1899
    %v1904 = vand.u32 2147483647, %v1894
    %vm1905 = vcmp.eq.f32.partialorder %v1904, 8.507059e+37
    %v1906 = vand.u32 %v1894, 2147483648
    %v1907 = vor.u32 1.1754944e-38, %v1906
    %v1908 = vsel %vm1905, %v1907, %v1903
    %v1909 = vmul.f32 1.0, %v1908
    %v1911 = vrot.slane %v1884, 1
    %v1913 = vmul.f32 %v1911, %v1704
    %v1914 = vmul.f32 %v1884, %v1888
    %v1915 = vadd.f32 %v1913, %v1914
    %v1916 = vtanh.pop %v1915
    %v1917 = vmul.f32 %v1909, %v1916
    %1918 = vst [vmem:[#allocation2 + $0x7] sm:$0x1] %v1917
    %v1919 = vld [vmem:[#allocation2] sm:$0xff]
    %v1920 = vld [vmem:[#allocation4 + $0x200] sm:$0xff]
    %v1921 = vld [vmem:[#allocation4 + $0x208] sm:$0xff]
    %v1922 = vld [vmem:[#allocation4 + $0x210] sm:$0xff]
    %v1923 = vld [vmem:[#allocation4 + $0x218] sm:$0xff]
    %v1924 = vld [vmem:[#allocation4 + $0x220] sm:$0xff]
    %v1925 = vld [vmem:[#allocation4 + $0x228] sm:$0xff]
    %v1926 = vld [vmem:[#allocation4 + $0x230] sm:$0xff]
    %v1927 = vld [vmem:[#allocation4 + $0x238] sm:$0xff]
    %v1928 = vld [vmem:[#allocation4 + $0x240] sm:$0xff]
    %v1929 = vld [vmem:[#allocation4 + $0x248] sm:$0xff]
    %v1930 = vld [vmem:[#allocation4 + $0x250] sm:$0xff]
    %v1931 = vld [vmem:[#allocation4 + $0x258] sm:$0xff]
    %v1932 = vld [vmem:[#allocation4 + $0x260] sm:$0xff]
    %v1933 = vld [vmem:[#allocation4 + $0x268] sm:$0xff]
    %v1934 = vld [vmem:[#allocation4 + $0x270] sm:$0xff]
    %v1935 = vld [vmem:[#allocation4 + $0x278] sm:$0xff]
    %v1936 = vld [vmem:[#allocation4 + $0x280] sm:$0xff]
    %v1937 = vld [vmem:[#allocation4 + $0x288] sm:$0xff]
    %v1938 = vld [vmem:[#allocation4 + $0x290] sm:$0xff]
    %v1939 = vld [vmem:[#allocation4 + $0x298] sm:$0xff]
    %v1940 = vld [vmem:[#allocation4 + $0x2a0] sm:$0xff]
    %v1941 = vld [vmem:[#allocation4 + $0x2a8] sm:$0xff]
    %v1942 = vld [vmem:[#allocation4 + $0x2b0] sm:$0xff]
    %v1943 = vld [vmem:[#allocation4 + $0x2b8] sm:$0xff]
    %v1944 = vld [vmem:[#allocation4 + $0x2c0] sm:$0xff]
    %v1945 = vld [vmem:[#allocation4 + $0x2c8] sm:$0xff]
    %v1946 = vld [vmem:[#allocation4 + $0x2d0] sm:$0xff]
    %v1947 = vld [vmem:[#allocation4 + $0x2d8] sm:$0xff]
    %v1948 = vld [vmem:[#allocation4 + $0x2e0] sm:$0xff]
    %v1949 = vld [vmem:[#allocation4 + $0x2e8] sm:$0xff]
    %v1950 = vld [vmem:[#allocation4 + $0x2f0] sm:$0xff]
    %v1951 = vld [vmem:[#allocation4 + $0x2f8] sm:$0xff]
    %v1952 = vld [vmem:[#allocation4 + $0x300] sm:$0xff]
    %v1953 = vld [vmem:[#allocation4 + $0x308] sm:$0xff]
    %v1954 = vld [vmem:[#allocation4 + $0x310] sm:$0xff]
    %v1955 = vld [vmem:[#allocation4 + $0x318] sm:$0xff]
    %v1956 = vld [vmem:[#allocation4 + $0x320] sm:$0xff]
    %v1957 = vld [vmem:[#allocation4 + $0x328] sm:$0xff]
    %v1958 = vld [vmem:[#allocation4 + $0x330] sm:$0xff]
    %v1959 = vld [vmem:[#allocation4 + $0x338] sm:$0xff]
    %v1960 = vld [vmem:[#allocation4 + $0x340] sm:$0xff]
    %v1961 = vld [vmem:[#allocation4 + $0x348] sm:$0xff]
    %v1962 = vld [vmem:[#allocation4 + $0x350] sm:$0xff]
    %v1963 = vld [vmem:[#allocation4 + $0x358] sm:$0xff]
    %v1964 = vld [vmem:[#allocation4 + $0x360] sm:$0xff]
    %v1965 = vld [vmem:[#allocation4 + $0x368] sm:$0xff]
    %v1966 = vld [vmem:[#allocation4 + $0x370] sm:$0xff]
    %v1967 = vld [vmem:[#allocation4 + $0x378] sm:$0xff]
    %v1968 = vld [vmem:[#allocation4 + $0x380] sm:$0xff]
    %v1969 = vld [vmem:[#allocation4 + $0x388] sm:$0xff]
    %v1970 = vld [vmem:[#allocation4 + $0x390] sm:$0xff]
    %v1971 = vld [vmem:[#allocation4 + $0x398] sm:$0xff]
    %v1972 = vld [vmem:[#allocation4 + $0x3a0] sm:$0xff]
    %v1973 = vld [vmem:[#allocation4 + $0x3a8] sm:$0xff]
    %v1974 = vld [vmem:[#allocation4 + $0x3b0] sm:$0xff]
    %v1975 = vld [vmem:[#allocation4 + $0x3b8] sm:$0xff]
    %v1976 = vld [vmem:[#allocation4 + $0x3c0] sm:$0xff]
    %v1977 = vld [vmem:[#allocation4 + $0x3c8] sm:$0xff]
    %v1978 = vld [vmem:[#allocation4 + $0x3d0] sm:$0xff]
    %v1979 = vld [vmem:[#allocation4 + $0x3d8] sm:$0xff]
    %v1980 = vld [vmem:[#allocation4 + $0x3e0] sm:$0xff]
    %v1981 = vld [vmem:[#allocation4 + $0x3e8] sm:$0xff]
    %v1982 = vld [vmem:[#allocation4 + $0x3f0] sm:$0xff]
    %v1983 = vld [vmem:[#allocation4 + $0x3f8] sm:$0xff]
    %s1984 = scalar_lea.vmem %s3, 1
    %v1985 = vld [vmem:[%s1984] ss:$2 sm:$0xf]
    %v1987 = vperm.slane %v1985, 0
    %v1988 = vperm.slane %v1985, 1
    %v1989 = vperm.slane %v1985, 2
    %v1990 = vperm.slane %v1985, 3
    %1995 = vmatpush.msra.mxu0 %v1980
    %1996 = vmatpush.msra.mxu0 %v1976
    %1997 = vmatpush.msra.mxu0 %v1972
    %1998 = vmatpush.msra.mxu0 %v1968
    %1999 = vmatpush.msra.mxu0 %v1964
    %2000 = vmatpush.msra.mxu0 %v1960
    %2001 = vmatpush.msra.mxu0 %v1956
    %2002 = vmatpush.msra.mxu0 %v1952
    %2003 = vmatpush.msra.mxu0 %v1948
    %2004 = vmatpush.msra.mxu0 %v1944
    %2005 = vmatpush.msra.mxu0 %v1940
    %2006 = vmatpush.msra.mxu0 %v1936
    %2007 = vmatpush.msra.mxu0 %v1932
    %2008 = vmatpush.msra.mxu0 %v1928
    %2009 = vmatpush.msra.mxu0 %v1924
    %2010 = vmatpush.msra.mxu0 %v1920
    %2011 = vmatmul.f32.gmra.mxu0 %v1919
    %v2012 = vpop.f32.mrf.mxu0
    %v2013 = vadd.f32 %v1987, %v2012
    %2014 = vdwg.mxu0
    %2015 = vmatpush.msra.mxu0 %v1981
    %2016 = vmatpush.msra.mxu0 %v1977
    %2017 = vmatpush.msra.mxu0 %v1973
    %2018 = vmatpush.msra.mxu0 %v1969
    %2019 = vmatpush.msra.mxu0 %v1965
    %2020 = vmatpush.msra.mxu0 %v1961
    %2021 = vmatpush.msra.mxu0 %v1957
    %2022 = vmatpush.msra.mxu0 %v1953
    %2023 = vmatpush.msra.mxu0 %v1949
    %2024 = vmatpush.msra.mxu0 %v1945
    %2025 = vmatpush.msra.mxu0 %v1941
    %2026 = vmatpush.msra.mxu0 %v1937
    %2027 = vmatpush.msra.mxu0 %v1933
    %2028 = vmatpush.msra.mxu0 %v1929
    %2029 = vmatpush.msra.mxu0 %v1925
    %2030 = vmatpush.msra.mxu0 %v1921
    %2031 = vmatmul.f32.gmra.mxu0 %v1919
    %v2032 = vpop.f32.mrf.mxu0
    %v2033 = vadd.f32 %v1988, %v2032
    %2034 = vdwg.mxu0
    %2035 = vmatpush.msra.mxu0 %v1982
    %2036 = vmatpush.msra.mxu0 %v1978
    %2037 = vmatpush.msra.mxu0 %v1974
    %2038 = vmatpush.msra.mxu0 %v1970
    %2039 = vmatpush.msra.mxu0 %v1966
    %2040 = vmatpush.msra.mxu0 %v1962
    %2041 = vmatpush.msra.mxu0 %v1958
    %2042 = vmatpush.msra.mxu0 %v1954
    %2043 = vmatpush.msra.mxu0 %v1950
    %2044 = vmatpush.msra.mxu0 %v1946
    %2045 = vmatpush.msra.mxu0 %v1942
    %2046 = vmatpush.msra.mxu0 %v1938
    %2047 = vmatpush.msra.mxu0 %v1934
    %2048 = vmatpush.msra.mxu0 %v1930
    %2049 = vmatpush.msra.mxu0 %v1926
    %2050 = vmatpush.msra.mxu0 %v1922
    %2051 = vmatmul.f32.gmra.mxu0 %v1919
    %v2052 = vpop.f32.mrf.mxu0
    %v2053 = vadd.f32 %v1989, %v2052
    %2054 = vdwg.mxu0
    %2055 = vmatpush.msra.mxu0 %v1983
    %2056 = vmatpush.msra.mxu0 %v1979
    %2057 = vmatpush.msra.mxu0 %v1975
    %2058 = vmatpush.msra.mxu0 %v1971
    %2059 = vmatpush.msra.mxu0 %v1967
    %2060 = vmatpush.msra.mxu0 %v1963
    %2061 = vmatpush.msra.mxu0 %v1959
    %2062 = vmatpush.msra.mxu0 %v1955
    %2063 = vmatpush.msra.mxu0 %v1951
    %2064 = vmatpush.msra.mxu0 %v1947
    %2065 = vmatpush.msra.mxu0 %v1943
    %2066 = vmatpush.msra.mxu0 %v1939
    %2067 = vmatpush.msra.mxu0 %v1935
    %2068 = vmatpush.msra.mxu0 %v1931
    %2069 = vmatpush.msra.mxu0 %v1927
    %2070 = vmatpush.msra.mxu0 %v1923
    %2071 = vmatmul.f32.gmra.mxu0 %v1919
    %v2072 = vpop.f32.mrf.mxu0
    %v2073 = vadd.f32 %v1990, %v2072
    %2074 = vdwg.mxu0
    %2075 = vst [vmem:[#allocation3] sm:$0xff] %v2013
    %2076 = vst [vmem:[#allocation3 + $0x8] sm:$0xff] %v2033
    %2077 = vst [vmem:[#allocation3 + $0x10] sm:$0xff] %v2053
    %2078 = vst [vmem:[#allocation3 + $0x18] sm:$0xff] %v2073
    %v2079 = vld [vmem:[#allocation3] ss:$8 sm:$0xf]
    %v2080 = vld [vmem:[#allocation6 + $0x200] sm:$0xff]
    %v2081 = vld [vmem:[#allocation6 + $0x208] sm:$0xff]
    %v2082 = vld [vmem:[#allocation6 + $0x210] sm:$0xff]
    %v2083 = vld [vmem:[#allocation6 + $0x218] sm:$0xff]
    %v2084 = vld [vmem:[#allocation6 + $0x220] sm:$0xff]
    %v2085 = vld [vmem:[#allocation6 + $0x228] sm:$0xff]
    %v2086 = vld [vmem:[#allocation6 + $0x230] sm:$0xff]
    %v2087 = vld [vmem:[#allocation6 + $0x238] sm:$0xff]
    %v2088 = vld [vmem:[#allocation6 + $0x240] sm:$0xff]
    %v2089 = vld [vmem:[#allocation6 + $0x248] sm:$0xff]
    %v2090 = vld [vmem:[#allocation6 + $0x250] sm:$0xff]
    %v2091 = vld [vmem:[#allocation6 + $0x258] sm:$0xff]
    %v2092 = vld [vmem:[#allocation6 + $0x260] sm:$0xff]
    %v2093 = vld [vmem:[#allocation6 + $0x268] sm:$0xff]
    %v2094 = vld [vmem:[#allocation6 + $0x270] sm:$0xff]
    %v2095 = vld [vmem:[#allocation6 + $0x278] sm:$0xff]
    %v2096 = vld [vmem:[#allocation6 + $0x280] sm:$0xff]
    %v2097 = vld [vmem:[#allocation6 + $0x288] sm:$0xff]
    %v2098 = vld [vmem:[#allocation6 + $0x290] sm:$0xff]
    %v2099 = vld [vmem:[#allocation6 + $0x298] sm:$0xff]
    %v2100 = vld [vmem:[#allocation6 + $0x2a0] sm:$0xff]
    %v2101 = vld [vmem:[#allocation6 + $0x2a8] sm:$0xff]
    %v2102 = vld [vmem:[#allocation6 + $0x2b0] sm:$0xff]
    %v2103 = vld [vmem:[#allocation6 + $0x2b8] sm:$0xff]
    %v2104 = vld [vmem:[#allocation6 + $0x2c0] sm:$0xff]
    %v2105 = vld [vmem:[#allocation6 + $0x2c8] sm:$0xff]
    %v2106 = vld [vmem:[#allocation6 + $0x2d0] sm:$0xff]
    %v2107 = vld [vmem:[#allocation6 + $0x2d8] sm:$0xff]
    %v2108 = vld [vmem:[#allocation6 + $0x2e0] sm:$0xff]
    %v2109 = vld [vmem:[#allocation6 + $0x2e8] sm:$0xff]
    %v2110 = vld [vmem:[#allocation6 + $0x2f0] sm:$0xff]
    %v2111 = vld [vmem:[#allocation6 + $0x2f8] sm:$0xff]
    %v2112 = vld [vmem:[#allocation6 + $0x300] sm:$0xff]
    %v2113 = vld [vmem:[#allocation6 + $0x308] sm:$0xff]
    %v2114 = vld [vmem:[#allocation6 + $0x310] sm:$0xff]
    %v2115 = vld [vmem:[#allocation6 + $0x318] sm:$0xff]
    %v2116 = vld [vmem:[#allocation6 + $0x320] sm:$0xff]
    %v2117 = vld [vmem:[#allocation6 + $0x328] sm:$0xff]
    %v2118 = vld [vmem:[#allocation6 + $0x330] sm:$0xff]
    %v2119 = vld [vmem:[#allocation6 + $0x338] sm:$0xff]
    %v2120 = vld [vmem:[#allocation6 + $0x340] sm:$0xff]
    %v2121 = vld [vmem:[#allocation6 + $0x348] sm:$0xff]
    %v2122 = vld [vmem:[#allocation6 + $0x350] sm:$0xff]
    %v2123 = vld [vmem:[#allocation6 + $0x358] sm:$0xff]
    %v2124 = vld [vmem:[#allocation6 + $0x360] sm:$0xff]
    %v2125 = vld [vmem:[#allocation6 + $0x368] sm:$0xff]
    %v2126 = vld [vmem:[#allocation6 + $0x370] sm:$0xff]
    %v2127 = vld [vmem:[#allocation6 + $0x378] sm:$0xff]
    %v2128 = vld [vmem:[#allocation6 + $0x380] sm:$0xff]
    %v2129 = vld [vmem:[#allocation6 + $0x388] sm:$0xff]
    %v2130 = vld [vmem:[#allocation6 + $0x390] sm:$0xff]
    %v2131 = vld [vmem:[#allocation6 + $0x398] sm:$0xff]
    %v2132 = vld [vmem:[#allocation6 + $0x3a0] sm:$0xff]
    %v2133 = vld [vmem:[#allocation6 + $0x3a8] sm:$0xff]
    %v2134 = vld [vmem:[#allocation6 + $0x3b0] sm:$0xff]
    %v2135 = vld [vmem:[#allocation6 + $0x3b8] sm:$0xff]
    %v2136 = vld [vmem:[#allocation6 + $0x3c0] sm:$0xff]
    %v2137 = vld [vmem:[#allocation6 + $0x3c8] sm:$0xff]
    %v2138 = vld [vmem:[#allocation6 + $0x3d0] sm:$0xff]
    %v2139 = vld [vmem:[#allocation6 + $0x3d8] sm:$0xff]
    %v2140 = vld [vmem:[#allocation6 + $0x3e0] sm:$0xff]
    %v2141 = vld [vmem:[#allocation6 + $0x3e8] sm:$0xff]
    %v2142 = vld [vmem:[#allocation6 + $0x3f0] sm:$0xff]
    %v2143 = vld [vmem:[#allocation6 + $0x3f8] sm:$0xff]
    %2144 = vmatpush.msra.mxu0 %v2140
    %2145 = vmatpush.msra.mxu0 %v2136
    %2146 = vmatpush.msra.mxu0 %v2132
    %2147 = vmatpush.msra.mxu0 %v2128
    %2148 = vmatpush.msra.mxu0 %v2124
    %2149 = vmatpush.msra.mxu0 %v2120
    %2150 = vmatpush.msra.mxu0 %v2116
    %2151 = vmatpush.msra.mxu0 %v2112
    %2152 = vmatpush.msra.mxu0 %v2108
    %2153 = vmatpush.msra.mxu0 %v2104
    %2154 = vmatpush.msra.mxu0 %v2100
    %2155 = vmatpush.msra.mxu0 %v2096
    %2156 = vmatpush.msra.mxu0 %v2092
    %2157 = vmatpush.msra.mxu0 %v2088
    %2158 = vmatpush.msra.mxu0 %v2084
    %2159 = vmatpush.msra.mxu0 %v2080
    %2160 = vmatmul.f32.gmra.mxu0 0.0
    %v2161 = vpop.f32.mrf.mxu0
    %v2162 = vadd.f32 0.0, %v2161
    %2163 = vdwg.mxu0
    %2164 = vmatpush.msra.mxu0 %v2141
    %2165 = vmatpush.msra.mxu0 %v2137
    %2166 = vmatpush.msra.mxu0 %v2133
    %2167 = vmatpush.msra.mxu0 %v2129
    %2168 = vmatpush.msra.mxu0 %v2125
    %2169 = vmatpush.msra.mxu0 %v2121
    %2170 = vmatpush.msra.mxu0 %v2117
    %2171 = vmatpush.msra.mxu0 %v2113
    %2172 = vmatpush.msra.mxu0 %v2109
    %2173 = vmatpush.msra.mxu0 %v2105
    %2174 = vmatpush.msra.mxu0 %v2101
    %2175 = vmatpush.msra.mxu0 %v2097
    %2176 = vmatpush.msra.mxu0 %v2093
    %2177 = vmatpush.msra.mxu0 %v2089
    %2178 = vmatpush.msra.mxu0 %v2085
    %2179 = vmatpush.msra.mxu0 %v2081
    %2180 = vmatmul.f32.gmra.mxu0 0.0
    %v2181 = vpop.f32.mrf.mxu0
    %v2182 = vadd.f32 0.0, %v2181
    %2183 = vdwg.mxu0
    %2184 = vmatpush.msra.mxu0 %v2142
    %2185 = vmatpush.msra.mxu0 %v2138
    %2186 = vmatpush.msra.mxu0 %v2134
    %2187 = vmatpush.msra.mxu0 %v2130
    %2188 = vmatpush.msra.mxu0 %v2126
    %2189 = vmatpush.msra.mxu0 %v2122
    %2190 = vmatpush.msra.mxu0 %v2118
    %2191 = vmatpush.msra.mxu0 %v2114
    %2192 = vmatpush.msra.mxu0 %v2110
    %2193 = vmatpush.msra.mxu0 %v2106
    %2194 = vmatpush.msra.mxu0 %v2102
    %2195 = vmatpush.msra.mxu0 %v2098
    %2196 = vmatpush.msra.mxu0 %v2094
    %2197 = vmatpush.msra.mxu0 %v2090
    %2198 = vmatpush.msra.mxu0 %v2086
    %2199 = vmatpush.msra.mxu0 %v2082
    %2200 = vmatmul.f32.gmra.mxu0 0.0
    %v2201 = vpop.f32.mrf.mxu0
    %v2202 = vadd.f32 0.0, %v2201
    %2203 = vdwg.mxu0
    %2204 = vmatpush.msra.mxu0 %v2143
    %2205 = vmatpush.msra.mxu0 %v2139
    %2206 = vmatpush.msra.mxu0 %v2135
    %2207 = vmatpush.msra.mxu0 %v2131
    %2208 = vmatpush.msra.mxu0 %v2127
    %2209 = vmatpush.msra.mxu0 %v2123
    %2210 = vmatpush.msra.mxu0 %v2119
    %2211 = vmatpush.msra.mxu0 %v2115
    %2212 = vmatpush.msra.mxu0 %v2111
    %2213 = vmatpush.msra.mxu0 %v2107
    %2214 = vmatpush.msra.mxu0 %v2103
    %2215 = vmatpush.msra.mxu0 %v2099
    %2216 = vmatpush.msra.mxu0 %v2095
    %2217 = vmatpush.msra.mxu0 %v2091
    %2218 = vmatpush.msra.mxu0 %v2087
    %2219 = vmatpush.msra.mxu0 %v2083
    %2220 = vmatmul.f32.gmra.mxu0 0.0
    %v2221 = vpop.f32.mrf.mxu0
    %v2222 = vadd.f32 0.0, %v2221
    %2223 = vdwg.mxu0
    %v2228 = vrot.slane %v2182, 7
    %v2229 = vrot.slane %v2202, 6
    %v2230 = vrot.slane %v2222, 5
    %v2231 = vsel %vm381, %v2162, %v2228
    %v2232 = vsel %vm383, %v2229, %v2230
    %v2233 = vsel %vm385, %v2231, %v2232
    %v2235 = vadd.f32 %v2079, %v2233
    %v2236 = vxor.u32 %v2235, 2147483648
    %v2237 = vmul.f32 %v2236, 1.442695
    %v2238 = vpow.pop %v2237
    %v2239 = vadd.f32 %v2238, 1.0
    %v2240 = vrcp.pop %v2239
    %v2241 = vmul.f32 %v2239, %v2240
    %v2242 = vsub.f32 1.0, %v2241
    %v2243 = vmul.f32 %v2240, %v2242
    %v2244 = vadd.f32 %v2240, %v2243
    %vm2245 = vweird.f32 %v2239
    %vm2246 = vweird.f32 %v2240
    %vm2247 = vmor %vm2245, %vm2246
    %v2248 = vsel %vm2247, %v2240, %v2244
    %v2249 = vand.u32 2147483647, %v2239
    %vm2250 = vcmp.eq.f32.partialorder %v2249, 8.507059e+37
    %v2251 = vand.u32 %v2239, 2147483648
    %v2252 = vor.u32 1.1754944e-38, %v2251
    %v2253 = vsel %vm2250, %v2252, %v2248
    %v2254 = vmul.f32 1.0, %v2253
    %v2256 = vrot.slane %v2235, 2
    %v2258 = vtanh.pop %v2256
    %v2259 = vrot.slane %v2235, 3
    %v2261 = vxor.u32 %v2259, 2147483648
    %v2262 = vmul.f32 %v2261, 1.442695
    %v2263 = vpow.pop %v2262
    %v2264 = vadd.f32 %v2263, 1.0
    %v2265 = vrcp.pop %v2264
    %v2266 = vmul.f32 %v2264, %v2265
    %v2267 = vsub.f32 1.0, %v2266
    %v2268 = vmul.f32 %v2265, %v2267
    %v2269 = vadd.f32 %v2265, %v2268
    %vm2270 = vweird.f32 %v2264
    %vm2271 = vweird.f32 %v2265
    %vm2272 = vmor %vm2270, %vm2271
    %v2273 = vsel %vm2272, %v2265, %v2269
    %v2274 = vand.u32 2147483647, %v2264
    %vm2275 = vcmp.eq.f32.partialorder %v2274, 8.507059e+37
    %v2276 = vand.u32 %v2264, 2147483648
    %v2277 = vor.u32 1.1754944e-38, %v2276
    %v2278 = vsel %vm2275, %v2277, %v2273
    %v2279 = vmul.f32 1.0, %v2278
    %v2281 = vrot.slane %v2254, 1
    %v2283 = vmul.f32 %v2281, 0.0
    %v2284 = vmul.f32 %v2254, %v2258
    %v2285 = vadd.f32 %v2283, %v2284
    %v2286 = vtanh.pop %v2285
    %v2287 = vmul.f32 %v2279, %v2286
    %2288 = vst [vmem:[#allocation2] sm:$0x1] %v2287
    %v2289 = vld [vmem:[%s442] ss:$8 sm:$0xf]
    %v2290 = vld [vmem:[#allocation6 + $0x200] sm:$0xff]
    %v2291 = vld [vmem:[#allocation6 + $0x208] sm:$0xff]
    %v2292 = vld [vmem:[#allocation6 + $0x210] sm:$0xff]
    %v2293 = vld [vmem:[#allocation6 + $0x218] sm:$0xff]
    %v2294 = vld [vmem:[#allocation6 + $0x220] sm:$0xff]
    %v2295 = vld [vmem:[#allocation6 + $0x228] sm:$0xff]
    %v2296 = vld [vmem:[#allocation6 + $0x230] sm:$0xff]
    %v2297 = vld [vmem:[#allocation6 + $0x238] sm:$0xff]
    %v2298 = vld [vmem:[#allocation6 + $0x240] sm:$0xff]
    %v2299 = vld [vmem:[#allocation6 + $0x248] sm:$0xff]
    %v2300 = vld [vmem:[#allocation6 + $0x250] sm:$0xff]
    %v2301 = vld [vmem:[#allocation6 + $0x258] sm:$0xff]
    %v2302 = vld [vmem:[#allocation6 + $0x260] sm:$0xff]
    %v2303 = vld [vmem:[#allocation6 + $0x268] sm:$0xff]
    %v2304 = vld [vmem:[#allocation6 + $0x270] sm:$0xff]
    %v2305 = vld [vmem:[#allocation6 + $0x278] sm:$0xff]
    %v2306 = vld [vmem:[#allocation6 + $0x280] sm:$0xff]
    %v2307 = vld [vmem:[#allocation6 + $0x288] sm:$0xff]
    %v2308 = vld [vmem:[#allocation6 + $0x290] sm:$0xff]
    %v2309 = vld [vmem:[#allocation6 + $0x298] sm:$0xff]
    %v2310 = vld [vmem:[#allocation6 + $0x2a0] sm:$0xff]
    %v2311 = vld [vmem:[#allocation6 + $0x2a8] sm:$0xff]
    %v2312 = vld [vmem:[#allocation6 + $0x2b0] sm:$0xff]
    %v2313 = vld [vmem:[#allocation6 + $0x2b8] sm:$0xff]
    %v2314 = vld [vmem:[#allocation6 + $0x2c0] sm:$0xff]
    %v2315 = vld [vmem:[#allocation6 + $0x2c8] sm:$0xff]
    %v2316 = vld [vmem:[#allocation6 + $0x2d0] sm:$0xff]
    %v2317 = vld [vmem:[#allocation6 + $0x2d8] sm:$0xff]
    %v2318 = vld [vmem:[#allocation6 + $0x2e0] sm:$0xff]
    %v2319 = vld [vmem:[#allocation6 + $0x2e8] sm:$0xff]
    %v2320 = vld [vmem:[#allocation6 + $0x2f0] sm:$0xff]
    %v2321 = vld [vmem:[#allocation6 + $0x2f8] sm:$0xff]
    %v2322 = vld [vmem:[#allocation6 + $0x300] sm:$0xff]
    %v2323 = vld [vmem:[#allocation6 + $0x308] sm:$0xff]
    %v2324 = vld [vmem:[#allocation6 + $0x310] sm:$0xff]
    %v2325 = vld [vmem:[#allocation6 + $0x318] sm:$0xff]
    %v2326 = vld [vmem:[#allocation6 + $0x320] sm:$0xff]
    %v2327 = vld [vmem:[#allocation6 + $0x328] sm:$0xff]
    %v2328 = vld [vmem:[#allocation6 + $0x330] sm:$0xff]
    %v2329 = vld [vmem:[#allocation6 + $0x338] sm:$0xff]
    %v2330 = vld [vmem:[#allocation6 + $0x340] sm:$0xff]
    %v2331 = vld [vmem:[#allocation6 + $0x348] sm:$0xff]
    %v2332 = vld [vmem:[#allocation6 + $0x350] sm:$0xff]
    %v2333 = vld [vmem:[#allocation6 + $0x358] sm:$0xff]
    %v2334 = vld [vmem:[#allocation6 + $0x360] sm:$0xff]
    %v2335 = vld [vmem:[#allocation6 + $0x368] sm:$0xff]
    %v2336 = vld [vmem:[#allocation6 + $0x370] sm:$0xff]
    %v2337 = vld [vmem:[#allocation6 + $0x378] sm:$0xff]
    %v2338 = vld [vmem:[#allocation6 + $0x380] sm:$0xff]
    %v2339 = vld [vmem:[#allocation6 + $0x388] sm:$0xff]
    %v2340 = vld [vmem:[#allocation6 + $0x390] sm:$0xff]
    %v2341 = vld [vmem:[#allocation6 + $0x398] sm:$0xff]
    %v2342 = vld [vmem:[#allocation6 + $0x3a0] sm:$0xff]
    %v2343 = vld [vmem:[#allocation6 + $0x3a8] sm:$0xff]
    %v2344 = vld [vmem:[#allocation6 + $0x3b0] sm:$0xff]
    %v2345 = vld [vmem:[#allocation6 + $0x3b8] sm:$0xff]
    %v2346 = vld [vmem:[#allocation6 + $0x3c0] sm:$0xff]
    %v2347 = vld [vmem:[#allocation6 + $0x3c8] sm:$0xff]
    %v2348 = vld [vmem:[#allocation6 + $0x3d0] sm:$0xff]
    %v2349 = vld [vmem:[#allocation6 + $0x3d8] sm:$0xff]
    %v2350 = vld [vmem:[#allocation6 + $0x3e0] sm:$0xff]
    %v2351 = vld [vmem:[#allocation6 + $0x3e8] sm:$0xff]
    %v2352 = vld [vmem:[#allocation6 + $0x3f0] sm:$0xff]
    %v2353 = vld [vmem:[#allocation6 + $0x3f8] sm:$0xff]
    %2354 = vmatpush.msra.mxu0 %v2350
    %2355 = vmatpush.msra.mxu0 %v2346
    %2356 = vmatpush.msra.mxu0 %v2342
    %2357 = vmatpush.msra.mxu0 %v2338
    %2358 = vmatpush.msra.mxu0 %v2334
    %2359 = vmatpush.msra.mxu0 %v2330
    %2360 = vmatpush.msra.mxu0 %v2326
    %2361 = vmatpush.msra.mxu0 %v2322
    %2362 = vmatpush.msra.mxu0 %v2318
    %2363 = vmatpush.msra.mxu0 %v2314
    %2364 = vmatpush.msra.mxu0 %v2310
    %2365 = vmatpush.msra.mxu0 %v2306
    %2366 = vmatpush.msra.mxu0 %v2302
    %2367 = vmatpush.msra.mxu0 %v2298
    %2368 = vmatpush.msra.mxu0 %v2294
    %2369 = vmatpush.msra.mxu0 %v2290
    %2370 = vmatmul.f32.gmra.mxu0 %v2287
    %v2371 = vpop.f32.mrf.mxu0
    %v2372 = vadd.f32 0.0, %v2371
    %2373 = vdwg.mxu0
    %2374 = vmatpush.msra.mxu0 %v2351
    %2375 = vmatpush.msra.mxu0 %v2347
    %2376 = vmatpush.msra.mxu0 %v2343
    %2377 = vmatpush.msra.mxu0 %v2339
    %2378 = vmatpush.msra.mxu0 %v2335
    %2379 = vmatpush.msra.mxu0 %v2331
    %2380 = vmatpush.msra.mxu0 %v2327
    %2381 = vmatpush.msra.mxu0 %v2323
    %2382 = vmatpush.msra.mxu0 %v2319
    %2383 = vmatpush.msra.mxu0 %v2315
    %2384 = vmatpush.msra.mxu0 %v2311
    %2385 = vmatpush.msra.mxu0 %v2307
    %2386 = vmatpush.msra.mxu0 %v2303
    %2387 = vmatpush.msra.mxu0 %v2299
    %2388 = vmatpush.msra.mxu0 %v2295
    %2389 = vmatpush.msra.mxu0 %v2291
    %2390 = vmatmul.f32.gmra.mxu0 %v2287
    %v2391 = vpop.f32.mrf.mxu0
    %v2392 = vadd.f32 0.0, %v2391
    %2393 = vdwg.mxu0
    %2394 = vmatpush.msra.mxu0 %v2352
    %2395 = vmatpush.msra.mxu0 %v2348
    %2396 = vmatpush.msra.mxu0 %v2344
    %2397 = vmatpush.msra.mxu0 %v2340
    %2398 = vmatpush.msra.mxu0 %v2336
    %2399 = vmatpush.msra.mxu0 %v2332
    %2400 = vmatpush.msra.mxu0 %v2328
    %2401 = vmatpush.msra.mxu0 %v2324
    %2402 = vmatpush.msra.mxu0 %v2320
    %2403 = vmatpush.msra.mxu0 %v2316
    %2404 = vmatpush.msra.mxu0 %v2312
    %2405 = vmatpush.msra.mxu0 %v2308
    %2406 = vmatpush.msra.mxu0 %v2304
    %2407 = vmatpush.msra.mxu0 %v2300
    %2408 = vmatpush.msra.mxu0 %v2296
    %2409 = vmatpush.msra.mxu0 %v2292
    %2410 = vmatmul.f32.gmra.mxu0 %v2287
    %v2411 = vpop.f32.mrf.mxu0
    %v2412 = vadd.f32 0.0, %v2411
    %2413 = vdwg.mxu0
    %2414 = vmatpush.msra.mxu0 %v2353
    %2415 = vmatpush.msra.mxu0 %v2349
    %2416 = vmatpush.msra.mxu0 %v2345
    %2417 = vmatpush.msra.mxu0 %v2341
    %2418 = vmatpush.msra.mxu0 %v2337
    %2419 = vmatpush.msra.mxu0 %v2333
    %2420 = vmatpush.msra.mxu0 %v2329
    %2421 = vmatpush.msra.mxu0 %v2325
    %2422 = vmatpush.msra.mxu0 %v2321
    %2423 = vmatpush.msra.mxu0 %v2317
    %2424 = vmatpush.msra.mxu0 %v2313
    %2425 = vmatpush.msra.mxu0 %v2309
    %2426 = vmatpush.msra.mxu0 %v2305
    %2427 = vmatpush.msra.mxu0 %v2301
    %2428 = vmatpush.msra.mxu0 %v2297
    %2429 = vmatpush.msra.mxu0 %v2293
    %2430 = vmatmul.f32.gmra.mxu0 %v2287
    %v2431 = vpop.f32.mrf.mxu0
    %v2432 = vadd.f32 0.0, %v2431
    %2433 = vdwg.mxu0
    %v2438 = vrot.slane %v2392, 7
    %v2439 = vrot.slane %v2412, 6
    %v2440 = vrot.slane %v2432, 5
    %v2441 = vsel %vm381, %v2372, %v2438
    %v2442 = vsel %vm383, %v2439, %v2440
    %v2443 = vsel %vm385, %v2441, %v2442
    %v2445 = vadd.f32 %v2289, %v2443
    %v2446 = vxor.u32 %v2445, 2147483648
    %v2447 = vmul.f32 %v2446, 1.442695
    %v2448 = vpow.pop %v2447
    %v2449 = vadd.f32 %v2448, 1.0
    %v2450 = vrcp.pop %v2449
    %v2451 = vmul.f32 %v2449, %v2450
    %v2452 = vsub.f32 1.0, %v2451
    %v2453 = vmul.f32 %v2450, %v2452
    %v2454 = vadd.f32 %v2450, %v2453
    %vm2455 = vweird.f32 %v2449
    %vm2456 = vweird.f32 %v2450
    %vm2457 = vmor %vm2455, %vm2456
    %v2458 = vsel %vm2457, %v2450, %v2454
    %v2459 = vand.u32 2147483647, %v2449
    %vm2460 = vcmp.eq.f32.partialorder %v2459, 8.507059e+37
    %v2461 = vand.u32 %v2449, 2147483648
    %v2462 = vor.u32 1.1754944e-38, %v2461
    %v2463 = vsel %vm2460, %v2462, %v2458
    %v2464 = vmul.f32 1.0, %v2463
    %v2466 = vrot.slane %v2445, 2
    %v2468 = vtanh.pop %v2466
    %v2469 = vrot.slane %v2445, 3
    %v2471 = vxor.u32 %v2469, 2147483648
    %v2472 = vmul.f32 %v2471, 1.442695
    %v2473 = vpow.pop %v2472
    %v2474 = vadd.f32 %v2473, 1.0
    %v2475 = vrcp.pop %v2474
    %v2476 = vmul.f32 %v2474, %v2475
    %v2477 = vsub.f32 1.0, %v2476
    %v2478 = vmul.f32 %v2475, %v2477
    %v2479 = vadd.f32 %v2475, %v2478
    %vm2480 = vweird.f32 %v2474
    %vm2481 = vweird.f32 %v2475
    %vm2482 = vmor %vm2480, %vm2481
    %v2483 = vsel %vm2482, %v2475, %v2479
    %v2484 = vand.u32 2147483647, %v2474
    %vm2485 = vcmp.eq.f32.partialorder %v2484, 8.507059e+37
    %v2486 = vand.u32 %v2474, 2147483648
    %v2487 = vor.u32 1.1754944e-38, %v2486
    %v2488 = vsel %vm2485, %v2487, %v2483
    %v2489 = vmul.f32 1.0, %v2488
    %v2491 = vrot.slane %v2464, 1
    %v2493 = vmul.f32 %v2491, %v2285
    %v2494 = vmul.f32 %v2464, %v2468
    %v2495 = vadd.f32 %v2493, %v2494
    %v2496 = vtanh.pop %v2495
    %v2497 = vmul.f32 %v2489, %v2496
    %2498 = vst [vmem:[#allocation2 + $0x1] sm:$0x1] %v2497
    %v2499 = vld [vmem:[%s653] ss:$8 sm:$0xf]
    %v2500 = vld [vmem:[#allocation6 + $0x200] sm:$0xff]
    %v2501 = vld [vmem:[#allocation6 + $0x208] sm:$0xff]
    %v2502 = vld [vmem:[#allocation6 + $0x210] sm:$0xff]
    %v2503 = vld [vmem:[#allocation6 + $0x218] sm:$0xff]
    %v2504 = vld [vmem:[#allocation6 + $0x220] sm:$0xff]
    %v2505 = vld [vmem:[#allocation6 + $0x228] sm:$0xff]
    %v2506 = vld [vmem:[#allocation6 + $0x230] sm:$0xff]
    %v2507 = vld [vmem:[#allocation6 + $0x238] sm:$0xff]
    %v2508 = vld [vmem:[#allocation6 + $0x240] sm:$0xff]
    %v2509 = vld [vmem:[#allocation6 + $0x248] sm:$0xff]
    %v2510 = vld [vmem:[#allocation6 + $0x250] sm:$0xff]
    %v2511 = vld [vmem:[#allocation6 + $0x258] sm:$0xff]
    %v2512 = vld [vmem:[#allocation6 + $0x260] sm:$0xff]
    %v2513 = vld [vmem:[#allocation6 + $0x268] sm:$0xff]
    %v2514 = vld [vmem:[#allocation6 + $0x270] sm:$0xff]
    %v2515 = vld [vmem:[#allocation6 + $0x278] sm:$0xff]
    %v2516 = vld [vmem:[#allocation6 + $0x280] sm:$0xff]
    %v2517 = vld [vmem:[#allocation6 + $0x288] sm:$0xff]
    %v2518 = vld [vmem:[#allocation6 + $0x290] sm:$0xff]
    %v2519 = vld [vmem:[#allocation6 + $0x298] sm:$0xff]
    %v2520 = vld [vmem:[#allocation6 + $0x2a0] sm:$0xff]
    %v2521 = vld [vmem:[#allocation6 + $0x2a8] sm:$0xff]
    %v2522 = vld [vmem:[#allocation6 + $0x2b0] sm:$0xff]
    %v2523 = vld [vmem:[#allocation6 + $0x2b8] sm:$0xff]
    %v2524 = vld [vmem:[#allocation6 + $0x2c0] sm:$0xff]
    %v2525 = vld [vmem:[#allocation6 + $0x2c8] sm:$0xff]
    %v2526 = vld [vmem:[#allocation6 + $0x2d0] sm:$0xff]
    %v2527 = vld [vmem:[#allocation6 + $0x2d8] sm:$0xff]
    %v2528 = vld [vmem:[#allocation6 + $0x2e0] sm:$0xff]
    %v2529 = vld [vmem:[#allocation6 + $0x2e8] sm:$0xff]
    %v2530 = vld [vmem:[#allocation6 + $0x2f0] sm:$0xff]
    %v2531 = vld [vmem:[#allocation6 + $0x2f8] sm:$0xff]
    %v2532 = vld [vmem:[#allocation6 + $0x300] sm:$0xff]
    %v2533 = vld [vmem:[#allocation6 + $0x308] sm:$0xff]
    %v2534 = vld [vmem:[#allocation6 + $0x310] sm:$0xff]
    %v2535 = vld [vmem:[#allocation6 + $0x318] sm:$0xff]
    %v2536 = vld [vmem:[#allocation6 + $0x320] sm:$0xff]
    %v2537 = vld [vmem:[#allocation6 + $0x328] sm:$0xff]
    %v2538 = vld [vmem:[#allocation6 + $0x330] sm:$0xff]
    %v2539 = vld [vmem:[#allocation6 + $0x338] sm:$0xff]
    %v2540 = vld [vmem:[#allocation6 + $0x340] sm:$0xff]
    %v2541 = vld [vmem:[#allocation6 + $0x348] sm:$0xff]
    %v2542 = vld [vmem:[#allocation6 + $0x350] sm:$0xff]
    %v2543 = vld [vmem:[#allocation6 + $0x358] sm:$0xff]
    %v2544 = vld [vmem:[#allocation6 + $0x360] sm:$0xff]
    %v2545 = vld [vmem:[#allocation6 + $0x368] sm:$0xff]
    %v2546 = vld [vmem:[#allocation6 + $0x370] sm:$0xff]
    %v2547 = vld [vmem:[#allocation6 + $0x378] sm:$0xff]
    %v2548 = vld [vmem:[#allocation6 + $0x380] sm:$0xff]
    %v2549 = vld [vmem:[#allocation6 + $0x388] sm:$0xff]
    %v2550 = vld [vmem:[#allocation6 + $0x390] sm:$0xff]
    %v2551 = vld [vmem:[#allocation6 + $0x398] sm:$0xff]
    %v2552 = vld [vmem:[#allocation6 + $0x3a0] sm:$0xff]
    %v2553 = vld [vmem:[#allocation6 + $0x3a8] sm:$0xff]
    %v2554 = vld [vmem:[#allocation6 + $0x3b0] sm:$0xff]
    %v2555 = vld [vmem:[#allocation6 + $0x3b8] sm:$0xff]
    %v2556 = vld [vmem:[#allocation6 + $0x3c0] sm:$0xff]
    %v2557 = vld [vmem:[#allocation6 + $0x3c8] sm:$0xff]
    %v2558 = vld [vmem:[#allocation6 + $0x3d0] sm:$0xff]
    %v2559 = vld [vmem:[#allocation6 + $0x3d8] sm:$0xff]
    %v2560 = vld [vmem:[#allocation6 + $0x3e0] sm:$0xff]
    %v2561 = vld [vmem:[#allocation6 + $0x3e8] sm:$0xff]
    %v2562 = vld [vmem:[#allocation6 + $0x3f0] sm:$0xff]
    %v2563 = vld [vmem:[#allocation6 + $0x3f8] sm:$0xff]
    %2564 = vmatpush.msra.mxu0 %v2560
    %2565 = vmatpush.msra.mxu0 %v2556
    %2566 = vmatpush.msra.mxu0 %v2552
    %2567 = vmatpush.msra.mxu0 %v2548
    %2568 = vmatpush.msra.mxu0 %v2544
    %2569 = vmatpush.msra.mxu0 %v2540
    %2570 = vmatpush.msra.mxu0 %v2536
    %2571 = vmatpush.msra.mxu0 %v2532
    %2572 = vmatpush.msra.mxu0 %v2528
    %2573 = vmatpush.msra.mxu0 %v2524
    %2574 = vmatpush.msra.mxu0 %v2520
    %2575 = vmatpush.msra.mxu0 %v2516
    %2576 = vmatpush.msra.mxu0 %v2512
    %2577 = vmatpush.msra.mxu0 %v2508
    %2578 = vmatpush.msra.mxu0 %v2504
    %2579 = vmatpush.msra.mxu0 %v2500
    %2580 = vmatmul.f32.gmra.mxu0 %v2497
    %v2581 = vpop.f32.mrf.mxu0
    %v2582 = vadd.f32 0.0, %v2581
    %2583 = vdwg.mxu0
    %2584 = vmatpush.msra.mxu0 %v2561
    %2585 = vmatpush.msra.mxu0 %v2557
    %2586 = vmatpush.msra.mxu0 %v2553
    %2587 = vmatpush.msra.mxu0 %v2549
    %2588 = vmatpush.msra.mxu0 %v2545
    %2589 = vmatpush.msra.mxu0 %v2541
    %2590 = vmatpush.msra.mxu0 %v2537
    %2591 = vmatpush.msra.mxu0 %v2533
    %2592 = vmatpush.msra.mxu0 %v2529
    %2593 = vmatpush.msra.mxu0 %v2525
    %2594 = vmatpush.msra.mxu0 %v2521
    %2595 = vmatpush.msra.mxu0 %v2517
    %2596 = vmatpush.msra.mxu0 %v2513
    %2597 = vmatpush.msra.mxu0 %v2509
    %2598 = vmatpush.msra.mxu0 %v2505
    %2599 = vmatpush.msra.mxu0 %v2501
    %2600 = vmatmul.f32.gmra.mxu0 %v2497
    %v2601 = vpop.f32.mrf.mxu0
    %v2602 = vadd.f32 0.0, %v2601
    %2603 = vdwg.mxu0
    %2604 = vmatpush.msra.mxu0 %v2562
    %2605 = vmatpush.msra.mxu0 %v2558
    %2606 = vmatpush.msra.mxu0 %v2554
    %2607 = vmatpush.msra.mxu0 %v2550
    %2608 = vmatpush.msra.mxu0 %v2546
    %2609 = vmatpush.msra.mxu0 %v2542
    %2610 = vmatpush.msra.mxu0 %v2538
    %2611 = vmatpush.msra.mxu0 %v2534
    %2612 = vmatpush.msra.mxu0 %v2530
    %2613 = vmatpush.msra.mxu0 %v2526
    %2614 = vmatpush.msra.mxu0 %v2522
    %2615 = vmatpush.msra.mxu0 %v2518
    %2616 = vmatpush.msra.mxu0 %v2514
    %2617 = vmatpush.msra.mxu0 %v2510
    %2618 = vmatpush.msra.mxu0 %v2506
    %2619 = vmatpush.msra.mxu0 %v2502
    %2620 = vmatmul.f32.gmra.mxu0 %v2497
    %v2621 = vpop.f32.mrf.mxu0
    %v2622 = vadd.f32 0.0, %v2621
    %2623 = vdwg.mxu0
    %2624 = vmatpush.msra.mxu0 %v2563
    %2625 = vmatpush.msra.mxu0 %v2559
    %2626 = vmatpush.msra.mxu0 %v2555
    %2627 = vmatpush.msra.mxu0 %v2551
    %2628 = vmatpush.msra.mxu0 %v2547
    %2629 = vmatpush.msra.mxu0 %v2543
    %2630 = vmatpush.msra.mxu0 %v2539
    %2631 = vmatpush.msra.mxu0 %v2535
    %2632 = vmatpush.msra.mxu0 %v2531
    %2633 = vmatpush.msra.mxu0 %v2527
    %2634 = vmatpush.msra.mxu0 %v2523
    %2635 = vmatpush.msra.mxu0 %v2519
    %2636 = vmatpush.msra.mxu0 %v2515
    %2637 = vmatpush.msra.mxu0 %v2511
    %2638 = vmatpush.msra.mxu0 %v2507
    %2639 = vmatpush.msra.mxu0 %v2503
    %2640 = vmatmul.f32.gmra.mxu0 %v2497
    %v2641 = vpop.f32.mrf.mxu0
    %v2642 = vadd.f32 0.0, %v2641
    %2643 = vdwg.mxu0
    %v2648 = vrot.slane %v2602, 7
    %v2649 = vrot.slane %v2622, 6
    %v2650 = vrot.slane %v2642, 5
    %v2651 = vsel %vm381, %v2582, %v2648
    %v2652 = vsel %vm383, %v2649, %v2650
    %v2653 = vsel %vm385, %v2651, %v2652
    %v2655 = vadd.f32 %v2499, %v2653
    %v2656 = vxor.u32 %v2655, 2147483648
    %v2657 = vmul.f32 %v2656, 1.442695
    %v2658 = vpow.pop %v2657
    %v2659 = vadd.f32 %v2658, 1.0
    %v2660 = vrcp.pop %v2659
    %v2661 = vmul.f32 %v2659, %v2660
    %v2662 = vsub.f32 1.0, %v2661
    %v2663 = vmul.f32 %v2660, %v2662
    %v2664 = vadd.f32 %v2660, %v2663
    %vm2665 = vweird.f32 %v2659
    %vm2666 = vweird.f32 %v2660
    %vm2667 = vmor %vm2665, %vm2666
    %v2668 = vsel %vm2667, %v2660, %v2664
    %v2669 = vand.u32 2147483647, %v2659
    %vm2670 = vcmp.eq.f32.partialorder %v2669, 8.507059e+37
    %v2671 = vand.u32 %v2659, 2147483648
    %v2672 = vor.u32 1.1754944e-38, %v2671
    %v2673 = vsel %vm2670, %v2672, %v2668
    %v2674 = vmul.f32 1.0, %v2673
    %v2676 = vrot.slane %v2655, 2
    %v2678 = vtanh.pop %v2676
    %v2679 = vrot.slane %v2655, 3
    %v2681 = vxor.u32 %v2679, 2147483648
    %v2682 = vmul.f32 %v2681, 1.442695
    %v2683 = vpow.pop %v2682
    %v2684 = vadd.f32 %v2683, 1.0
    %v2685 = vrcp.pop %v2684
    %v2686 = vmul.f32 %v2684, %v2685
    %v2687 = vsub.f32 1.0, %v2686
    %v2688 = vmul.f32 %v2685, %v2687
    %v2689 = vadd.f32 %v2685, %v2688
    %vm2690 = vweird.f32 %v2684
    %vm2691 = vweird.f32 %v2685
    %vm2692 = vmor %vm2690, %vm2691
    %v2693 = vsel %vm2692, %v2685, %v2689
    %v2694 = vand.u32 2147483647, %v2684
    %vm2695 = vcmp.eq.f32.partialorder %v2694, 8.507059e+37
    %v2696 = vand.u32 %v2684, 2147483648
    %v2697 = vor.u32 1.1754944e-38, %v2696
    %v2698 = vsel %vm2695, %v2697, %v2693
    %v2699 = vmul.f32 1.0, %v2698
    %v2701 = vrot.slane %v2674, 1
    %v2703 = vmul.f32 %v2701, %v2495
    %v2704 = vmul.f32 %v2674, %v2678
    %v2705 = vadd.f32 %v2703, %v2704
    %v2706 = vtanh.pop %v2705
    %v2707 = vmul.f32 %v2699, %v2706
    %2708 = vst [vmem:[#allocation2 + $0x2] sm:$0x1] %v2707
    %v2709 = vld [vmem:[%s864] ss:$8 sm:$0xf]
    %v2710 = vld [vmem:[#allocation6 + $0x200] sm:$0xff]
    %v2711 = vld [vmem:[#allocation6 + $0x208] sm:$0xff]
    %v2712 = vld [vmem:[#allocation6 + $0x210] sm:$0xff]
    %v2713 = vld [vmem:[#allocation6 + $0x218] sm:$0xff]
    %v2714 = vld [vmem:[#allocation6 + $0x220] sm:$0xff]
    %v2715 = vld [vmem:[#allocation6 + $0x228] sm:$0xff]
    %v2716 = vld [vmem:[#allocation6 + $0x230] sm:$0xff]
    %v2717 = vld [vmem:[#allocation6 + $0x238] sm:$0xff]
    %v2718 = vld [vmem:[#allocation6 + $0x240] sm:$0xff]
    %v2719 = vld [vmem:[#allocation6 + $0x248] sm:$0xff]
    %v2720 = vld [vmem:[#allocation6 + $0x250] sm:$0xff]
    %v2721 = vld [vmem:[#allocation6 + $0x258] sm:$0xff]
    %v2722 = vld [vmem:[#allocation6 + $0x260] sm:$0xff]
    %v2723 = vld [vmem:[#allocation6 + $0x268] sm:$0xff]
    %v2724 = vld [vmem:[#allocation6 + $0x270] sm:$0xff]
    %v2725 = vld [vmem:[#allocation6 + $0x278] sm:$0xff]
    %v2726 = vld [vmem:[#allocation6 + $0x280] sm:$0xff]
    %v2727 = vld [vmem:[#allocation6 + $0x288] sm:$0xff]
    %v2728 = vld [vmem:[#allocation6 + $0x290] sm:$0xff]
    %v2729 = vld [vmem:[#allocation6 + $0x298] sm:$0xff]
    %v2730 = vld [vmem:[#allocation6 + $0x2a0] sm:$0xff]
    %v2731 = vld [vmem:[#allocation6 + $0x2a8] sm:$0xff]
    %v2732 = vld [vmem:[#allocation6 + $0x2b0] sm:$0xff]
    %v2733 = vld [vmem:[#allocation6 + $0x2b8] sm:$0xff]
    %v2734 = vld [vmem:[#allocation6 + $0x2c0] sm:$0xff]
    %v2735 = vld [vmem:[#allocation6 + $0x2c8] sm:$0xff]
    %v2736 = vld [vmem:[#allocation6 + $0x2d0] sm:$0xff]
    %v2737 = vld [vmem:[#allocation6 + $0x2d8] sm:$0xff]
    %v2738 = vld [vmem:[#allocation6 + $0x2e0] sm:$0xff]
    %v2739 = vld [vmem:[#allocation6 + $0x2e8] sm:$0xff]
    %v2740 = vld [vmem:[#allocation6 + $0x2f0] sm:$0xff]
    %v2741 = vld [vmem:[#allocation6 + $0x2f8] sm:$0xff]
    %v2742 = vld [vmem:[#allocation6 + $0x300] sm:$0xff]
    %v2743 = vld [vmem:[#allocation6 + $0x308] sm:$0xff]
    %v2744 = vld [vmem:[#allocation6 + $0x310] sm:$0xff]
    %v2745 = vld [vmem:[#allocation6 + $0x318] sm:$0xff]
    %v2746 = vld [vmem:[#allocation6 + $0x320] sm:$0xff]
    %v2747 = vld [vmem:[#allocation6 + $0x328] sm:$0xff]
    %v2748 = vld [vmem:[#allocation6 + $0x330] sm:$0xff]
    %v2749 = vld [vmem:[#allocation6 + $0x338] sm:$0xff]
    %v2750 = vld [vmem:[#allocation6 + $0x340] sm:$0xff]
    %v2751 = vld [vmem:[#allocation6 + $0x348] sm:$0xff]
    %v2752 = vld [vmem:[#allocation6 + $0x350] sm:$0xff]
    %v2753 = vld [vmem:[#allocation6 + $0x358] sm:$0xff]
    %v2754 = vld [vmem:[#allocation6 + $0x360] sm:$0xff]
    %v2755 = vld [vmem:[#allocation6 + $0x368] sm:$0xff]
    %v2756 = vld [vmem:[#allocation6 + $0x370] sm:$0xff]
    %v2757 = vld [vmem:[#allocation6 + $0x378] sm:$0xff]
    %v2758 = vld [vmem:[#allocation6 + $0x380] sm:$0xff]
    %v2759 = vld [vmem:[#allocation6 + $0x388] sm:$0xff]
    %v2760 = vld [vmem:[#allocation6 + $0x390] sm:$0xff]
    %v2761 = vld [vmem:[#allocation6 + $0x398] sm:$0xff]
    %v2762 = vld [vmem:[#allocation6 + $0x3a0] sm:$0xff]
    %v2763 = vld [vmem:[#allocation6 + $0x3a8] sm:$0xff]
    %v2764 = vld [vmem:[#allocation6 + $0x3b0] sm:$0xff]
    %v2765 = vld [vmem:[#allocation6 + $0x3b8] sm:$0xff]
    %v2766 = vld [vmem:[#allocation6 + $0x3c0] sm:$0xff]
    %v2767 = vld [vmem:[#allocation6 + $0x3c8] sm:$0xff]
    %v2768 = vld [vmem:[#allocation6 + $0x3d0] sm:$0xff]
    %v2769 = vld [vmem:[#allocation6 + $0x3d8] sm:$0xff]
    %v2770 = vld [vmem:[#allocation6 + $0x3e0] sm:$0xff]
    %v2771 = vld [vmem:[#allocation6 + $0x3e8] sm:$0xff]
    %v2772 = vld [vmem:[#allocation6 + $0x3f0] sm:$0xff]
    %v2773 = vld [vmem:[#allocation6 + $0x3f8] sm:$0xff]
    %2774 = vmatpush.msra.mxu0 %v2770
    %2775 = vmatpush.msra.mxu0 %v2766
    %2776 = vmatpush.msra.mxu0 %v2762
    %2777 = vmatpush.msra.mxu0 %v2758
    %2778 = vmatpush.msra.mxu0 %v2754
    %2779 = vmatpush.msra.mxu0 %v2750
    %2780 = vmatpush.msra.mxu0 %v2746
    %2781 = vmatpush.msra.mxu0 %v2742
    %2782 = vmatpush.msra.mxu0 %v2738
    %2783 = vmatpush.msra.mxu0 %v2734
    %2784 = vmatpush.msra.mxu0 %v2730
    %2785 = vmatpush.msra.mxu0 %v2726
    %2786 = vmatpush.msra.mxu0 %v2722
    %2787 = vmatpush.msra.mxu0 %v2718
    %2788 = vmatpush.msra.mxu0 %v2714
    %2789 = vmatpush.msra.mxu0 %v2710
    %2790 = vmatmul.f32.gmra.mxu0 %v2707
    %v2791 = vpop.f32.mrf.mxu0
    %v2792 = vadd.f32 0.0, %v2791
    %2793 = vdwg.mxu0
    %2794 = vmatpush.msra.mxu0 %v2771
    %2795 = vmatpush.msra.mxu0 %v2767
    %2796 = vmatpush.msra.mxu0 %v2763
    %2797 = vmatpush.msra.mxu0 %v2759
    %2798 = vmatpush.msra.mxu0 %v2755
    %2799 = vmatpush.msra.mxu0 %v2751
    %2800 = vmatpush.msra.mxu0 %v2747
    %2801 = vmatpush.msra.mxu0 %v2743
    %2802 = vmatpush.msra.mxu0 %v2739
    %2803 = vmatpush.msra.mxu0 %v2735
    %2804 = vmatpush.msra.mxu0 %v2731
    %2805 = vmatpush.msra.mxu0 %v2727
    %2806 = vmatpush.msra.mxu0 %v2723
    %2807 = vmatpush.msra.mxu0 %v2719
    %2808 = vmatpush.msra.mxu0 %v2715
    %2809 = vmatpush.msra.mxu0 %v2711
    %2810 = vmatmul.f32.gmra.mxu0 %v2707
    %v2811 = vpop.f32.mrf.mxu0
    %v2812 = vadd.f32 0.0, %v2811
    %2813 = vdwg.mxu0
    %2814 = vmatpush.msra.mxu0 %v2772
    %2815 = vmatpush.msra.mxu0 %v2768
    %2816 = vmatpush.msra.mxu0 %v2764
    %2817 = vmatpush.msra.mxu0 %v2760
    %2818 = vmatpush.msra.mxu0 %v2756
    %2819 = vmatpush.msra.mxu0 %v2752
    %2820 = vmatpush.msra.mxu0 %v2748
    %2821 = vmatpush.msra.mxu0 %v2744
    %2822 = vmatpush.msra.mxu0 %v2740
    %2823 = vmatpush.msra.mxu0 %v2736
    %2824 = vmatpush.msra.mxu0 %v2732
    %2825 = vmatpush.msra.mxu0 %v2728
    %2826 = vmatpush.msra.mxu0 %v2724
    %2827 = vmatpush.msra.mxu0 %v2720
    %2828 = vmatpush.msra.mxu0 %v2716
    %2829 = vmatpush.msra.mxu0 %v2712
    %2830 = vmatmul.f32.gmra.mxu0 %v2707
    %v2831 = vpop.f32.mrf.mxu0
    %v2832 = vadd.f32 0.0, %v2831
    %2833 = vdwg.mxu0
    %2834 = vmatpush.msra.mxu0 %v2773
    %2835 = vmatpush.msra.mxu0 %v2769
    %2836 = vmatpush.msra.mxu0 %v2765
    %2837 = vmatpush.msra.mxu0 %v2761
    %2838 = vmatpush.msra.mxu0 %v2757
    %2839 = vmatpush.msra.mxu0 %v2753
    %2840 = vmatpush.msra.mxu0 %v2749
    %2841 = vmatpush.msra.mxu0 %v2745
    %2842 = vmatpush.msra.mxu0 %v2741
    %2843 = vmatpush.msra.mxu0 %v2737
    %2844 = vmatpush.msra.mxu0 %v2733
    %2845 = vmatpush.msra.mxu0 %v2729
    %2846 = vmatpush.msra.mxu0 %v2725
    %2847 = vmatpush.msra.mxu0 %v2721
    %2848 = vmatpush.msra.mxu0 %v2717
    %2849 = vmatpush.msra.mxu0 %v2713
    %2850 = vmatmul.f32.gmra.mxu0 %v2707
    %v2851 = vpop.f32.mrf.mxu0
    %v2852 = vadd.f32 0.0, %v2851
    %2853 = vdwg.mxu0
    %v2858 = vrot.slane %v2812, 7
    %v2859 = vrot.slane %v2832, 6
    %v2860 = vrot.slane %v2852, 5
    %v2861 = vsel %vm381, %v2792, %v2858
    %v2862 = vsel %vm383, %v2859, %v2860
    %v2863 = vsel %vm385, %v2861, %v2862
    %v2865 = vadd.f32 %v2709, %v2863
    %v2866 = vxor.u32 %v2865, 2147483648
    %v2867 = vmul.f32 %v2866, 1.442695
    %v2868 = vpow.pop %v2867
    %v2869 = vadd.f32 %v2868, 1.0
    %v2870 = vrcp.pop %v2869
    %v2871 = vmul.f32 %v2869, %v2870
    %v2872 = vsub.f32 1.0, %v2871
    %v2873 = vmul.f32 %v2870, %v2872
    %v2874 = vadd.f32 %v2870, %v2873
    %vm2875 = vweird.f32 %v2869
    %vm2876 = vweird.f32 %v2870
    %vm2877 = vmor %vm2875, %vm2876
    %v2878 = vsel %vm2877, %v2870, %v2874
    %v2879 = vand.u32 2147483647, %v2869
    %vm2880 = vcmp.eq.f32.partialorder %v2879, 8.507059e+37
    %v2881 = vand.u32 %v2869, 2147483648
    %v2882 = vor.u32 1.1754944e-38, %v2881
    %v2883 = vsel %vm2880, %v2882, %v2878
    %v2884 = vmul.f32 1.0, %v2883
    %v2886 = vrot.slane %v2865, 2
    %v2888 = vtanh.pop %v2886
    %v2889 = vrot.slane %v2865, 3
    %v2891 = vxor.u32 %v2889, 2147483648
    %v2892 = vmul.f32 %v2891, 1.442695
    %v2893 = vpow.pop %v2892
    %v2894 = vadd.f32 %v2893, 1.0
    %v2895 = vrcp.pop %v2894
    %v2896 = vmul.f32 %v2894, %v2895
    %v2897 = vsub.f32 1.0, %v2896
    %v2898 = vmul.f32 %v2895, %v2897
    %v2899 = vadd.f32 %v2895, %v2898
    %vm2900 = vweird.f32 %v2894
    %vm2901 = vweird.f32 %v2895
    %vm2902 = vmor %vm2900, %vm2901
    %v2903 = vsel %vm2902, %v2895, %v2899
    %v2904 = vand.u32 2147483647, %v2894
    %vm2905 = vcmp.eq.f32.partialorder %v2904, 8.507059e+37
    %v2906 = vand.u32 %v2894, 2147483648
    %v2907 = vor.u32 1.1754944e-38, %v2906
    %v2908 = vsel %vm2905, %v2907, %v2903
    %v2909 = vmul.f32 1.0, %v2908
    %v2911 = vrot.slane %v2884, 1
    %v2913 = vmul.f32 %v2911, %v2705
    %v2914 = vmul.f32 %v2884, %v2888
    %v2915 = vadd.f32 %v2913, %v2914
    %v2916 = vtanh.pop %v2915
    %v2917 = vmul.f32 %v2909, %v2916
    %2918 = vst [vmem:[#allocation2 + $0x3] sm:$0x1] %v2917
    %v2919 = vld [vmem:[%s1075] ss:$8 sm:$0xf]
    %v2920 = vld [vmem:[#allocation6 + $0x200] sm:$0xff]
    %v2921 = vld [vmem:[#allocation6 + $0x208] sm:$0xff]
    %v2922 = vld [vmem:[#allocation6 + $0x210] sm:$0xff]
    %v2923 = vld [vmem:[#allocation6 + $0x218] sm:$0xff]
    %v2924 = vld [vmem:[#allocation6 + $0x220] sm:$0xff]
    %v2925 = vld [vmem:[#allocation6 + $0x228] sm:$0xff]
    %v2926 = vld [vmem:[#allocation6 + $0x230] sm:$0xff]
    %v2927 = vld [vmem:[#allocation6 + $0x238] sm:$0xff]
    %v2928 = vld [vmem:[#allocation6 + $0x240] sm:$0xff]
    %v2929 = vld [vmem:[#allocation6 + $0x248] sm:$0xff]
    %v2930 = vld [vmem:[#allocation6 + $0x250] sm:$0xff]
    %v2931 = vld [vmem:[#allocation6 + $0x258] sm:$0xff]
    %v2932 = vld [vmem:[#allocation6 + $0x260] sm:$0xff]
    %v2933 = vld [vmem:[#allocation6 + $0x268] sm:$0xff]
    %v2934 = vld [vmem:[#allocation6 + $0x270] sm:$0xff]
    %v2935 = vld [vmem:[#allocation6 + $0x278] sm:$0xff]
    %v2936 = vld [vmem:[#allocation6 + $0x280] sm:$0xff]
    %v2937 = vld [vmem:[#allocation6 + $0x288] sm:$0xff]
    %v2938 = vld [vmem:[#allocation6 + $0x290] sm:$0xff]
    %v2939 = vld [vmem:[#allocation6 + $0x298] sm:$0xff]
    %v2940 = vld [vmem:[#allocation6 + $0x2a0] sm:$0xff]
    %v2941 = vld [vmem:[#allocation6 + $0x2a8] sm:$0xff]
    %v2942 = vld [vmem:[#allocation6 + $0x2b0] sm:$0xff]
    %v2943 = vld [vmem:[#allocation6 + $0x2b8] sm:$0xff]
    %v2944 = vld [vmem:[#allocation6 + $0x2c0] sm:$0xff]
    %v2945 = vld [vmem:[#allocation6 + $0x2c8] sm:$0xff]
    %v2946 = vld [vmem:[#allocation6 + $0x2d0] sm:$0xff]
    %v2947 = vld [vmem:[#allocation6 + $0x2d8] sm:$0xff]
    %v2948 = vld [vmem:[#allocation6 + $0x2e0] sm:$0xff]
    %v2949 = vld [vmem:[#allocation6 + $0x2e8] sm:$0xff]
    %v2950 = vld [vmem:[#allocation6 + $0x2f0] sm:$0xff]
    %v2951 = vld [vmem:[#allocation6 + $0x2f8] sm:$0xff]
    %v2952 = vld [vmem:[#allocation6 + $0x300] sm:$0xff]
    %v2953 = vld [vmem:[#allocation6 + $0x308] sm:$0xff]
    %v2954 = vld [vmem:[#allocation6 + $0x310] sm:$0xff]
    %v2955 = vld [vmem:[#allocation6 + $0x318] sm:$0xff]
    %v2956 = vld [vmem:[#allocation6 + $0x320] sm:$0xff]
    %v2957 = vld [vmem:[#allocation6 + $0x328] sm:$0xff]
    %v2958 = vld [vmem:[#allocation6 + $0x330] sm:$0xff]
    %v2959 = vld [vmem:[#allocation6 + $0x338] sm:$0xff]
    %v2960 = vld [vmem:[#allocation6 + $0x340] sm:$0xff]
    %v2961 = vld [vmem:[#allocation6 + $0x348] sm:$0xff]
    %v2962 = vld [vmem:[#allocation6 + $0x350] sm:$0xff]
    %v2963 = vld [vmem:[#allocation6 + $0x358] sm:$0xff]
    %v2964 = vld [vmem:[#allocation6 + $0x360] sm:$0xff]
    %v2965 = vld [vmem:[#allocation6 + $0x368] sm:$0xff]
    %v2966 = vld [vmem:[#allocation6 + $0x370] sm:$0xff]
    %v2967 = vld [vmem:[#allocation6 + $0x378] sm:$0xff]
    %v2968 = vld [vmem:[#allocation6 + $0x380] sm:$0xff]
    %v2969 = vld [vmem:[#allocation6 + $0x388] sm:$0xff]
    %v2970 = vld [vmem:[#allocation6 + $0x390] sm:$0xff]
    %v2971 = vld [vmem:[#allocation6 + $0x398] sm:$0xff]
    %v2972 = vld [vmem:[#allocation6 + $0x3a0] sm:$0xff]
    %v2973 = vld [vmem:[#allocation6 + $0x3a8] sm:$0xff]
    %v2974 = vld [vmem:[#allocation6 + $0x3b0] sm:$0xff]
    %v2975 = vld [vmem:[#allocation6 + $0x3b8] sm:$0xff]
    %v2976 = vld [vmem:[#allocation6 + $0x3c0] sm:$0xff]
    %v2977 = vld [vmem:[#allocation6 + $0x3c8] sm:$0xff]
    %v2978 = vld [vmem:[#allocation6 + $0x3d0] sm:$0xff]
    %v2979 = vld [vmem:[#allocation6 + $0x3d8] sm:$0xff]
    %v2980 = vld [vmem:[#allocation6 + $0x3e0] sm:$0xff]
    %v2981 = vld [vmem:[#allocation6 + $0x3e8] sm:$0xff]
    %v2982 = vld [vmem:[#allocation6 + $0x3f0] sm:$0xff]
    %v2983 = vld [vmem:[#allocation6 + $0x3f8] sm:$0xff]
    %2984 = vmatpush.msra.mxu0 %v2980
    %2985 = vmatpush.msra.mxu0 %v2976
    %2986 = vmatpush.msra.mxu0 %v2972
    %2987 = vmatpush.msra.mxu0 %v2968
    %2988 = vmatpush.msra.mxu0 %v2964
    %2989 = vmatpush.msra.mxu0 %v2960
    %2990 = vmatpush.msra.mxu0 %v2956
    %2991 = vmatpush.msra.mxu0 %v2952
    %2992 = vmatpush.msra.mxu0 %v2948
    %2993 = vmatpush.msra.mxu0 %v2944
    %2994 = vmatpush.msra.mxu0 %v2940
    %2995 = vmatpush.msra.mxu0 %v2936
    %2996 = vmatpush.msra.mxu0 %v2932
    %2997 = vmatpush.msra.mxu0 %v2928
    %2998 = vmatpush.msra.mxu0 %v2924
    %2999 = vmatpush.msra.mxu0 %v2920
    %3000 = vmatmul.f32.gmra.mxu0 %v2917
    %v3001 = vpop.f32.mrf.mxu0
    %v3002 = vadd.f32 0.0, %v3001
    %3003 = vdwg.mxu0
    %3004 = vmatpush.msra.mxu0 %v2981
    %3005 = vmatpush.msra.mxu0 %v2977
    %3006 = vmatpush.msra.mxu0 %v2973
    %3007 = vmatpush.msra.mxu0 %v2969
    %3008 = vmatpush.msra.mxu0 %v2965
    %3009 = vmatpush.msra.mxu0 %v2961
    %3010 = vmatpush.msra.mxu0 %v2957
    %3011 = vmatpush.msra.mxu0 %v2953
    %3012 = vmatpush.msra.mxu0 %v2949
    %3013 = vmatpush.msra.mxu0 %v2945
    %3014 = vmatpush.msra.mxu0 %v2941
    %3015 = vmatpush.msra.mxu0 %v2937
    %3016 = vmatpush.msra.mxu0 %v2933
    %3017 = vmatpush.msra.mxu0 %v2929
    %3018 = vmatpush.msra.mxu0 %v2925
    %3019 = vmatpush.msra.mxu0 %v2921
    %3020 = vmatmul.f32.gmra.mxu0 %v2917
    %v3021 = vpop.f32.mrf.mxu0
    %v3022 = vadd.f32 0.0, %v3021
    %3023 = vdwg.mxu0
    %3024 = vmatpush.msra.mxu0 %v2982
    %3025 = vmatpush.msra.mxu0 %v2978
    %3026 = vmatpush.msra.mxu0 %v2974
    %3027 = vmatpush.msra.mxu0 %v2970
    %3028 = vmatpush.msra.mxu0 %v2966
    %3029 = vmatpush.msra.mxu0 %v2962
    %3030 = vmatpush.msra.mxu0 %v2958
    %3031 = vmatpush.msra.mxu0 %v2954
    %3032 = vmatpush.msra.mxu0 %v2950
    %3033 = vmatpush.msra.mxu0 %v2946
    %3034 = vmatpush.msra.mxu0 %v2942
    %3035 = vmatpush.msra.mxu0 %v2938
    %3036 = vmatpush.msra.mxu0 %v2934
    %3037 = vmatpush.msra.mxu0 %v2930
    %3038 = vmatpush.msra.mxu0 %v2926
    %3039 = vmatpush.msra.mxu0 %v2922
    %3040 = vmatmul.f32.gmra.mxu0 %v2917
    %v3041 = vpop.f32.mrf.mxu0
    %v3042 = vadd.f32 0.0, %v3041
    %3043 = vdwg.mxu0
    %3044 = vmatpush.msra.mxu0 %v2983
    %3045 = vmatpush.msra.mxu0 %v2979
    %3046 = vmatpush.msra.mxu0 %v2975
    %3047 = vmatpush.msra.mxu0 %v2971
    %3048 = vmatpush.msra.mxu0 %v2967
    %3049 = vmatpush.msra.mxu0 %v2963
    %3050 = vmatpush.msra.mxu0 %v2959
    %3051 = vmatpush.msra.mxu0 %v2955
    %3052 = vmatpush.msra.mxu0 %v2951
    %3053 = vmatpush.msra.mxu0 %v2947
    %3054 = vmatpush.msra.mxu0 %v2943
    %3055 = vmatpush.msra.mxu0 %v2939
    %3056 = vmatpush.msra.mxu0 %v2935
    %3057 = vmatpush.msra.mxu0 %v2931
    %3058 = vmatpush.msra.mxu0 %v2927
    %3059 = vmatpush.msra.mxu0 %v2923
    %3060 = vmatmul.f32.gmra.mxu0 %v2917
    %v3061 = vpop.f32.mrf.mxu0
    %v3062 = vadd.f32 0.0, %v3061
    %3063 = vdwg.mxu0
    %v3068 = vrot.slane %v3022, 7
    %v3069 = vrot.slane %v3042, 6
    %v3070 = vrot.slane %v3062, 5
    %v3071 = vsel %vm381, %v3002, %v3068
    %v3072 = vsel %vm383, %v3069, %v3070
    %v3073 = vsel %vm385, %v3071, %v3072
    %v3075 = vadd.f32 %v2919, %v3073
    %v3076 = vxor.u32 %v3075, 2147483648
    %v3077 = vmul.f32 %v3076, 1.442695
    %v3078 = vpow.pop %v3077
    %v3079 = vadd.f32 %v3078, 1.0
    %v3080 = vrcp.pop %v3079
    %v3081 = vmul.f32 %v3079, %v3080
    %v3082 = vsub.f32 1.0, %v3081
    %v3083 = vmul.f32 %v3080, %v3082
    %v3084 = vadd.f32 %v3080, %v3083
    %vm3085 = vweird.f32 %v3079
    %vm3086 = vweird.f32 %v3080
    %vm3087 = vmor %vm3085, %vm3086
    %v3088 = vsel %vm3087, %v3080, %v3084
    %v3089 = vand.u32 2147483647, %v3079
    %vm3090 = vcmp.eq.f32.partialorder %v3089, 8.507059e+37
    %v3091 = vand.u32 %v3079, 2147483648
    %v3092 = vor.u32 1.1754944e-38, %v3091
    %v3093 = vsel %vm3090, %v3092, %v3088
    %v3094 = vmul.f32 1.0, %v3093
    %v3096 = vrot.slane %v3075, 2
    %v3098 = vtanh.pop %v3096
    %v3099 = vrot.slane %v3075, 3
    %v3101 = vxor.u32 %v3099, 2147483648
    %v3102 = vmul.f32 %v3101, 1.442695
    %v3103 = vpow.pop %v3102
    %v3104 = vadd.f32 %v3103, 1.0
    %v3105 = vrcp.pop %v3104
    %v3106 = vmul.f32 %v3104, %v3105
    %v3107 = vsub.f32 1.0, %v3106
    %v3108 = vmul.f32 %v3105, %v3107
    %v3109 = vadd.f32 %v3105, %v3108
    %vm3110 = vweird.f32 %v3104
    %vm3111 = vweird.f32 %v3105
    %vm3112 = vmor %vm3110, %vm3111
    %v3113 = vsel %vm3112, %v3105, %v3109
    %v3114 = vand.u32 2147483647, %v3104
    %vm3115 = vcmp.eq.f32.partialorder %v3114, 8.507059e+37
    %v3116 = vand.u32 %v3104, 2147483648
    %v3117 = vor.u32 1.1754944e-38, %v3116
    %v3118 = vsel %vm3115, %v3117, %v3113
    %v3119 = vmul.f32 1.0, %v3118
    %v3121 = vrot.slane %v3094, 1
    %v3123 = vmul.f32 %v3121, %v2915
    %v3124 = vmul.f32 %v3094, %v3098
    %v3125 = vadd.f32 %v3123, %v3124
    %v3126 = vtanh.pop %v3125
    %v3127 = vmul.f32 %v3119, %v3126
    %3128 = vst [vmem:[#allocation2 + $0x4] sm:$0x1] %v3127
    %v3129 = vld [vmem:[%s1286] ss:$8 sm:$0xf]
    %v3130 = vld [vmem:[#allocation6 + $0x200] sm:$0xff]
    %v3131 = vld [vmem:[#allocation6 + $0x208] sm:$0xff]
    %v3132 = vld [vmem:[#allocation6 + $0x210] sm:$0xff]
    %v3133 = vld [vmem:[#allocation6 + $0x218] sm:$0xff]
    %v3134 = vld [vmem:[#allocation6 + $0x220] sm:$0xff]
    %v3135 = vld [vmem:[#allocation6 + $0x228] sm:$0xff]
    %v3136 = vld [vmem:[#allocation6 + $0x230] sm:$0xff]
    %v3137 = vld [vmem:[#allocation6 + $0x238] sm:$0xff]
    %v3138 = vld [vmem:[#allocation6 + $0x240] sm:$0xff]
    %v3139 = vld [vmem:[#allocation6 + $0x248] sm:$0xff]
    %v3140 = vld [vmem:[#allocation6 + $0x250] sm:$0xff]
    %v3141 = vld [vmem:[#allocation6 + $0x258] sm:$0xff]
    %v3142 = vld [vmem:[#allocation6 + $0x260] sm:$0xff]
    %v3143 = vld [vmem:[#allocation6 + $0x268] sm:$0xff]
    %v3144 = vld [vmem:[#allocation6 + $0x270] sm:$0xff]
    %v3145 = vld [vmem:[#allocation6 + $0x278] sm:$0xff]
    %v3146 = vld [vmem:[#allocation6 + $0x280] sm:$0xff]
    %v3147 = vld [vmem:[#allocation6 + $0x288] sm:$0xff]
    %v3148 = vld [vmem:[#allocation6 + $0x290] sm:$0xff]
    %v3149 = vld [vmem:[#allocation6 + $0x298] sm:$0xff]
    %v3150 = vld [vmem:[#allocation6 + $0x2a0] sm:$0xff]
    %v3151 = vld [vmem:[#allocation6 + $0x2a8] sm:$0xff]
    %v3152 = vld [vmem:[#allocation6 + $0x2b0] sm:$0xff]
    %v3153 = vld [vmem:[#allocation6 + $0x2b8] sm:$0xff]
    %v3154 = vld [vmem:[#allocation6 + $0x2c0] sm:$0xff]
    %v3155 = vld [vmem:[#allocation6 + $0x2c8] sm:$0xff]
    %v3156 = vld [vmem:[#allocation6 + $0x2d0] sm:$0xff]
    %v3157 = vld [vmem:[#allocation6 + $0x2d8] sm:$0xff]
    %v3158 = vld [vmem:[#allocation6 + $0x2e0] sm:$0xff]
    %v3159 = vld [vmem:[#allocation6 + $0x2e8] sm:$0xff]
    %v3160 = vld [vmem:[#allocation6 + $0x2f0] sm:$0xff]
    %v3161 = vld [vmem:[#allocation6 + $0x2f8] sm:$0xff]
    %v3162 = vld [vmem:[#allocation6 + $0x300] sm:$0xff]
    %v3163 = vld [vmem:[#allocation6 + $0x308] sm:$0xff]
    %v3164 = vld [vmem:[#allocation6 + $0x310] sm:$0xff]
    %v3165 = vld [vmem:[#allocation6 + $0x318] sm:$0xff]
    %v3166 = vld [vmem:[#allocation6 + $0x320] sm:$0xff]
    %v3167 = vld [vmem:[#allocation6 + $0x328] sm:$0xff]
    %v3168 = vld [vmem:[#allocation6 + $0x330] sm:$0xff]
    %v3169 = vld [vmem:[#allocation6 + $0x338] sm:$0xff]
    %v3170 = vld [vmem:[#allocation6 + $0x340] sm:$0xff]
    %v3171 = vld [vmem:[#allocation6 + $0x348] sm:$0xff]
    %v3172 = vld [vmem:[#allocation6 + $0x350] sm:$0xff]
    %v3173 = vld [vmem:[#allocation6 + $0x358] sm:$0xff]
    %v3174 = vld [vmem:[#allocation6 + $0x360] sm:$0xff]
    %v3175 = vld [vmem:[#allocation6 + $0x368] sm:$0xff]
    %v3176 = vld [vmem:[#allocation6 + $0x370] sm:$0xff]
    %v3177 = vld [vmem:[#allocation6 + $0x378] sm:$0xff]
    %v3178 = vld [vmem:[#allocation6 + $0x380] sm:$0xff]
    %v3179 = vld [vmem:[#allocation6 + $0x388] sm:$0xff]
    %v3180 = vld [vmem:[#allocation6 + $0x390] sm:$0xff]
    %v3181 = vld [vmem:[#allocation6 + $0x398] sm:$0xff]
    %v3182 = vld [vmem:[#allocation6 + $0x3a0] sm:$0xff]
    %v3183 = vld [vmem:[#allocation6 + $0x3a8] sm:$0xff]
    %v3184 = vld [vmem:[#allocation6 + $0x3b0] sm:$0xff]
    %v3185 = vld [vmem:[#allocation6 + $0x3b8] sm:$0xff]
    %v3186 = vld [vmem:[#allocation6 + $0x3c0] sm:$0xff]
    %v3187 = vld [vmem:[#allocation6 + $0x3c8] sm:$0xff]
    %v3188 = vld [vmem:[#allocation6 + $0x3d0] sm:$0xff]
    %v3189 = vld [vmem:[#allocation6 + $0x3d8] sm:$0xff]
    %v3190 = vld [vmem:[#allocation6 + $0x3e0] sm:$0xff]
    %v3191 = vld [vmem:[#allocation6 + $0x3e8] sm:$0xff]
    %v3192 = vld [vmem:[#allocation6 + $0x3f0] sm:$0xff]
    %v3193 = vld [vmem:[#allocation6 + $0x3f8] sm:$0xff]
    %3194 = vmatpush.msra.mxu0 %v3190
    %3195 = vmatpush.msra.mxu0 %v3186
    %3196 = vmatpush.msra.mxu0 %v3182
    %3197 = vmatpush.msra.mxu0 %v3178
    %3198 = vmatpush.msra.mxu0 %v3174
    %3199 = vmatpush.msra.mxu0 %v3170
    %3200 = vmatpush.msra.mxu0 %v3166
    %3201 = vmatpush.msra.mxu0 %v3162
    %3202 = vmatpush.msra.mxu0 %v3158
    %3203 = vmatpush.msra.mxu0 %v3154
    %3204 = vmatpush.msra.mxu0 %v3150
    %3205 = vmatpush.msra.mxu0 %v3146
    %3206 = vmatpush.msra.mxu0 %v3142
    %3207 = vmatpush.msra.mxu0 %v3138
    %3208 = vmatpush.msra.mxu0 %v3134
    %3209 = vmatpush.msra.mxu0 %v3130
    %3210 = vmatmul.f32.gmra.mxu0 %v3127
    %v3211 = vpop.f32.mrf.mxu0
    %v3212 = vadd.f32 0.0, %v3211
    %3213 = vdwg.mxu0
    %3214 = vmatpush.msra.mxu0 %v3191
    %3215 = vmatpush.msra.mxu0 %v3187
    %3216 = vmatpush.msra.mxu0 %v3183
    %3217 = vmatpush.msra.mxu0 %v3179
    %3218 = vmatpush.msra.mxu0 %v3175
    %3219 = vmatpush.msra.mxu0 %v3171
    %3220 = vmatpush.msra.mxu0 %v3167
    %3221 = vmatpush.msra.mxu0 %v3163
    %3222 = vmatpush.msra.mxu0 %v3159
    %3223 = vmatpush.msra.mxu0 %v3155
    %3224 = vmatpush.msra.mxu0 %v3151
    %3225 = vmatpush.msra.mxu0 %v3147
    %3226 = vmatpush.msra.mxu0 %v3143
    %3227 = vmatpush.msra.mxu0 %v3139
    %3228 = vmatpush.msra.mxu0 %v3135
    %3229 = vmatpush.msra.mxu0 %v3131
    %3230 = vmatmul.f32.gmra.mxu0 %v3127
    %v3231 = vpop.f32.mrf.mxu0
    %v3232 = vadd.f32 0.0, %v3231
    %3233 = vdwg.mxu0
    %3234 = vmatpush.msra.mxu0 %v3192
    %3235 = vmatpush.msra.mxu0 %v3188
    %3236 = vmatpush.msra.mxu0 %v3184
    %3237 = vmatpush.msra.mxu0 %v3180
    %3238 = vmatpush.msra.mxu0 %v3176
    %3239 = vmatpush.msra.mxu0 %v3172
    %3240 = vmatpush.msra.mxu0 %v3168
    %3241 = vmatpush.msra.mxu0 %v3164
    %3242 = vmatpush.msra.mxu0 %v3160
    %3243 = vmatpush.msra.mxu0 %v3156
    %3244 = vmatpush.msra.mxu0 %v3152
    %3245 = vmatpush.msra.mxu0 %v3148
    %3246 = vmatpush.msra.mxu0 %v3144
    %3247 = vmatpush.msra.mxu0 %v3140
    %3248 = vmatpush.msra.mxu0 %v3136
    %3249 = vmatpush.msra.mxu0 %v3132
    %3250 = vmatmul.f32.gmra.mxu0 %v3127
    %v3251 = vpop.f32.mrf.mxu0
    %v3252 = vadd.f32 0.0, %v3251
    %3253 = vdwg.mxu0
    %3254 = vmatpush.msra.mxu0 %v3193
    %3255 = vmatpush.msra.mxu0 %v3189
    %3256 = vmatpush.msra.mxu0 %v3185
    %3257 = vmatpush.msra.mxu0 %v3181
    %3258 = vmatpush.msra.mxu0 %v3177
    %3259 = vmatpush.msra.mxu0 %v3173
    %3260 = vmatpush.msra.mxu0 %v3169
    %3261 = vmatpush.msra.mxu0 %v3165
    %3262 = vmatpush.msra.mxu0 %v3161
    %3263 = vmatpush.msra.mxu0 %v3157
    %3264 = vmatpush.msra.mxu0 %v3153
    %3265 = vmatpush.msra.mxu0 %v3149
    %3266 = vmatpush.msra.mxu0 %v3145
    %3267 = vmatpush.msra.mxu0 %v3141
    %3268 = vmatpush.msra.mxu0 %v3137
    %3269 = vmatpush.msra.mxu0 %v3133
    %3270 = vmatmul.f32.gmra.mxu0 %v3127
    %v3271 = vpop.f32.mrf.mxu0
    %v3272 = vadd.f32 0.0, %v3271
    %3273 = vdwg.mxu0
    %v3278 = vrot.slane %v3232, 7
    %v3279 = vrot.slane %v3252, 6
    %v3280 = vrot.slane %v3272, 5
    %v3281 = vsel %vm381, %v3212, %v3278
    %v3282 = vsel %vm383, %v3279, %v3280
    %v3283 = vsel %vm385, %v3281, %v3282
    %v3285 = vadd.f32 %v3129, %v3283
    %v3286 = vxor.u32 %v3285, 2147483648
    %v3287 = vmul.f32 %v3286, 1.442695
    %v3288 = vpow.pop %v3287
    %v3289 = vadd.f32 %v3288, 1.0
    %v3290 = vrcp.pop %v3289
    %v3291 = vmul.f32 %v3289, %v3290
    %v3292 = vsub.f32 1.0, %v3291
    %v3293 = vmul.f32 %v3290, %v3292
    %v3294 = vadd.f32 %v3290, %v3293
    %vm3295 = vweird.f32 %v3289
    %vm3296 = vweird.f32 %v3290
    %vm3297 = vmor %vm3295, %vm3296
    %v3298 = vsel %vm3297, %v3290, %v3294
    %v3299 = vand.u32 2147483647, %v3289
    %vm3300 = vcmp.eq.f32.partialorder %v3299, 8.507059e+37
    %v3301 = vand.u32 %v3289, 2147483648
    %v3302 = vor.u32 1.1754944e-38, %v3301
    %v3303 = vsel %vm3300, %v3302, %v3298
    %v3304 = vmul.f32 1.0, %v3303
    %v3306 = vrot.slane %v3285, 2
    %v3308 = vtanh.pop %v3306
    %v3309 = vrot.slane %v3285, 3
    %v3311 = vxor.u32 %v3309, 2147483648
    %v3312 = vmul.f32 %v3311, 1.442695
    %v3313 = vpow.pop %v3312
    %v3314 = vadd.f32 %v3313, 1.0
    %v3315 = vrcp.pop %v3314
    %v3316 = vmul.f32 %v3314, %v3315
    %v3317 = vsub.f32 1.0, %v3316
    %v3318 = vmul.f32 %v3315, %v3317
    %v3319 = vadd.f32 %v3315, %v3318
    %vm3320 = vweird.f32 %v3314
    %vm3321 = vweird.f32 %v3315
    %vm3322 = vmor %vm3320, %vm3321
    %v3323 = vsel %vm3322, %v3315, %v3319
    %v3324 = vand.u32 2147483647, %v3314
    %vm3325 = vcmp.eq.f32.partialorder %v3324, 8.507059e+37
    %v3326 = vand.u32 %v3314, 2147483648
    %v3327 = vor.u32 1.1754944e-38, %v3326
    %v3328 = vsel %vm3325, %v3327, %v3323
    %v3329 = vmul.f32 1.0, %v3328
    %v3331 = vrot.slane %v3304, 1
    %v3333 = vmul.f32 %v3331, %v3125
    %v3334 = vmul.f32 %v3304, %v3308
    %v3335 = vadd.f32 %v3333, %v3334
    %v3336 = vtanh.pop %v3335
    %v3337 = vmul.f32 %v3329, %v3336
    %3338 = vst [vmem:[#allocation2 + $0x5] sm:$0x1] %v3337
    %v3339 = vld [vmem:[%s1497] ss:$8 sm:$0xf]
    %v3340 = vld [vmem:[#allocation6 + $0x200] sm:$0xff]
    %v3341 = vld [vmem:[#allocation6 + $0x208] sm:$0xff]
    %v3342 = vld [vmem:[#allocation6 + $0x210] sm:$0xff]
    %v3343 = vld [vmem:[#allocation6 + $0x218] sm:$0xff]
    %v3344 = vld [vmem:[#allocation6 + $0x220] sm:$0xff]
    %v3345 = vld [vmem:[#allocation6 + $0x228] sm:$0xff]
    %v3346 = vld [vmem:[#allocation6 + $0x230] sm:$0xff]
    %v3347 = vld [vmem:[#allocation6 + $0x238] sm:$0xff]
    %v3348 = vld [vmem:[#allocation6 + $0x240] sm:$0xff]
    %v3349 = vld [vmem:[#allocation6 + $0x248] sm:$0xff]
    %v3350 = vld [vmem:[#allocation6 + $0x250] sm:$0xff]
    %v3351 = vld [vmem:[#allocation6 + $0x258] sm:$0xff]
    %v3352 = vld [vmem:[#allocation6 + $0x260] sm:$0xff]
    %v3353 = vld [vmem:[#allocation6 + $0x268] sm:$0xff]
    %v3354 = vld [vmem:[#allocation6 + $0x270] sm:$0xff]
    %v3355 = vld [vmem:[#allocation6 + $0x278] sm:$0xff]
    %v3356 = vld [vmem:[#allocation6 + $0x280] sm:$0xff]
    %v3357 = vld [vmem:[#allocation6 + $0x288] sm:$0xff]
    %v3358 = vld [vmem:[#allocation6 + $0x290] sm:$0xff]
    %v3359 = vld [vmem:[#allocation6 + $0x298] sm:$0xff]
    %v3360 = vld [vmem:[#allocation6 + $0x2a0] sm:$0xff]
    %v3361 = vld [vmem:[#allocation6 + $0x2a8] sm:$0xff]
    %v3362 = vld [vmem:[#allocation6 + $0x2b0] sm:$0xff]
    %v3363 = vld [vmem:[#allocation6 + $0x2b8] sm:$0xff]
    %v3364 = vld [vmem:[#allocation6 + $0x2c0] sm:$0xff]
    %v3365 = vld [vmem:[#allocation6 + $0x2c8] sm:$0xff]
    %v3366 = vld [vmem:[#allocation6 + $0x2d0] sm:$0xff]
    %v3367 = vld [vmem:[#allocation6 + $0x2d8] sm:$0xff]
    %v3368 = vld [vmem:[#allocation6 + $0x2e0] sm:$0xff]
    %v3369 = vld [vmem:[#allocation6 + $0x2e8] sm:$0xff]
    %v3370 = vld [vmem:[#allocation6 + $0x2f0] sm:$0xff]
    %v3371 = vld [vmem:[#allocation6 + $0x2f8] sm:$0xff]
    %v3372 = vld [vmem:[#allocation6 + $0x300] sm:$0xff]
    %v3373 = vld [vmem:[#allocation6 + $0x308] sm:$0xff]
    %v3374 = vld [vmem:[#allocation6 + $0x310] sm:$0xff]
    %v3375 = vld [vmem:[#allocation6 + $0x318] sm:$0xff]
    %v3376 = vld [vmem:[#allocation6 + $0x320] sm:$0xff]
    %v3377 = vld [vmem:[#allocation6 + $0x328] sm:$0xff]
    %v3378 = vld [vmem:[#allocation6 + $0x330] sm:$0xff]
    %v3379 = vld [vmem:[#allocation6 + $0x338] sm:$0xff]
    %v3380 = vld [vmem:[#allocation6 + $0x340] sm:$0xff]
    %v3381 = vld [vmem:[#allocation6 + $0x348] sm:$0xff]
    %v3382 = vld [vmem:[#allocation6 + $0x350] sm:$0xff]
    %v3383 = vld [vmem:[#allocation6 + $0x358] sm:$0xff]
    %v3384 = vld [vmem:[#allocation6 + $0x360] sm:$0xff]
    %v3385 = vld [vmem:[#allocation6 + $0x368] sm:$0xff]
    %v3386 = vld [vmem:[#allocation6 + $0x370] sm:$0xff]
    %v3387 = vld [vmem:[#allocation6 + $0x378] sm:$0xff]
    %v3388 = vld [vmem:[#allocation6 + $0x380] sm:$0xff]
    %v3389 = vld [vmem:[#allocation6 + $0x388] sm:$0xff]
    %v3390 = vld [vmem:[#allocation6 + $0x390] sm:$0xff]
    %v3391 = vld [vmem:[#allocation6 + $0x398] sm:$0xff]
    %v3392 = vld [vmem:[#allocation6 + $0x3a0] sm:$0xff]
    %v3393 = vld [vmem:[#allocation6 + $0x3a8] sm:$0xff]
    %v3394 = vld [vmem:[#allocation6 + $0x3b0] sm:$0xff]
    %v3395 = vld [vmem:[#allocation6 + $0x3b8] sm:$0xff]
    %v3396 = vld [vmem:[#allocation6 + $0x3c0] sm:$0xff]
    %v3397 = vld [vmem:[#allocation6 + $0x3c8] sm:$0xff]
    %v3398 = vld [vmem:[#allocation6 + $0x3d0] sm:$0xff]
    %v3399 = vld [vmem:[#allocation6 + $0x3d8] sm:$0xff]
    %v3400 = vld [vmem:[#allocation6 + $0x3e0] sm:$0xff]
    %v3401 = vld [vmem:[#allocation6 + $0x3e8] sm:$0xff]
    %v3402 = vld [vmem:[#allocation6 + $0x3f0] sm:$0xff]
    %v3403 = vld [vmem:[#allocation6 + $0x3f8] sm:$0xff]
    %3404 = vmatpush.msra.mxu0 %v3400
    %3405 = vmatpush.msra.mxu0 %v3396
    %3406 = vmatpush.msra.mxu0 %v3392
    %3407 = vmatpush.msra.mxu0 %v3388
    %3408 = vmatpush.msra.mxu0 %v3384
    %3409 = vmatpush.msra.mxu0 %v3380
    %3410 = vmatpush.msra.mxu0 %v3376
    %3411 = vmatpush.msra.mxu0 %v3372
    %3412 = vmatpush.msra.mxu0 %v3368
    %3413 = vmatpush.msra.mxu0 %v3364
    %3414 = vmatpush.msra.mxu0 %v3360
    %3415 = vmatpush.msra.mxu0 %v3356
    %3416 = vmatpush.msra.mxu0 %v3352
    %3417 = vmatpush.msra.mxu0 %v3348
    %3418 = vmatpush.msra.mxu0 %v3344
    %3419 = vmatpush.msra.mxu0 %v3340
    %3420 = vmatmul.f32.gmra.mxu0 %v3337
    %v3421 = vpop.f32.mrf.mxu0
    %v3422 = vadd.f32 0.0, %v3421
    %3423 = vdwg.mxu0
    %3424 = vmatpush.msra.mxu0 %v3401
    %3425 = vmatpush.msra.mxu0 %v3397
    %3426 = vmatpush.msra.mxu0 %v3393
    %3427 = vmatpush.msra.mxu0 %v3389
    %3428 = vmatpush.msra.mxu0 %v3385
    %3429 = vmatpush.msra.mxu0 %v3381
    %3430 = vmatpush.msra.mxu0 %v3377
    %3431 = vmatpush.msra.mxu0 %v3373
    %3432 = vmatpush.msra.mxu0 %v3369
    %3433 = vmatpush.msra.mxu0 %v3365
    %3434 = vmatpush.msra.mxu0 %v3361
    %3435 = vmatpush.msra.mxu0 %v3357
    %3436 = vmatpush.msra.mxu0 %v3353
    %3437 = vmatpush.msra.mxu0 %v3349
    %3438 = vmatpush.msra.mxu0 %v3345
    %3439 = vmatpush.msra.mxu0 %v3341
    %3440 = vmatmul.f32.gmra.mxu0 %v3337
    %v3441 = vpop.f32.mrf.mxu0
    %v3442 = vadd.f32 0.0, %v3441
    %3443 = vdwg.mxu0
    %3444 = vmatpush.msra.mxu0 %v3402
    %3445 = vmatpush.msra.mxu0 %v3398
    %3446 = vmatpush.msra.mxu0 %v3394
    %3447 = vmatpush.msra.mxu0 %v3390
    %3448 = vmatpush.msra.mxu0 %v3386
    %3449 = vmatpush.msra.mxu0 %v3382
    %3450 = vmatpush.msra.mxu0 %v3378
    %3451 = vmatpush.msra.mxu0 %v3374
    %3452 = vmatpush.msra.mxu0 %v3370
    %3453 = vmatpush.msra.mxu0 %v3366
    %3454 = vmatpush.msra.mxu0 %v3362
    %3455 = vmatpush.msra.mxu0 %v3358
    %3456 = vmatpush.msra.mxu0 %v3354
    %3457 = vmatpush.msra.mxu0 %v3350
    %3458 = vmatpush.msra.mxu0 %v3346
    %3459 = vmatpush.msra.mxu0 %v3342
    %3460 = vmatmul.f32.gmra.mxu0 %v3337
    %v3461 = vpop.f32.mrf.mxu0
    %v3462 = vadd.f32 0.0, %v3461
    %3463 = vdwg.mxu0
    %3464 = vmatpush.msra.mxu0 %v3403
    %3465 = vmatpush.msra.mxu0 %v3399
    %3466 = vmatpush.msra.mxu0 %v3395
    %3467 = vmatpush.msra.mxu0 %v3391
    %3468 = vmatpush.msra.mxu0 %v3387
    %3469 = vmatpush.msra.mxu0 %v3383
    %3470 = vmatpush.msra.mxu0 %v3379
    %3471 = vmatpush.msra.mxu0 %v3375
    %3472 = vmatpush.msra.mxu0 %v3371
    %3473 = vmatpush.msra.mxu0 %v3367
    %3474 = vmatpush.msra.mxu0 %v3363
    %3475 = vmatpush.msra.mxu0 %v3359
    %3476 = vmatpush.msra.mxu0 %v3355
    %3477 = vmatpush.msra.mxu0 %v3351
    %3478 = vmatpush.msra.mxu0 %v3347
    %3479 = vmatpush.msra.mxu0 %v3343
    %3480 = vmatmul.f32.gmra.mxu0 %v3337
    %v3481 = vpop.f32.mrf.mxu0
    %v3482 = vadd.f32 0.0, %v3481
    %3483 = vdwg.mxu0
    %v3488 = vrot.slane %v3442, 7
    %v3489 = vrot.slane %v3462, 6
    %v3490 = vrot.slane %v3482, 5
    %v3491 = vsel %vm381, %v3422, %v3488
    %v3492 = vsel %vm383, %v3489, %v3490
    %v3493 = vsel %vm385, %v3491, %v3492
    %v3495 = vadd.f32 %v3339, %v3493
    %v3496 = vxor.u32 %v3495, 2147483648
    %v3497 = vmul.f32 %v3496, 1.442695
    %v3498 = vpow.pop %v3497
    %v3499 = vadd.f32 %v3498, 1.0
    %v3500 = vrcp.pop %v3499
    %v3501 = vmul.f32 %v3499, %v3500
    %v3502 = vsub.f32 1.0, %v3501
    %v3503 = vmul.f32 %v3500, %v3502
    %v3504 = vadd.f32 %v3500, %v3503
    %vm3505 = vweird.f32 %v3499
    %vm3506 = vweird.f32 %v3500
    %vm3507 = vmor %vm3505, %vm3506
    %v3508 = vsel %vm3507, %v3500, %v3504
    %v3509 = vand.u32 2147483647, %v3499
    %vm3510 = vcmp.eq.f32.partialorder %v3509, 8.507059e+37
    %v3511 = vand.u32 %v3499, 2147483648
    %v3512 = vor.u32 1.1754944e-38, %v3511
    %v3513 = vsel %vm3510, %v3512, %v3508
    %v3514 = vmul.f32 1.0, %v3513
    %v3516 = vrot.slane %v3495, 2
    %v3518 = vtanh.pop %v3516
    %v3519 = vrot.slane %v3495, 3
    %v3521 = vxor.u32 %v3519, 2147483648
    %v3522 = vmul.f32 %v3521, 1.442695
    %v3523 = vpow.pop %v3522
    %v3524 = vadd.f32 %v3523, 1.0
    %v3525 = vrcp.pop %v3524
    %v3526 = vmul.f32 %v3524, %v3525
    %v3527 = vsub.f32 1.0, %v3526
    %v3528 = vmul.f32 %v3525, %v3527
    %v3529 = vadd.f32 %v3525, %v3528
    %vm3530 = vweird.f32 %v3524
    %vm3531 = vweird.f32 %v3525
    %vm3532 = vmor %vm3530, %vm3531
    %v3533 = vsel %vm3532, %v3525, %v3529
    %v3534 = vand.u32 2147483647, %v3524
    %vm3535 = vcmp.eq.f32.partialorder %v3534, 8.507059e+37
    %v3536 = vand.u32 %v3524, 2147483648
    %v3537 = vor.u32 1.1754944e-38, %v3536
    %v3538 = vsel %vm3535, %v3537, %v3533
    %v3539 = vmul.f32 1.0, %v3538
    %v3541 = vrot.slane %v3514, 1
    %v3543 = vmul.f32 %v3541, %v3335
    %v3544 = vmul.f32 %v3514, %v3518
    %v3545 = vadd.f32 %v3543, %v3544
    %v3546 = vtanh.pop %v3545
    %v3547 = vmul.f32 %v3539, %v3546
    %3548 = vst [vmem:[#allocation2 + $0x6] sm:$0x1] %v3547
    %v3549 = vld [vmem:[%s1708] ss:$8 sm:$0xf]
    %v3550 = vld [vmem:[#allocation6 + $0x200] sm:$0xff]
    %v3551 = vld [vmem:[#allocation6 + $0x208] sm:$0xff]
    %v3552 = vld [vmem:[#allocation6 + $0x210] sm:$0xff]
    %v3553 = vld [vmem:[#allocation6 + $0x218] sm:$0xff]
    %v3554 = vld [vmem:[#allocation6 + $0x220] sm:$0xff]
    %v3555 = vld [vmem:[#allocation6 + $0x228] sm:$0xff]
    %v3556 = vld [vmem:[#allocation6 + $0x230] sm:$0xff]
    %v3557 = vld [vmem:[#allocation6 + $0x238] sm:$0xff]
    %v3558 = vld [vmem:[#allocation6 + $0x240] sm:$0xff]
    %v3559 = vld [vmem:[#allocation6 + $0x248] sm:$0xff]
    %v3560 = vld [vmem:[#allocation6 + $0x250] sm:$0xff]
    %v3561 = vld [vmem:[#allocation6 + $0x258] sm:$0xff]
    %v3562 = vld [vmem:[#allocation6 + $0x260] sm:$0xff]
    %v3563 = vld [vmem:[#allocation6 + $0x268] sm:$0xff]
    %v3564 = vld [vmem:[#allocation6 + $0x270] sm:$0xff]
    %v3565 = vld [vmem:[#allocation6 + $0x278] sm:$0xff]
    %v3566 = vld [vmem:[#allocation6 + $0x280] sm:$0xff]
    %v3567 = vld [vmem:[#allocation6 + $0x288] sm:$0xff]
    %v3568 = vld [vmem:[#allocation6 + $0x290] sm:$0xff]
    %v3569 = vld [vmem:[#allocation6 + $0x298] sm:$0xff]
    %v3570 = vld [vmem:[#allocation6 + $0x2a0] sm:$0xff]
    %v3571 = vld [vmem:[#allocation6 + $0x2a8] sm:$0xff]
    %v3572 = vld [vmem:[#allocation6 + $0x2b0] sm:$0xff]
    %v3573 = vld [vmem:[#allocation6 + $0x2b8] sm:$0xff]
    %v3574 = vld [vmem:[#allocation6 + $0x2c0] sm:$0xff]
    %v3575 = vld [vmem:[#allocation6 + $0x2c8] sm:$0xff]
    %v3576 = vld [vmem:[#allocation6 + $0x2d0] sm:$0xff]
    %v3577 = vld [vmem:[#allocation6 + $0x2d8] sm:$0xff]
    %v3578 = vld [vmem:[#allocation6 + $0x2e0] sm:$0xff]
    %v3579 = vld [vmem:[#allocation6 + $0x2e8] sm:$0xff]
    %v3580 = vld [vmem:[#allocation6 + $0x2f0] sm:$0xff]
    %v3581 = vld [vmem:[#allocation6 + $0x2f8] sm:$0xff]
    %v3582 = vld [vmem:[#allocation6 + $0x300] sm:$0xff]
    %v3583 = vld [vmem:[#allocation6 + $0x308] sm:$0xff]
    %v3584 = vld [vmem:[#allocation6 + $0x310] sm:$0xff]
    %v3585 = vld [vmem:[#allocation6 + $0x318] sm:$0xff]
    %v3586 = vld [vmem:[#allocation6 + $0x320] sm:$0xff]
    %v3587 = vld [vmem:[#allocation6 + $0x328] sm:$0xff]
    %v3588 = vld [vmem:[#allocation6 + $0x330] sm:$0xff]
    %v3589 = vld [vmem:[#allocation6 + $0x338] sm:$0xff]
    %v3590 = vld [vmem:[#allocation6 + $0x340] sm:$0xff]
    %v3591 = vld [vmem:[#allocation6 + $0x348] sm:$0xff]
    %v3592 = vld [vmem:[#allocation6 + $0x350] sm:$0xff]
    %v3593 = vld [vmem:[#allocation6 + $0x358] sm:$0xff]
    %v3594 = vld [vmem:[#allocation6 + $0x360] sm:$0xff]
    %v3595 = vld [vmem:[#allocation6 + $0x368] sm:$0xff]
    %v3596 = vld [vmem:[#allocation6 + $0x370] sm:$0xff]
    %v3597 = vld [vmem:[#allocation6 + $0x378] sm:$0xff]
    %v3598 = vld [vmem:[#allocation6 + $0x380] sm:$0xff]
    %v3599 = vld [vmem:[#allocation6 + $0x388] sm:$0xff]
    %v3600 = vld [vmem:[#allocation6 + $0x390] sm:$0xff]
    %v3601 = vld [vmem:[#allocation6 + $0x398] sm:$0xff]
    %v3602 = vld [vmem:[#allocation6 + $0x3a0] sm:$0xff]
    %v3603 = vld [vmem:[#allocation6 + $0x3a8] sm:$0xff]
    %v3604 = vld [vmem:[#allocation6 + $0x3b0] sm:$0xff]
    %v3605 = vld [vmem:[#allocation6 + $0x3b8] sm:$0xff]
    %v3606 = vld [vmem:[#allocation6 + $0x3c0] sm:$0xff]
    %v3607 = vld [vmem:[#allocation6 + $0x3c8] sm:$0xff]
    %v3608 = vld [vmem:[#allocation6 + $0x3d0] sm:$0xff]
    %v3609 = vld [vmem:[#allocation6 + $0x3d8] sm:$0xff]
    %v3610 = vld [vmem:[#allocation6 + $0x3e0] sm:$0xff]
    %v3611 = vld [vmem:[#allocation6 + $0x3e8] sm:$0xff]
    %v3612 = vld [vmem:[#allocation6 + $0x3f0] sm:$0xff]
    %v3613 = vld [vmem:[#allocation6 + $0x3f8] sm:$0xff]
    %3614 = vmatpush.msra.mxu0 %v3610
    %3615 = vmatpush.msra.mxu0 %v3606
    %3616 = vmatpush.msra.mxu0 %v3602
    %3617 = vmatpush.msra.mxu0 %v3598
    %3618 = vmatpush.msra.mxu0 %v3594
    %3619 = vmatpush.msra.mxu0 %v3590
    %3620 = vmatpush.msra.mxu0 %v3586
    %3621 = vmatpush.msra.mxu0 %v3582
    %3622 = vmatpush.msra.mxu0 %v3578
    %3623 = vmatpush.msra.mxu0 %v3574
    %3624 = vmatpush.msra.mxu0 %v3570
    %3625 = vmatpush.msra.mxu0 %v3566
    %3626 = vmatpush.msra.mxu0 %v3562
    %3627 = vmatpush.msra.mxu0 %v3558
    %3628 = vmatpush.msra.mxu0 %v3554
    %3629 = vmatpush.msra.mxu0 %v3550
    %3630 = vmatmul.f32.gmra.mxu0 %v3547
    %v3631 = vpop.f32.mrf.mxu0
    %v3632 = vadd.f32 0.0, %v3631
    %3633 = vdwg.mxu0
    %3634 = vmatpush.msra.mxu0 %v3611
    %3635 = vmatpush.msra.mxu0 %v3607
    %3636 = vmatpush.msra.mxu0 %v3603
    %3637 = vmatpush.msra.mxu0 %v3599
    %3638 = vmatpush.msra.mxu0 %v3595
    %3639 = vmatpush.msra.mxu0 %v3591
    %3640 = vmatpush.msra.mxu0 %v3587
    %3641 = vmatpush.msra.mxu0 %v3583
    %3642 = vmatpush.msra.mxu0 %v3579
    %3643 = vmatpush.msra.mxu0 %v3575
    %3644 = vmatpush.msra.mxu0 %v3571
    %3645 = vmatpush.msra.mxu0 %v3567
    %3646 = vmatpush.msra.mxu0 %v3563
    %3647 = vmatpush.msra.mxu0 %v3559
    %3648 = vmatpush.msra.mxu0 %v3555
    %3649 = vmatpush.msra.mxu0 %v3551
    %3650 = vmatmul.f32.gmra.mxu0 %v3547
    %v3651 = vpop.f32.mrf.mxu0
    %v3652 = vadd.f32 0.0, %v3651
    %3653 = vdwg.mxu0
    %3654 = vmatpush.msra.mxu0 %v3612
    %3655 = vmatpush.msra.mxu0 %v3608
    %3656 = vmatpush.msra.mxu0 %v3604
    %3657 = vmatpush.msra.mxu0 %v3600
    %3658 = vmatpush.msra.mxu0 %v3596
    %3659 = vmatpush.msra.mxu0 %v3592
    %3660 = vmatpush.msra.mxu0 %v3588
    %3661 = vmatpush.msra.mxu0 %v3584
    %3662 = vmatpush.msra.mxu0 %v3580
    %3663 = vmatpush.msra.mxu0 %v3576
    %3664 = vmatpush.msra.mxu0 %v3572
    %3665 = vmatpush.msra.mxu0 %v3568
    %3666 = vmatpush.msra.mxu0 %v3564
    %3667 = vmatpush.msra.mxu0 %v3560
    %3668 = vmatpush.msra.mxu0 %v3556
    %3669 = vmatpush.msra.mxu0 %v3552
    %3670 = vmatmul.f32.gmra.mxu0 %v3547
    %v3671 = vpop.f32.mrf.mxu0
    %v3672 = vadd.f32 0.0, %v3671
    %3673 = vdwg.mxu0
    %3674 = vmatpush.msra.mxu0 %v3613
    %3675 = vmatpush.msra.mxu0 %v3609
    %3676 = vmatpush.msra.mxu0 %v3605
    %3677 = vmatpush.msra.mxu0 %v3601
    %3678 = vmatpush.msra.mxu0 %v3597
    %3679 = vmatpush.msra.mxu0 %v3593
    %3680 = vmatpush.msra.mxu0 %v3589
    %3681 = vmatpush.msra.mxu0 %v3585
    %3682 = vmatpush.msra.mxu0 %v3581
    %3683 = vmatpush.msra.mxu0 %v3577
    %3684 = vmatpush.msra.mxu0 %v3573
    %3685 = vmatpush.msra.mxu0 %v3569
    %3686 = vmatpush.msra.mxu0 %v3565
    %3687 = vmatpush.msra.mxu0 %v3561
    %3688 = vmatpush.msra.mxu0 %v3557
    %3689 = vmatpush.msra.mxu0 %v3553
    %3690 = vmatmul.f32.gmra.mxu0 %v3547
    %v3691 = vpop.f32.mrf.mxu0
    %v3692 = vadd.f32 0.0, %v3691
    %3693 = vdwg.mxu0
    %v3698 = vrot.slane %v3652, 7
    %v3699 = vrot.slane %v3672, 6
    %v3700 = vrot.slane %v3692, 5
    %v3701 = vsel %vm381, %v3632, %v3698
    %v3702 = vsel %vm383, %v3699, %v3700
    %v3703 = vsel %vm385, %v3701, %v3702
    %v3705 = vadd.f32 %v3549, %v3703
    %v3706 = vxor.u32 %v3705, 2147483648
    %v3707 = vmul.f32 %v3706, 1.442695
    %v3708 = vpow.pop %v3707
    %v3709 = vadd.f32 %v3708, 1.0
    %v3710 = vrcp.pop %v3709
    %v3711 = vmul.f32 %v3709, %v3710
    %v3712 = vsub.f32 1.0, %v3711
    %v3713 = vmul.f32 %v3710, %v3712
    %v3714 = vadd.f32 %v3710, %v3713
    %vm3715 = vweird.f32 %v3709
    %vm3716 = vweird.f32 %v3710
    %vm3717 = vmor %vm3715, %vm3716
    %v3718 = vsel %vm3717, %v3710, %v3714
    %v3719 = vand.u32 2147483647, %v3709
    %vm3720 = vcmp.eq.f32.partialorder %v3719, 8.507059e+37
    %v3721 = vand.u32 %v3709, 2147483648
    %v3722 = vor.u32 1.1754944e-38, %v3721
    %v3723 = vsel %vm3720, %v3722, %v3718
    %v3724 = vmul.f32 1.0, %v3723
    %v3726 = vrot.slane %v3705, 2
    %v3728 = vtanh.pop %v3726
    %v3729 = vrot.slane %v3705, 3
    %v3731 = vxor.u32 %v3729, 2147483648
    %v3732 = vmul.f32 %v3731, 1.442695
    %v3733 = vpow.pop %v3732
    %v3734 = vadd.f32 %v3733, 1.0
    %v3735 = vrcp.pop %v3734
    %v3736 = vmul.f32 %v3734, %v3735
    %v3737 = vsub.f32 1.0, %v3736
    %v3738 = vmul.f32 %v3735, %v3737
    %v3739 = vadd.f32 %v3735, %v3738
    %vm3740 = vweird.f32 %v3734
    %vm3741 = vweird.f32 %v3735
    %vm3742 = vmor %vm3740, %vm3741
    %v3743 = vsel %vm3742, %v3735, %v3739
    %v3744 = vand.u32 2147483647, %v3734
    %vm3745 = vcmp.eq.f32.partialorder %v3744, 8.507059e+37
    %v3746 = vand.u32 %v3734, 2147483648
    %v3747 = vor.u32 1.1754944e-38, %v3746
    %v3748 = vsel %vm3745, %v3747, %v3743
    %v3749 = vmul.f32 1.0, %v3748
    %v3751 = vrot.slane %v3724, 1
    %v3753 = vmul.f32 %v3751, %v3545
    %v3754 = vmul.f32 %v3724, %v3728
    %v3755 = vadd.f32 %v3753, %v3754
    %v3756 = vtanh.pop %v3755
    %v3757 = vmul.f32 %v3749, %v3756
    %3758 = vst [vmem:[#allocation2 + $0x7] sm:$0x1] %v3757
    %v3759 = vld [vmem:[#allocation2] sm:$0xff]
    %v3760 = vld [vmem:[#allocation8] sm:$0xff]
    %v3761 = vld [vmem:[#allocation8 + $0x8] sm:$0xff]
    %v3762 = vld [vmem:[#allocation8 + $0x10] sm:$0xff]
    %v3763 = vld [vmem:[#allocation8 + $0x18] sm:$0xff]
    %v3764 = vld [vmem:[#allocation8 + $0x20] sm:$0xff]
    %v3765 = vld [vmem:[#allocation8 + $0x28] sm:$0xff]
    %v3766 = vld [vmem:[#allocation8 + $0x30] sm:$0xff]
    %v3767 = vld [vmem:[#allocation8 + $0x38] sm:$0xff]
    %v3768 = vld [vmem:[#allocation8 + $0x40] sm:$0xff]
    %v3769 = vld [vmem:[#allocation8 + $0x48] sm:$0xff]
    %v3770 = vld [vmem:[#allocation8 + $0x50] sm:$0xff]
    %v3771 = vld [vmem:[#allocation8 + $0x58] sm:$0xff]
    %v3772 = vld [vmem:[#allocation8 + $0x60] sm:$0xff]
    %v3773 = vld [vmem:[#allocation8 + $0x68] sm:$0xff]
    %v3774 = vld [vmem:[#allocation8 + $0x70] sm:$0xff]
    %v3775 = vld [vmem:[#allocation8 + $0x78] sm:$0xff]
    %v3776 = vld [vmem:[%s5] sm:$0x1]
    %v3778 = vperm.slane %v3776, 0
    %3780 = vmatpush.msra.mxu0 %v3775
    %3781 = vmatpush.msra.mxu0 %v3774
    %3782 = vmatpush.msra.mxu0 %v3773
    %3783 = vmatpush.msra.mxu0 %v3772
    %3784 = vmatpush.msra.mxu0 %v3771
    %3785 = vmatpush.msra.mxu0 %v3770
    %3786 = vmatpush.msra.mxu0 %v3769
    %3787 = vmatpush.msra.mxu0 %v3768
    %3788 = vmatpush.msra.mxu0 %v3767
    %3789 = vmatpush.msra.mxu0 %v3766
    %3790 = vmatpush.msra.mxu0 %v3765
    %3791 = vmatpush.msra.mxu0 %v3764
    %3792 = vmatpush.msra.mxu0 %v3763
    %3793 = vmatpush.msra.mxu0 %v3762
    %3794 = vmatpush.msra.mxu0 %v3761
    %3795 = vmatpush.msra.mxu0 %v3760
    %3796 = vmatmul.f32.gmra.mxu0 %v3759
    %v3797 = vpop.f32.mrf.mxu0
    %v3798 = vadd.f32 %v3778, %v3797
    %3799 = vdwg.mxu0
    %3800 = vst [vmem:[%s6] sm:$0xff] %v3798
    // Predicated region
    $region38: #{_lstm_model_forward_impl.1} parent=1 // pred_check
      _
    $region39: #{_lstm_model_forward_impl.1} parent=1 // pred_check_branch
      %3802 = sbr.rel (0) target = $region41
    $region40: #{_lstm_model_forward_impl.1} parent=1 // pred_region
      _
    $region41: #{_lstm_model_forward_impl.1} parent=1 // pred_fallthru
      _
    // Predicated region
    $region42: #{_lstm_model_forward_impl.1} parent=1 // pred_check
      _
    $region43: #{_lstm_model_forward_impl.1} parent=1 // pred_check_branch
      %3804 = sbr.rel (0) target = $region45
    $region44: #{_lstm_model_forward_impl.1} parent=1 // pred_region
      _
    $region45: #{_lstm_model_forward_impl.1} parent=1 // pred_fallthru
      _
    %3805 = vsyncpa [#allocation5], 1
    %3806 = vsyncpa [#allocation7], 1

</llo_original>
